<compile_context>
chip_gen: v5e
topology: v5e:2x2
jax: 0.10.0
libtpu: 0.0.40
codegen_flags: <defaults>
</compile_context>

<pallas_src>
import functools

import jax
import jax.numpy as jnp
from jax.experimental import pallas as pl
from jax.experimental.pallas import tpu as pltpu

IMG_SHAPE = (1, 28, 28)
IN_DIM = IMG_SHAPE[0] * IMG_SHAPE[1] * IMG_SHAPE[2]   # 784
IN_PAD = 896                                          # 7 * 128 (clean MXU K steps)
H1 = 256
H2 = 128
OUT = 1
OUT_PAD = 128                                         # MXU-width padded w3
BN_EPS = 1e-5
NEG_SLOPE = 0.2


def _leaky_relu(x):
    # 0 < slope < 1  =>  max(x, slope*x) == LeakyReLU(x); one vmax per vreg.
    return jnp.maximum(x, NEG_SLOPE * x)


def discriminator_kernel(x_ref, w1_ref, b1_ref, w2_ref, b2_ref,
                         gamma_ref, beta_ref, w3_ref, b3_ref, out_ref,
                         *, groups_per_step, micro_b):
    m = groups_per_step * micro_b

    # Linear(784 -> 256) + LeakyReLU(0.2): native bf16 x bf16 on the MXU,
    # f32 accumulation (no per-step weight upcast).
    h1 = jnp.dot(x_ref[...], w1_ref[...],
                 preferred_element_type=jnp.float32) + b1_ref[...]
    h1 = _leaky_relu(h1)

    # Linear(256 -> 128): bf16 MXU again (h1 cast once; w2 already bf16).
    h2 = jnp.dot(h1.astype(jnp.bfloat16), w2_ref[...],
                 preferred_element_type=jnp.float32) + b2_ref[...]

    # BatchNorm1d(128), training mode (batch mean / biased batch variance),
    # computed independently per micro_b-row micro-batch so the statistics
    # match the PyTorch module invoked with batch=micro_b.
    h2g = h2.reshape(groups_per_step, micro_b, H2)
    mean = jnp.mean(h2g, axis=1, keepdims=True)
    cent = h2g - mean
    var = jnp.mean(cent * cent, axis=1, keepdims=True)
    h2g = cent * jax.lax.rsqrt(var + BN_EPS)
    h2 = h2g.reshape(m, H2)
    h2 = _leaky_relu(h2 * gamma_ref[...] + beta_ref[...])

    # Linear(128 -> 1) + Sigmoid.  w3 is zero-padded to 128 columns so the dot
    # stays MXU-shaped; only column 0 is real.  Transpose on the XLU and keep
    # the first 8 sublane rows -> a single lane-dense (8, M) store instead of
    # an (M, 128) slab (16x less output DMA, 16x fewer sigmoid elements).
    h3 = jnp.dot(h2, w3_ref[...], preferred_element_type=jnp.float32)
    h3t = jnp.transpose(h3)                           # (128, M) via XLU
    out_ref[...] = jax.nn.sigmoid(h3t[0:8, :] + b3_ref[...])


@functools.partial(jax.jit, static_argnames=("groups_per_step",))
def discriminator_forward(imgs, prepared_params, *, groups_per_step=64):
    """imgs: (num_micro, micro_b, 1, 28, 28) f32.

    Each micro-batch of `micro_b` images goes through the Discriminator with
    its own BatchNorm batch statistics (equivalent to calling the PyTorch
    module once per micro-batch).  Returns (num_micro, micro_b, 1) f32.

    groups_per_step * micro_b (rows per grid step) should be a multiple of
    128; the default 64 * 8 = 512 rows/step is the measured DMA-efficiency
    sweet spot and fits every TPU generation's VMEM with bf16 activations."""
    num_micro, micro_b = imgs.shape[0], imgs.shape[1]
    n_rows = num_micro * micro_b

    m_tile = groups_per_step * micro_b
    n_steps = pl.cdiv(num_micro, groups_per_step)
    pad_rows = n_steps * m_tile - n_rows

    # Flatten + bf16 cast + (row, K) pad fused under jit: a single bf16 padded
    # copy of x is materialized; no padded f32 copy of x ever hits HBM.
    x = imgs.reshape(n_rows, IN_DIM).astype(jnp.bfloat16)
    x = jnp.pad(x, ((0, pad_rows), (0, IN_PAD - IN_DIM)))

    w1, b1, w2, b2, gamma, beta, w3, b3 = prepared_params

    # Constant index_map => weight / bias / BN blocks stay VMEM-resident
    # across all grid steps; only the bf16 x tile streams per step.
    const = lambda a: pl.BlockSpec(a.shape, lambda g: (0, 0))

    out = pl.pallas_call(
        functools.partial(discriminator_kernel,
                          groups_per_step=groups_per_step, micro_b=micro_b),
        out_shape=jax.ShapeDtypeStruct((8, n_steps * m_tile), jnp.float32),
        grid=(n_steps,),
        in_specs=[pl.BlockSpec((m_tile, IN_PAD), lambda g: (g, 0)),
                  const(w1), const(b1), const(w2), const(b2),
                  const(gamma), const(beta), const(w3), const(b3)],
        out_specs=pl.BlockSpec((8, m_tile), lambda g: (0, g)),
        compiler_params=pltpu.CompilerParams(
            dimension_semantics=("parallel",)),
    )(x, w1, b1, w2, b2, gamma, beta, w3, b3)

    # Row 0 of the (8, N) slab carries the real Linear(128->1) output.
    return out[0, :n_rows].reshape(num_micro, micro_b, OUT)


def init_params(key):
    """PyTorch-like init: nn.Linear default U(-1/sqrt(fan_in), +bound),
    BatchNorm1d gamma=1 / beta=0.  Weights stored (in, out)."""
    ks = jax.random.split(key, 6)

    def linear(kw, kb, fan_in, fan_out):
        bound = 1.0 / jnp.sqrt(jnp.float32(fan_in))
        w = jax.random.uniform(kw, (fan_in, fan_out), jnp.float32, -bound, bound)
        b = jax.random.uniform(kb, (fan_out,), jnp.float32, -bound, bound)
        return w, b

    w1, b1 = linear(ks[0], ks[1], IN_DIM, H1)
    w2, b2 = linear(ks[2], ks[3], H1, H2)
    w3, b3 = linear(ks[4], ks[5], H2, OUT)
    gamma = jnp.ones((H2,), jnp.float32)
    beta = jnp.zeros((H2,), jnp.float32)
    return (w1, b1, w2, b2, gamma, beta, w3, b3)


def prepare_params(params):
    """One-time conversion for the kernel:
       * w1 zero-padded 784->896 on K and stored bf16 (native MXU dtype),
       * w2 stored bf16,
       * w3 zero-padded to 128 output columns (MXU width), kept f32,
       * biases / gamma / beta reshaped to (1, n) rows; b3 as (1, 1)."""
    w1, b1, w2, b2, gamma, beta, w3, b3 = params
    w1p = jnp.pad(w1, ((0, IN_PAD - IN_DIM), (0, 0))).astype(jnp.bfloat16)
    w2p = w2.astype(jnp.bfloat16)
    w3p = jnp.pad(w3, ((0, 0), (0, OUT_PAD - OUT)))
    return (w1p, b1.reshape(1, H1), w2p, b2.reshape(1, H2),
            gamma.reshape(1, H2), beta.reshape(1, H2),
            w3p, b3.reshape(1, OUT))


def reference_forward(imgs, params):
    """Pure-JAX reference with the same bf16 quantization the kernel uses
    (x, w1, w2, h1 in bf16; f32 accumulation; BN per micro-batch)."""
    w1, b1, w2, b2, gamma, beta, w3, b3 = params
    g, b = imgs.shape[0], imgs.shape[1]
    x = imgs.reshape(g, b, IN_DIM).astype(jnp.bfloat16)
    h = jnp.einsum('gbi,io->gbo', x, w1.astype(jnp.bfloat16),
                   preferred_element_type=jnp.float32) + b1
    h = jnp.maximum(h, NEG_SLOPE * h)
    h = jnp.einsum('gbi,io->gbo', h.astype(jnp.bfloat16), w2.astype(jnp.bfloat16),
                   preferred_element_type=jnp.float32) + b2
    m = h.mean(axis=1, keepdims=True)
    v = ((h - m) ** 2).mean(axis=1, keepdims=True)
    h = (h - m) * jax.lax.rsqrt(v + BN_EPS) * gamma + beta
    h = jnp.maximum(h, NEG_SLOPE * h)
    h = jnp.einsum('gbi,io->gbo', h, w3,
                   preferred_element_type=jnp.float32) + b3
    return jax.nn.sigmoid(h)                                   # (g, b, 1)


if __name__ == "__main__":
    key = jax.random.PRNGKey(0)
    k_params, k_img = jax.random.split(key)

    params = init_params(k_params)
    prepared = prepare_params(params)

    # 60 micro-batches of 8 images each (== calling the PyTorch module 60x at
    # B=8).  groups_per_step=32 packs 256 rows per grid step -> 2 grid steps
    # (keeps both v7x TensorCores busy) and exercises the dummy-micro-batch
    # padding path (60 -> 64 micro-batches, padding is whole micro-batches).
    num_micro, micro_b = 60, 8
    imgs = jax.random.normal(k_img, (num_micro, micro_b) + IMG_SHAPE,
                             dtype=jnp.float32)

    out = discriminator_forward(imgs, prepared, groups_per_step=32)
    out = jax.block_until_ready(out)

    ref = reference_forward(imgs, params)
    assert out.shape == (num_micro, micro_b, OUT), out.shape
    max_err = float(jnp.max(jnp.abs(out - ref)))
    assert max_err < 2e-3, f"max abs err {max_err}"

    print("KERNEL_OK")
</pallas_src>

<mosaic_0001>
module attributes {stable_mosaic.version = 11 : i64} {
  func.func @discriminator_kernel(%arg0: i32, %arg1: memref<256x896xbf16, #tpu.memory_space<vmem>>, %arg2: memref<896x256xbf16, #tpu.memory_space<vmem>>, %arg3: memref<1x256xf32, #tpu.memory_space<vmem>>, %arg4: memref<256x128xbf16, #tpu.memory_space<vmem>>, %arg5: memref<1x128xf32, #tpu.memory_space<vmem>>, %arg6: memref<1x128xf32, #tpu.memory_space<vmem>>, %arg7: memref<1x128xf32, #tpu.memory_space<vmem>>, %arg8: memref<128x128xf32, #tpu.memory_space<vmem>>, %arg9: memref<1x1xf32, #tpu.memory_space<vmem>>, %arg10: memref<8x256xf32, #tpu.memory_space<vmem>>) attributes {dimension_semantics = [#tpu.dimension_semantics<parallel>], iteration_bounds = array<i64: 2>, scalar_prefetch = 0 : i64, scratch_operands = 0 : i64, tpu.core_type = #tpu.core_type<tc>, window_params = [{transform_indices = @transform_0, window_bounds = array<i64: 256, 896>}, {pipeline_mode = #tpu.pipeline_mode<synchronous>, transform_indices = @transform_1, window_bounds = array<i64: 896, 256>}, {pipeline_mode = #tpu.pipeline_mode<synchronous>, transform_indices = @transform_2, window_bounds = array<i64: 1, 256>}, {pipeline_mode = #tpu.pipeline_mode<synchronous>, transform_indices = @transform_3, window_bounds = array<i64: 256, 128>}, {pipeline_mode = #tpu.pipeline_mode<synchronous>, transform_indices = @transform_4, window_bounds = array<i64: 1, 128>}, {pipeline_mode = #tpu.pipeline_mode<synchronous>, transform_indices = @transform_5, window_bounds = array<i64: 1, 128>}, {pipeline_mode = #tpu.pipeline_mode<synchronous>, transform_indices = @transform_6, window_bounds = array<i64: 1, 128>}, {pipeline_mode = #tpu.pipeline_mode<synchronous>, transform_indices = @transform_7, window_bounds = array<i64: 128, 128>}, {pipeline_mode = #tpu.pipeline_mode<synchronous>, transform_indices = @transform_8, window_bounds = array<i64: 1, 1>}, {transform_indices = @transform_9, window_bounds = array<i64: 8, 256>}]} {
    %c0 = arith.constant 0 : index
    %c0_0 = arith.constant 0 : index
    %0 = vector.load %arg1[%c0, %c0_0] : memref<256x896xbf16, #tpu.memory_space<vmem>>, vector<256x896xbf16>
    %c0_1 = arith.constant 0 : index
    %c0_2 = arith.constant 0 : index
    %1 = vector.load %arg2[%c0_1, %c0_2] : memref<896x256xbf16, #tpu.memory_space<vmem>>, vector<896x256xbf16>
    %cst = arith.constant dense<0.000000e+00> : vector<256x256xf32>
    %2 = tpu.matmul %0, %1, %cst {dimension_numbers = #tpu.dot_dimension_numbers<[1], [0], [0], [1], [0, 0, 1, 1], [], []>} : vector<256x896xbf16>, vector<896x256xbf16>, vector<256x256xf32> -> vector<256x256xf32>
    %c0_3 = arith.constant 0 : index
    %c0_4 = arith.constant 0 : index
    %3 = vector.load %arg3[%c0_3, %c0_4] : memref<1x256xf32, #tpu.memory_space<vmem>>, vector<1x256xf32>
    %4 = vector.broadcast %3 : vector<1x256xf32> to vector<256x256xf32>
    %5 = arith.addf %2, %4 : vector<256x256xf32>
    %cst_5 = arith.constant 2.000000e-01 : f32
    %6 = vector.broadcast %cst_5 : f32 to vector<256x256xf32>
    %7 = arith.mulf %6, %5 : vector<256x256xf32>
    %8 = arith.maximumf %5, %7 : vector<256x256xf32>
    %9 = arith.truncf %8 : vector<256x256xf32> to vector<256x256xbf16>
    %c0_6 = arith.constant 0 : index
    %c0_7 = arith.constant 0 : index
    %10 = vector.load %arg4[%c0_6, %c0_7] : memref<256x128xbf16, #tpu.memory_space<vmem>>, vector<256x128xbf16>
    %cst_8 = arith.constant dense<0.000000e+00> : vector<256x128xf32>
    %11 = tpu.matmul %9, %10, %cst_8 {dimension_numbers = #tpu.dot_dimension_numbers<[1], [0], [0], [1], [0, 0, 1, 1], [], []>} : vector<256x256xbf16>, vector<256x128xbf16>, vector<256x128xf32> -> vector<256x128xf32>
    %c0_9 = arith.constant 0 : index
    %c0_10 = arith.constant 0 : index
    %12 = vector.load %arg5[%c0_9, %c0_10] : memref<1x128xf32, #tpu.memory_space<vmem>>, vector<1x128xf32>
    %13 = vector.broadcast %12 : vector<1x128xf32> to vector<256x128xf32>
    %14 = arith.addf %11, %13 : vector<256x128xf32>
    %15 = vector.shape_cast %14 : vector<256x128xf32> to vector<32x8x128xf32>
    %cst_11 = arith.constant dense<0.000000e+00> : vector<32x128xf32>
    %16 = vector.multi_reduction <add>, %15, %cst_11 [1] : vector<32x8x128xf32> to vector<32x128xf32>
    %17 = vector.shape_cast %16 : vector<32x128xf32> to vector<32x1x128xf32>
    %cst_12 = arith.constant 8.000000e+00 : f32
    %18 = vector.broadcast %cst_12 : f32 to vector<32x1x128xf32>
    %19 = arith.divf %17, %18 : vector<32x1x128xf32>
    %20 = vector.broadcast %19 : vector<32x1x128xf32> to vector<32x8x128xf32>
    %21 = arith.subf %15, %20 : vector<32x8x128xf32>
    %22 = arith.mulf %21, %21 : vector<32x8x128xf32>
    %cst_13 = arith.constant dense<0.000000e+00> : vector<32x128xf32>
    %23 = vector.multi_reduction <add>, %22, %cst_13 [1] : vector<32x8x128xf32> to vector<32x128xf32>
    %24 = vector.shape_cast %23 : vector<32x128xf32> to vector<32x1x128xf32>
    %cst_14 = arith.constant 8.000000e+00 : f32
    %25 = vector.broadcast %cst_14 : f32 to vector<32x1x128xf32>
    %26 = arith.divf %24, %25 : vector<32x1x128xf32>
    %cst_15 = arith.constant 9.99999974E-6 : f32
    %27 = vector.broadcast %cst_15 : f32 to vector<32x1x128xf32>
    %28 = arith.addf %26, %27 : vector<32x1x128xf32>
    %29 = math.rsqrt %28 : vector<32x1x128xf32>
    %30 = vector.broadcast %29 : vector<32x1x128xf32> to vector<32x8x128xf32>
    %31 = arith.mulf %21, %30 : vector<32x8x128xf32>
    %32 = vector.shape_cast %31 : vector<32x8x128xf32> to vector<256x128xf32>
    %c0_16 = arith.constant 0 : index
    %c0_17 = arith.constant 0 : index
    %33 = vector.load %arg6[%c0_16, %c0_17] : memref<1x128xf32, #tpu.memory_space<vmem>>, vector<1x128xf32>
    %34 = vector.broadcast %33 : vector<1x128xf32> to vector<256x128xf32>
    %35 = arith.mulf %32, %34 : vector<256x128xf32>
    %c0_18 = arith.constant 0 : index
    %c0_19 = arith.constant 0 : index
    %36 = vector.load %arg7[%c0_18, %c0_19] : memref<1x128xf32, #tpu.memory_space<vmem>>, vector<1x128xf32>
    %37 = vector.broadcast %36 : vector<1x128xf32> to vector<256x128xf32>
    %38 = arith.addf %35, %37 : vector<256x128xf32>
    %cst_20 = arith.constant 2.000000e-01 : f32
    %39 = vector.broadcast %cst_20 : f32 to vector<256x128xf32>
    %40 = arith.mulf %39, %38 : vector<256x128xf32>
    %41 = arith.maximumf %38, %40 : vector<256x128xf32>
    %c0_21 = arith.constant 0 : index
    %c0_22 = arith.constant 0 : index
    %42 = vector.load %arg8[%c0_21, %c0_22] : memref<128x128xf32, #tpu.memory_space<vmem>>, vector<128x128xf32>
    %cst_23 = arith.constant dense<0.000000e+00> : vector<256x128xf32>
    %43 = tpu.matmul %41, %42, %cst_23 {dimension_numbers = #tpu.dot_dimension_numbers<[1], [0], [0], [1], [0, 0, 1, 1], [], []>} : vector<256x128xf32>, vector<128x128xf32>, vector<256x128xf32> -> vector<256x128xf32>
    %44 = tpu.transpose %43, [1, 0] : vector<256x128xf32> -> vector<128x256xf32>
    %45 = vector.extract_strided_slice %44 {offsets = [0, 0], sizes = [8, 256], strides = [1, 1]} : vector<128x256xf32> to vector<8x256xf32>
    %c0_24 = arith.constant 0 : index
    %c0_25 = arith.constant 0 : index
    %46 = vector.load %arg9[%c0_24, %c0_25] : memref<1x1xf32, #tpu.memory_space<vmem>>, vector<1x1xf32>
    %47 = vector.broadcast %46 : vector<1x1xf32> to vector<8x256xf32>
    %48 = arith.addf %45, %47 : vector<8x256xf32>
    %49 = arith.negf %48 : vector<8x256xf32>
    %50 = math.exp %49 : vector<8x256xf32>
    %cst_26 = arith.constant 1.000000e+00 : f32
    %51 = vector.broadcast %cst_26 : f32 to vector<8x256xf32>
    %52 = arith.addf %51, %50 : vector<8x256xf32>
    %53 = arith.divf %51, %52 : vector<8x256xf32>
    %c0_27 = arith.constant 0 : index
    %c0_28 = arith.constant 0 : index
    %54 = vector.load %arg10[%c0_27, %c0_28] : memref<8x256xf32, #tpu.memory_space<vmem>>, vector<8x256xf32>
    tpu.vector_store %arg10[%c0_27, %c0_28], %53 {strides = array<i32>} : memref<8x256xf32, #tpu.memory_space<vmem>>, vector<8x256xf32>,
    return
  }
  func.func @transform_0(%arg0: i32) -> (i32, i32) {
    %c0_i32 = arith.constant 0 : i32
    %c0_i32_0 = arith.constant 0 : i32
    return %arg0, %c0_i32 : i32, i32
  }
  func.func @transform_1(%arg0: i32) -> (i32, i32) {
    %c0_i32 = arith.constant 0 : i32
    %c0_i32_0 = arith.constant 0 : i32
    %c0_i32_1 = arith.constant 0 : i32
    return %c0_i32, %c0_i32_0 : i32, i32
  }
  func.func @transform_2(%arg0: i32) -> (i32, i32) {
    %c0_i32 = arith.constant 0 : i32
    %c0_i32_0 = arith.constant 0 : i32
    %c0_i32_1 = arith.constant 0 : i32
    return %c0_i32, %c0_i32_0 : i32, i32
  }
  func.func @transform_3(%arg0: i32) -> (i32, i32) {
    %c0_i32 = arith.constant 0 : i32
    %c0_i32_0 = arith.constant 0 : i32
    %c0_i32_1 = arith.constant 0 : i32
    return %c0_i32, %c0_i32_0 : i32, i32
  }
  func.func @transform_4(%arg0: i32) -> (i32, i32) {
    %c0_i32 = arith.constant 0 : i32
    %c0_i32_0 = arith.constant 0 : i32
    %c0_i32_1 = arith.constant 0 : i32
    return %c0_i32, %c0_i32_0 : i32, i32
  }
  func.func @transform_5(%arg0: i32) -> (i32, i32) {
    %c0_i32 = arith.constant 0 : i32
    %c0_i32_0 = arith.constant 0 : i32
    %c0_i32_1 = arith.constant 0 : i32
    return %c0_i32, %c0_i32_0 : i32, i32
  }
  func.func @transform_6(%arg0: i32) -> (i32, i32) {
    %c0_i32 = arith.constant 0 : i32
    %c0_i32_0 = arith.constant 0 : i32
    %c0_i32_1 = arith.constant 0 : i32
    return %c0_i32, %c0_i32_0 : i32, i32
  }
  func.func @transform_7(%arg0: i32) -> (i32, i32) {
    %c0_i32 = arith.constant 0 : i32
    %c0_i32_0 = arith.constant 0 : i32
    %c0_i32_1 = arith.constant 0 : i32
    return %c0_i32, %c0_i32_0 : i32, i32
  }
  func.func @transform_8(%arg0: i32) -> (i32, i32) {
    %c0_i32 = arith.constant 0 : i32
    %c0_i32_0 = arith.constant 0 : i32
    %c0_i32_1 = arith.constant 0 : i32
    return %c0_i32, %c0_i32_0 : i32, i32
  }
  func.func @transform_9(%arg0: i32) -> (i32, i32) {
    %c0_i32 = arith.constant 0 : i32
    %c0_i32_0 = arith.constant 0 : i32
    return %c0_i32, %arg0 : i32, i32
  }
}

</mosaic_0001>

<llo_original>
// kernel: squeeze.1
$region0: #{squeeze.1}
  %s0 = inlined_call_operand.vmem [shape: f32[480], index: 0, kind: input, shape index: {}]
  %s1 = inlined_call_operand.vmem [shape: f32[60,8,1], index: 1, kind: output, shape index: {}]
  $region1: #{squeeze.1} parent=0
    #allocation0 [shape = 'u8[4096]{0}', space=vmem, size = 0x1000, scoped, tag = 'scoped mem for input reshape']
    %s3 = ssub.s32 16, 1
    %v4 = vld [vmem:[%s0] sm:%s3]
    %5 = vst [vmem:[#allocation0] sm:%s3] %v4
    %v6 = vld [vmem:[#allocation0] sm:$0xf]
    %vm7 = vcmask 64512
    %8 = vst.msk [vmem:[%s1] ss:$16 sm:$0x3] %vm7, %v6
    %9 = vst.msk [vmem:[%s1] ss:$16 sm:$0xc] %vm7, %v6
    %v10 = vld [vmem:[#allocation0] sm:$0xf]
    %11 = vrot.lane.b32.xlu0 %v10, 120
    %v12 = vpop.permute.xlu0 %11
    %vm13 = vcmask 64512
    %s14 = scalar_lea.vmem %s1, 1
    %15 = vst.msk [vmem:[%s14] ss:$16 sm:$0x3] %vm13, %v12
    %s16 = scalar_lea.vmem %s1, 1
    %17 = vst.msk [vmem:[%s16] ss:$16 sm:$0xc] %vm13, %v12
    %v18 = vld [vmem:[#allocation0] sm:$0xf]
    %19 = vrot.lane.b32.xlu0 %v18, 112
    %v20 = vpop.permute.xlu0 %19
    %vm21 = vcmask 64512
    %s22 = scalar_lea.vmem %s1, 2
    %23 = vst.msk [vmem:[%s22] ss:$16 sm:$0x3] %vm21, %v20
    %s24 = scalar_lea.vmem %s1, 2
    %25 = vst.msk [vmem:[%s24] ss:$16 sm:$0xc] %vm21, %v20
    %v26 = vld [vmem:[#allocation0] sm:$0xf]
    %27 = vrot.lane.b32.xlu0 %v26, 104
    %v28 = vpop.permute.xlu0 %27
    %vm29 = vcmask 64512
    %s30 = scalar_lea.vmem %s1, 3
    %31 = vst.msk [vmem:[%s30] ss:$16 sm:$0x3] %vm29, %v28
    %s32 = scalar_lea.vmem %s1, 3
    %33 = vst.msk [vmem:[%s32] ss:$16 sm:$0xc] %vm29, %v28
    %v34 = vld [vmem:[#allocation0] sm:$0xf]
    %35 = vrot.lane.b32.xlu0 %v34, 96
    %v36 = vpop.permute.xlu0 %35
    %vm37 = vcmask 64512
    %s38 = scalar_lea.vmem %s1, 4
    %39 = vst.msk [vmem:[%s38] ss:$16 sm:$0x3] %vm37, %v36
    %s40 = scalar_lea.vmem %s1, 4
    %41 = vst.msk [vmem:[%s40] ss:$16 sm:$0xc] %vm37, %v36
    %v42 = vld [vmem:[#allocation0] sm:$0xf]
    %43 = vrot.lane.b32.xlu0 %v42, 88
    %v44 = vpop.permute.xlu0 %43
    %vm45 = vcmask 64512
    %s46 = scalar_lea.vmem %s1, 5
    %47 = vst.msk [vmem:[%s46] ss:$16 sm:$0x3] %vm45, %v44
    %s48 = scalar_lea.vmem %s1, 5
    %49 = vst.msk [vmem:[%s48] ss:$16 sm:$0xc] %vm45, %v44
    %v50 = vld [vmem:[#allocation0] sm:$0xf]
    %51 = vrot.lane.b32.xlu0 %v50, 80
    %v52 = vpop.permute.xlu0 %51
    %vm53 = vcmask 64512
    %s54 = scalar_lea.vmem %s1, 6
    %55 = vst.msk [vmem:[%s54] ss:$16 sm:$0x3] %vm53, %v52
    %s56 = scalar_lea.vmem %s1, 6
    %57 = vst.msk [vmem:[%s56] ss:$16 sm:$0xc] %vm53, %v52
    %v58 = vld [vmem:[#allocation0] sm:$0xf]
    %59 = vrot.lane.b32.xlu0 %v58, 72
    %v60 = vpop.permute.xlu0 %59
    %vm61 = vcmask 64512
    %s62 = scalar_lea.vmem %s1, 7
    %63 = vst.msk [vmem:[%s62] ss:$16 sm:$0x3] %vm61, %v60
    %s64 = scalar_lea.vmem %s1, 7
    %65 = vst.msk [vmem:[%s64] ss:$16 sm:$0xc] %vm61, %v60
    %v66 = vld [vmem:[#allocation0] sm:$0xf]
    %67 = vrot.lane.b32.xlu0 %v66, 64
    %v68 = vpop.permute.xlu0 %67
    %vm69 = vcmask 64512
    %s70 = scalar_lea.vmem %s1, 8
    %71 = vst.msk [vmem:[%s70] ss:$16 sm:$0x3] %vm69, %v68
    %s72 = scalar_lea.vmem %s1, 8
    %73 = vst.msk [vmem:[%s72] ss:$16 sm:$0xc] %vm69, %v68
    %v74 = vld [vmem:[#allocation0] sm:$0xf]
    %75 = vrot.lane.b32.xlu0 %v74, 56
    %v76 = vpop.permute.xlu0 %75
    %vm77 = vcmask 64512
    %s78 = scalar_lea.vmem %s1, 9
    %79 = vst.msk [vmem:[%s78] ss:$16 sm:$0x3] %vm77, %v76
    %s80 = scalar_lea.vmem %s1, 9
    %81 = vst.msk [vmem:[%s80] ss:$16 sm:$0xc] %vm77, %v76
    %v82 = vld [vmem:[#allocation0] sm:$0xf]
    %83 = vrot.lane.b32.xlu0 %v82, 48
    %v84 = vpop.permute.xlu0 %83
    %vm85 = vcmask 64512
    %s86 = scalar_lea.vmem %s1, 10
    %87 = vst.msk [vmem:[%s86] ss:$16 sm:$0x3] %vm85, %v84
    %s88 = scalar_lea.vmem %s1, 10
    %89 = vst.msk [vmem:[%s88] ss:$16 sm:$0xc] %vm85, %v84
    %v90 = vld [vmem:[#allocation0] sm:$0xf]
    %91 = vrot.lane.b32.xlu0 %v90, 40
    %v92 = vpop.permute.xlu0 %91
    %vm93 = vcmask 64512
    %s94 = scalar_lea.vmem %s1, 11
    %95 = vst.msk [vmem:[%s94] ss:$16 sm:$0x3] %vm93, %v92
    %s96 = scalar_lea.vmem %s1, 11
    %97 = vst.msk [vmem:[%s96] ss:$16 sm:$0xc] %vm93, %v92
    %v98 = vld [vmem:[#allocation0] sm:$0x7]
    %99 = vrot.lane.b32.xlu0 %v98, 32
    %v100 = vpop.permute.xlu0 %99
    %vm101 = vcmask 64512
    %s102 = scalar_lea.vmem %s1, 12
    %103 = vst.msk [vmem:[%s102] ss:$16 sm:$0x3] %vm101, %v100
    %s104 = scalar_lea.vmem %s1, 42
    %105 = vst.msk [vmem:[%s104] sm:$0x4] %vm101, %v100
    %v106 = vld [vmem:[#allocation0] sm:$0x7]
    %107 = vrot.lane.b32.xlu0 %v106, 24
    %v108 = vpop.permute.xlu0 %107
    %vm109 = vcmask 64512
    %s110 = scalar_lea.vmem %s1, 13
    %111 = vst.msk [vmem:[%s110] ss:$16 sm:$0x3] %vm109, %v108
    %s112 = scalar_lea.vmem %s1, 43
    %113 = vst.msk [vmem:[%s112] sm:$0x4] %vm109, %v108
    %v114 = vld [vmem:[#allocation0] sm:$0x7]
    %115 = vrot.lane.b32.xlu0 %v114, 16
    %v116 = vpop.permute.xlu0 %115
    %vm117 = vcmask 64512
    %s118 = scalar_lea.vmem %s1, 14
    %119 = vst.msk [vmem:[%s118] ss:$16 sm:$0x3] %vm117, %v116
    %s120 = scalar_lea.vmem %s1, 44
    %121 = vst.msk [vmem:[%s120] sm:$0x4] %vm117, %v116
    %v122 = vld [vmem:[#allocation0] sm:$0x7]
    %123 = vrot.lane.b32.xlu0 %v122, 8
    %v124 = vpop.permute.xlu0 %123
    %vm125 = vcmask 64512
    %s126 = scalar_lea.vmem %s1, 15
    %127 = vst.msk [vmem:[%s126] ss:$16 sm:$0x3] %vm125, %v124
    %s128 = scalar_lea.vmem %s1, 45
    %129 = vst.msk [vmem:[%s128] sm:$0x4] %vm125, %v124

// kernel: discriminator_forward.1
$region0: #{discriminator_forward.1}
  #allocation0 [shape = 'u32[]', space=smem, size = 0x4, offset = 0x4, fixed_abs, tag = 'smem constant byte address 0x4 - core index']
  #allocation1 [shape = 'u32[72,128]{1,0:T(1,128)}', space=vmem, size = 0x9000, scoped, tag = 'internal scratch']
  #allocation2 [shape = 'f32[1,1]{1,0:T(1,128)S(1)}', space=vmem, size = 0x200, scoped, tag = 'scoped memory for discriminator_forward.1']
  %s0 = inlined_call_operand.vmem [shape: bf16[512,896], index: 0, kind: input, shape index: {}]
  %s1 = inlined_call_operand.vmem [shape: bf16[896,256], index: 1, kind: input, shape index: {}]
  %s2 = inlined_call_operand.vmem [shape: f32[1,256], index: 2, kind: input, shape index: {}]
  %s3 = inlined_call_operand.vmem [shape: bf16[256,128], index: 3, kind: input, shape index: {}]
  %s4 = inlined_call_operand.vmem [shape: f32[1,128], index: 4, kind: input, shape index: {}]
  %s5 = inlined_call_operand.vmem [shape: f32[1,128], index: 5, kind: input, shape index: {}]
  %s6 = inlined_call_operand.vmem [shape: f32[1,128], index: 6, kind: input, shape index: {}]
  %s7 = inlined_call_operand.vmem [shape: f32[128,128], index: 7, kind: input, shape index: {}]
  %s8 = inlined_call_operand.<no memory space> [shape: f32[1,1], index: 8, kind: input, shape index: {}]
  %s9 = inlined_call_operand.vmem [shape: f32[8,512], index: 9, kind: output, shape index: {}]
  %s10 = sld [smem:[#allocation0]]
  $region69: #{discriminator_forward.1} parent=0
    _
  %s12 = ssub.s32 1, %s10
  %s13 = scalar_select 0, %s12, %s10
  %v14 = vstv %s8
  %15 = vst [vmem:[#allocation2] sm:$0x1] %v14
  loop: start=0, step=1, limit=4
  $region2: #{discriminator_forward.1} parent=0 // loop_pre_header
    _
  $region3: #{discriminator_forward.1} parent=0 // loop_header
    %s17 = sphi 0, %s21
    %p18 = scmp.ge.s32.totalorder %s17, 4
    %s27 = sphi 0, %s29
    %s30 = sphi 0, %s27
    %s31 = sphi 0, %s30
    %s47 = sphi 0, %s31
    %s51 = sphi 0, %s51
    %s53 = sphi 0, %s51
    %s54 = sphi 0, %s53
    %s68 = sphi 0, %s54
    %s72 = sphi 0, %s72
    %s74 = sphi 0, %s72
    %s75 = sphi 0, %s74
    %s89 = sphi 0, %s75
    %s93 = sphi 0, %s93
    %s95 = sphi 0, %s93
    %s96 = sphi 0, %s95
    %s110 = sphi 0, %s96
    %s114 = sphi 0, %s114
    %s116 = sphi 0, %s114
    %s117 = sphi 0, %s116
    %s131 = sphi 0, %s117
    %s135 = sphi 0, %s135
    %s137 = sphi 0, %s135
    %s138 = sphi 0, %s137
    %s152 = sphi 0, %s138
    %s156 = sphi 0, %s156
    %s158 = sphi 0, %s156
    %s159 = sphi 0, %s158
    %s173 = sphi 0, %s159
    %s177 = sphi 0, %s177
    %s179 = sphi 0, %s177
    %s180 = sphi 0, %s179
    %s194 = sphi 0, %s180
    %s198 = sphi 0, %s198
    %s200 = sphi 0, %s198
    %s201 = sphi 0, %s200
    %s215 = sphi 0, %s201
    %s221 = sphi 0, %s223
    %s224 = sphi 0, %s221
    %s225 = sphi 0, %s224
    %s241 = sphi 0, %s225
  $region4: #{discriminator_forward.1} parent=0 // loop_header_branch
    %20 = sbr.rel (%p18) target = $region8
  $region5: #{discriminator_forward.1} parent=0 // loop_body
    %s22 = ssub.s32 %s17, 1
    %s23 = ssub.s32 %s17, 2
    %s24 = sadd.s32 %s17, 1
    %s25 = ssub.s32 %s17, %s24
    %p26 = scmp.eq.s32.totalorder %s25, 0
    %s28 = sadd.s32 %s27, 1
    %s29 = scalar_select %p26, %s27, %s28
    %p32 = pneg %p26
    %p33 = scmp.eq.s32.totalorder %s17, 1
    %p34 = por %p32, %p33
    %p35 = scmp.ne.s32.totalorder %s27, %s30
    %p36 = scmp.eq.s32.totalorder %s17, 0
    %p37 = por %p35, %p36
    %p38 = scmp.ne.s32.totalorder %s27, %s30
    %p39 = scmp.eq.s32.totalorder %s22, 1
    %p40 = por %p38, %p39
    %p41 = scmp.ne.s32.totalorder %s30, %s31
    %p42 = scmp.eq.s32.totalorder %s22, 0
    %p43 = por %p41, %p42
    %p44 = scmp.ne.s32.totalorder %s30, %s31
    %p45 = scmp.eq.s32.totalorder %s23, 1
    %p46 = por %p44, %p45
    %p48 = scmp.ne.s32.totalorder %s31, %s47
    %p49 = scmp.eq.s32.totalorder %s23, 0
    %p50 = por %p48, %p49
    %s52 = sadd.s32 %s51, 1
    %p55 = scmp.eq.s32.totalorder %s17, 1
    %p56 = scmp.ne.s32.totalorder %s51, %s53
    %p57 = scmp.eq.s32.totalorder %s17, 0
    %p58 = por %p56, %p57
    %p59 = scmp.ne.s32.totalorder %s51, %s53
    %p60 = scmp.eq.s32.totalorder %s22, 1
    %p61 = por %p59, %p60
    %p62 = scmp.ne.s32.totalorder %s53, %s54
    %p63 = scmp.eq.s32.totalorder %s22, 0
    %p64 = por %p62, %p63
    %p65 = scmp.ne.s32.totalorder %s53, %s54
    %p66 = scmp.eq.s32.totalorder %s23, 1
    %p67 = por %p65, %p66
    %p69 = scmp.ne.s32.totalorder %s54, %s68
    %p70 = scmp.eq.s32.totalorder %s23, 0
    %p71 = por %p69, %p70
    %s73 = sadd.s32 %s72, 1
    %p76 = scmp.eq.s32.totalorder %s17, 1
    %p77 = scmp.ne.s32.totalorder %s72, %s74
    %p78 = scmp.eq.s32.totalorder %s17, 0
    %p79 = por %p77, %p78
    %p80 = scmp.ne.s32.totalorder %s72, %s74
    %p81 = scmp.eq.s32.totalorder %s22, 1
    %p82 = por %p80, %p81
    %p83 = scmp.ne.s32.totalorder %s74, %s75
    %p84 = scmp.eq.s32.totalorder %s22, 0
    %p85 = por %p83, %p84
    %p86 = scmp.ne.s32.totalorder %s74, %s75
    %p87 = scmp.eq.s32.totalorder %s23, 1
    %p88 = por %p86, %p87
    %p90 = scmp.ne.s32.totalorder %s75, %s89
    %p91 = scmp.eq.s32.totalorder %s23, 0
    %p92 = por %p90, %p91
    %s94 = sadd.s32 %s93, 1
    %p97 = scmp.eq.s32.totalorder %s17, 1
    %p98 = scmp.ne.s32.totalorder %s93, %s95
    %p99 = scmp.eq.s32.totalorder %s17, 0
    %p100 = por %p98, %p99
    %p101 = scmp.ne.s32.totalorder %s93, %s95
    %p102 = scmp.eq.s32.totalorder %s22, 1
    %p103 = por %p101, %p102
    %p104 = scmp.ne.s32.totalorder %s95, %s96
    %p105 = scmp.eq.s32.totalorder %s22, 0
    %p106 = por %p104, %p105
    %p107 = scmp.ne.s32.totalorder %s95, %s96
    %p108 = scmp.eq.s32.totalorder %s23, 1
    %p109 = por %p107, %p108
    %p111 = scmp.ne.s32.totalorder %s96, %s110
    %p112 = scmp.eq.s32.totalorder %s23, 0
    %p113 = por %p111, %p112
    %s115 = sadd.s32 %s114, 1
    %p118 = scmp.eq.s32.totalorder %s17, 1
    %p119 = scmp.ne.s32.totalorder %s114, %s116
    %p120 = scmp.eq.s32.totalorder %s17, 0
    %p121 = por %p119, %p120
    %p122 = scmp.ne.s32.totalorder %s114, %s116
    %p123 = scmp.eq.s32.totalorder %s22, 1
    %p124 = por %p122, %p123
    %p125 = scmp.ne.s32.totalorder %s116, %s117
    %p126 = scmp.eq.s32.totalorder %s22, 0
    %p127 = por %p125, %p126
    %p128 = scmp.ne.s32.totalorder %s116, %s117
    %p129 = scmp.eq.s32.totalorder %s23, 1
    %p130 = por %p128, %p129
    %p132 = scmp.ne.s32.totalorder %s117, %s131
    %p133 = scmp.eq.s32.totalorder %s23, 0
    %p134 = por %p132, %p133
    %s136 = sadd.s32 %s135, 1
    %p139 = scmp.eq.s32.totalorder %s17, 1
    %p140 = scmp.ne.s32.totalorder %s135, %s137
    %p141 = scmp.eq.s32.totalorder %s17, 0
    %p142 = por %p140, %p141
    %p143 = scmp.ne.s32.totalorder %s135, %s137
    %p144 = scmp.eq.s32.totalorder %s22, 1
    %p145 = por %p143, %p144
    %p146 = scmp.ne.s32.totalorder %s137, %s138
    %p147 = scmp.eq.s32.totalorder %s22, 0
    %p148 = por %p146, %p147
    %p149 = scmp.ne.s32.totalorder %s137, %s138
    %p150 = scmp.eq.s32.totalorder %s23, 1
    %p151 = por %p149, %p150
    %p153 = scmp.ne.s32.totalorder %s138, %s152
    %p154 = scmp.eq.s32.totalorder %s23, 0
    %p155 = por %p153, %p154
    %s157 = sadd.s32 %s156, 1
    %p160 = scmp.eq.s32.totalorder %s17, 1
    %p161 = scmp.ne.s32.totalorder %s156, %s158
    %p162 = scmp.eq.s32.totalorder %s17, 0
    %p163 = por %p161, %p162
    %p164 = scmp.ne.s32.totalorder %s156, %s158
    %p165 = scmp.eq.s32.totalorder %s22, 1
    %p166 = por %p164, %p165
    %p167 = scmp.ne.s32.totalorder %s158, %s159
    %p168 = scmp.eq.s32.totalorder %s22, 0
    %p169 = por %p167, %p168
    %p170 = scmp.ne.s32.totalorder %s158, %s159
    %p171 = scmp.eq.s32.totalorder %s23, 1
    %p172 = por %p170, %p171
    %p174 = scmp.ne.s32.totalorder %s159, %s173
    %p175 = scmp.eq.s32.totalorder %s23, 0
    %p176 = por %p174, %p175
    %s178 = sadd.s32 %s177, 1
    %p181 = scmp.eq.s32.totalorder %s17, 1
    %p182 = scmp.ne.s32.totalorder %s177, %s179
    %p183 = scmp.eq.s32.totalorder %s17, 0
    %p184 = por %p182, %p183
    %p185 = scmp.ne.s32.totalorder %s177, %s179
    %p186 = scmp.eq.s32.totalorder %s22, 1
    %p187 = por %p185, %p186
    %p188 = scmp.ne.s32.totalorder %s179, %s180
    %p189 = scmp.eq.s32.totalorder %s22, 0
    %p190 = por %p188, %p189
    %p191 = scmp.ne.s32.totalorder %s179, %s180
    %p192 = scmp.eq.s32.totalorder %s23, 1
    %p193 = por %p191, %p192
    %p195 = scmp.ne.s32.totalorder %s180, %s194
    %p196 = scmp.eq.s32.totalorder %s23, 0
    %p197 = por %p195, %p196
    %s199 = sadd.s32 %s198, 1
    %p202 = scmp.eq.s32.totalorder %s17, 1
    %p203 = scmp.ne.s32.totalorder %s198, %s200
    %p204 = scmp.eq.s32.totalorder %s17, 0
    %p205 = por %p203, %p204
    %p206 = scmp.ne.s32.totalorder %s198, %s200
    %p207 = scmp.eq.s32.totalorder %s22, 1
    %p208 = por %p206, %p207
    %p209 = scmp.ne.s32.totalorder %s200, %s201
    %p210 = scmp.eq.s32.totalorder %s22, 0
    %p211 = por %p209, %p210
    %p212 = scmp.ne.s32.totalorder %s200, %s201
    %p213 = scmp.eq.s32.totalorder %s23, 1
    %p214 = por %p212, %p213
    %p216 = scmp.ne.s32.totalorder %s201, %s215
    %p217 = scmp.eq.s32.totalorder %s23, 0
    %p218 = por %p216, %p217
    %s219 = ssub.s32 %s17, %s24
    %p220 = scmp.eq.s32.totalorder %s219, 0
    %s222 = sadd.s32 %s221, 1
    %s223 = scalar_select %p220, %s221, %s222
    %p226 = pneg %p220
    %p227 = scmp.eq.s32.totalorder %s17, 1
    %p228 = por %p226, %p227
    %p229 = scmp.ne.s32.totalorder %s221, %s224
    %p230 = scmp.eq.s32.totalorder %s17, 0
    %p231 = por %p229, %p230
    %p232 = scmp.ne.s32.totalorder %s221, %s224
    %p233 = scmp.eq.s32.totalorder %s22, 1
    %p234 = por %p232, %p233
    %p235 = scmp.ne.s32.totalorder %s224, %s225
    %p236 = scmp.eq.s32.totalorder %s22, 0
    %p237 = por %p235, %p236
    %p238 = scmp.ne.s32.totalorder %s224, %s225
    %p239 = scmp.eq.s32.totalorder %s23, 1
    %p240 = por %p238, %p239
    %p242 = scmp.ne.s32.totalorder %s225, %s241
    %p243 = scmp.eq.s32.totalorder %s23, 0
    %p244 = por %p242, %p243
    %p245 = scmp.le.s32.totalorder 1, %s17
    %p246 = scmp.lt.s32.totalorder %s17, 3
    %p247 = pnand %p245, %p246
    %p248 = pneg %p247
    // Predicated region
    $region9: #{discriminator_forward.1} parent=5 // pred_check
      _
    $region10: #{discriminator_forward.1} parent=5 // pred_check_branch
      %250 = sbr.rel (%p247) target = $region12
    $region11: #{discriminator_forward.1} parent=5 // pred_region
      %s251 = ssub.s32 %s17, 1
      // Predicated region
      $region13: #{discriminator_forward.1} parent=11 // pred_check
        %p252 = pneg %p64
      $region14: #{discriminator_forward.1} parent=11 // pred_check_branch
        %254 = sbr.rel (%p252) target = $region16
      $region15: #{discriminator_forward.1} parent=11 // pred_region
        _
      $region16: #{discriminator_forward.1} parent=11 // pred_fallthru
        _
      // Predicated region
      $region17: #{discriminator_forward.1} parent=11 // pred_check
        %p255 = pneg %p85
      $region18: #{discriminator_forward.1} parent=11 // pred_check_branch
        %257 = sbr.rel (%p255) target = $region20
      $region19: #{discriminator_forward.1} parent=11 // pred_region
        _
      $region20: #{discriminator_forward.1} parent=11 // pred_fallthru
        _
      // Predicated region
      $region21: #{discriminator_forward.1} parent=11 // pred_check
        %p258 = pneg %p106
      $region22: #{discriminator_forward.1} parent=11 // pred_check_branch
        %260 = sbr.rel (%p258) target = $region24
      $region23: #{discriminator_forward.1} parent=11 // pred_region
        _
      $region24: #{discriminator_forward.1} parent=11 // pred_fallthru
        _
      // Predicated region
      $region25: #{discriminator_forward.1} parent=11 // pred_check
        %p261 = pneg %p127
      $region26: #{discriminator_forward.1} parent=11 // pred_check_branch
        %263 = sbr.rel (%p261) target = $region28
      $region27: #{discriminator_forward.1} parent=11 // pred_region
        _
      $region28: #{discriminator_forward.1} parent=11 // pred_fallthru
        _
      // Predicated region
      $region29: #{discriminator_forward.1} parent=11 // pred_check
        %p264 = pneg %p148
      $region30: #{discriminator_forward.1} parent=11 // pred_check_branch
        %266 = sbr.rel (%p264) target = $region32
      $region31: #{discriminator_forward.1} parent=11 // pred_region
        _
      $region32: #{discriminator_forward.1} parent=11 // pred_fallthru
        _
      // Predicated region
      $region33: #{discriminator_forward.1} parent=11 // pred_check
        %p267 = pneg %p169
      $region34: #{discriminator_forward.1} parent=11 // pred_check_branch
        %269 = sbr.rel (%p267) target = $region36
      $region35: #{discriminator_forward.1} parent=11 // pred_region
        _
      $region36: #{discriminator_forward.1} parent=11 // pred_fallthru
        _
      // Predicated region
      $region37: #{discriminator_forward.1} parent=11 // pred_check
        %p270 = pneg %p190
      $region38: #{discriminator_forward.1} parent=11 // pred_check_branch
        %272 = sbr.rel (%p270) target = $region40
      $region39: #{discriminator_forward.1} parent=11 // pred_region
        _
      $region40: #{discriminator_forward.1} parent=11 // pred_fallthru
        _
      // Predicated region
      $region41: #{discriminator_forward.1} parent=11 // pred_check
        %p273 = pneg %p211
      $region42: #{discriminator_forward.1} parent=11 // pred_check_branch
        %275 = sbr.rel (%p273) target = $region44
      $region43: #{discriminator_forward.1} parent=11 // pred_region
        _
      $region44: #{discriminator_forward.1} parent=11 // pred_fallthru
        _
    $region12: #{discriminator_forward.1} parent=5 // pred_fallthru
      _
    %p276 = scmp.lt.s32.totalorder %s17, 2
    // Predicated region
    $region45: #{discriminator_forward.1} parent=5 // pred_check
      %p277 = pneg %p276
    $region46: #{discriminator_forward.1} parent=5 // pred_check_branch
      %279 = sbr.rel (%p277) target = $region48
    $region47: #{discriminator_forward.1} parent=5 // pred_region
      // Predicated region
      $region49: #{discriminator_forward.1} parent=47 // pred_check
        %p280 = pneg %p37
      $region50: #{discriminator_forward.1} parent=47 // pred_check_branch
        %282 = sbr.rel (%p280) target = $region52
      $region51: #{discriminator_forward.1} parent=47 // pred_region
        %s283 = smul.u32 32, %s17
        %p284 = scmp.lt.s32.totalorder %s283, 63
        %s285 = scalar_select %p284, %s283, 63
        %s286 = smul.addr %s285, 7
        %s287 = smul.addr %s286, 4
        %s288 = scalar_lea.vmem %s0, %s287
        %s289 = smul.u32 32, %s17
      $region52: #{discriminator_forward.1} parent=47 // pred_fallthru
        _
    $region48: #{discriminator_forward.1} parent=5 // pred_fallthru
      _
    %p290 = scmp.le.s32.totalorder 1, %s17
    %p291 = scmp.lt.s32.totalorder %s17, 3
    %p292 = pnand %p290, %p291
    %p293 = pneg %p292
    // Predicated region
    $region53: #{discriminator_forward.1} parent=5 // pred_check
      _
    $region54: #{discriminator_forward.1} parent=5 // pred_check_branch
      %295 = sbr.rel (%p292) target = $region56
    $region55: #{discriminator_forward.1} parent=5 // pred_region
      %s296 = ssub.s32 %s17, 1
      %s297 = smul.u32 32, %s22
      %p298 = scmp.lt.s32.totalorder %s297, 63
      %s299 = scalar_select %p298, %s297, 63
      %s300 = smul.addr %s299, 7
      %s301 = smul.addr %s300, 4
      %s302 = scalar_lea.vmem %s0, %s301
      %p303 = pneg %p43
      %p304 = pneg %p40
      %p305 = pneg %p64
      %p306 = pneg %p61
      %p307 = pneg %p85
      %p308 = pneg %p82
      %p309 = pneg %p106
      %p310 = pneg %p103
      %p311 = pneg %p127
      %p312 = pneg %p124
      %p313 = pneg %p148
      %p314 = pneg %p145
      %p315 = pneg %p169
      %p316 = pneg %p166
      %p317 = pneg %p190
      %p318 = pneg %p187
      %p319 = pneg %p211
      %p320 = pneg %p208
      %p321 = pneg %p237
      %p322 = pneg %p234
      %s323 = smul.u32 2, %s22
      %p324 = scmp.lt.s32.totalorder %s323, 3
      %s325 = scalar_select %p324, %s323, 3
      %s326 = smul.addr %s325, 8
      %s327 = scalar_lea.vmem %s9, %s326
      %s328 = smul.u32 32, %s22
      %p329 = scmp.lt.s32.totalorder %s328, 63
      %s330 = scalar_select %p329, %s328, 63
      %s331 = smul.addr %s330, 7
      %s332 = smul.addr %s331, 4
      %s333 = scalar_lea.vmem %s0, %s332
      %s334 = smul.u32 32, %s22
      %s335 = smul.u32 2, %s22
      %p336 = scmp.lt.s32.totalorder %s335, 3
      %s337 = scalar_select %p336, %s335, 3
      %s338 = smul.addr %s337, 8
      %s339 = scalar_lea.vmem %s9, %s338
      %s340 = smul.u32 2, %s22
      %v341 = vld [vmem:[%s333] sm:$0xff]
      %v342 = vld [vmem:[%s333 + $0x8] sm:$0xff]
      %v343 = vld [vmem:[%s333 + $0x10] sm:$0xff]
      %v344 = vld [vmem:[%s333 + $0x18] sm:$0xf]
      %v345 = vld [vmem:[%s333 + $0x1c] sm:$0xff]
      %v346 = vld [vmem:[%s333 + $0x24] sm:$0xff]
      %v347 = vld [vmem:[%s333 + $0x2c] sm:$0xff]
      %v348 = vld [vmem:[%s333 + $0x34] sm:$0xf]
      %v349 = vld [vmem:[%s333 + $0x38] sm:$0xff]
      %v350 = vld [vmem:[%s333 + $0x40] sm:$0xff]
      %v351 = vld [vmem:[%s333 + $0x48] sm:$0xff]
      %v352 = vld [vmem:[%s333 + $0x50] sm:$0xf]
      %v353 = vld [vmem:[%s333 + $0x54] sm:$0xff]
      %v354 = vld [vmem:[%s333 + $0x5c] sm:$0xff]
      %v355 = vld [vmem:[%s333 + $0x64] sm:$0xff]
      %v356 = vld [vmem:[%s333 + $0x6c] sm:$0xf]
      %v357 = vld [vmem:[%s333 + $0x70] sm:$0xff]
      %v358 = vld [vmem:[%s333 + $0x78] sm:$0xff]
      %v359 = vld [vmem:[%s333 + $0x80] sm:$0xff]
      %v360 = vld [vmem:[%s333 + $0x88] sm:$0xf]
      %v361 = vld [vmem:[%s333 + $0x8c] sm:$0xff]
      %v362 = vld [vmem:[%s333 + $0x94] sm:$0xff]
      %v363 = vld [vmem:[%s333 + $0x9c] sm:$0xff]
      %v364 = vld [vmem:[%s333 + $0xa4] sm:$0xf]
      %v365 = vld [vmem:[%s333 + $0xa8] sm:$0xff]
      %v366 = vld [vmem:[%s333 + $0xb0] sm:$0xff]
      %v367 = vld [vmem:[%s333 + $0xb8] sm:$0xff]
      %v368 = vld [vmem:[%s333 + $0xc0] sm:$0xf]
      %v369 = vld [vmem:[%s333 + $0xc4] sm:$0xff]
      %v370 = vld [vmem:[%s333 + $0xcc] sm:$0xff]
      %v371 = vld [vmem:[%s333 + $0xd4] sm:$0xff]
      %v372 = vld [vmem:[%s333 + $0xdc] sm:$0xf]
      %v373 = vld [vmem:[%s333 + $0xe0] sm:$0xff]
      %v374 = vld [vmem:[%s333 + $0xe8] sm:$0xff]
      %v375 = vld [vmem:[%s333 + $0xf0] sm:$0xff]
      %v376 = vld [vmem:[%s333 + $0xf8] sm:$0xf]
      %v377 = vld [vmem:[%s333 + $0xfc] sm:$0xff]
      %v378 = vld [vmem:[%s333 + $0x104] sm:$0xff]
      %v379 = vld [vmem:[%s333 + $0x10c] sm:$0xff]
      %v380 = vld [vmem:[%s333 + $0x114] sm:$0xf]
      %v381 = vld [vmem:[%s333 + $0x118] sm:$0xff]
      %v382 = vld [vmem:[%s333 + $0x120] sm:$0xff]
      %v383 = vld [vmem:[%s333 + $0x128] sm:$0xff]
      %v384 = vld [vmem:[%s333 + $0x130] sm:$0xf]
      %v385 = vld [vmem:[%s333 + $0x134] sm:$0xff]
      %v386 = vld [vmem:[%s333 + $0x13c] sm:$0xff]
      %v387 = vld [vmem:[%s333 + $0x144] sm:$0xff]
      %v388 = vld [vmem:[%s333 + $0x14c] sm:$0xf]
      %v389 = vld [vmem:[%s333 + $0x150] sm:$0xff]
      %v390 = vld [vmem:[%s333 + $0x158] sm:$0xff]
      %v391 = vld [vmem:[%s333 + $0x160] sm:$0xff]
      %v392 = vld [vmem:[%s333 + $0x168] sm:$0xf]
      %v393 = vld [vmem:[%s333 + $0x16c] sm:$0xff]
      %v394 = vld [vmem:[%s333 + $0x174] sm:$0xff]
      %v395 = vld [vmem:[%s333 + $0x17c] sm:$0xff]
      %v396 = vld [vmem:[%s333 + $0x184] sm:$0xf]
      %v397 = vld [vmem:[%s333 + $0x188] sm:$0xff]
      %v398 = vld [vmem:[%s333 + $0x190] sm:$0xff]
      %v399 = vld [vmem:[%s333 + $0x198] sm:$0xff]
      %v400 = vld [vmem:[%s333 + $0x1a0] sm:$0xf]
      %v401 = vld [vmem:[%s333 + $0x1a4] sm:$0xff]
      %v402 = vld [vmem:[%s333 + $0x1ac] sm:$0xff]
      %v403 = vld [vmem:[%s333 + $0x1b4] sm:$0xff]
      %v404 = vld [vmem:[%s333 + $0x1bc] sm:$0xf]
      %v405 = vld [vmem:[%s333 + $0x1c0] sm:$0xff]
      %v406 = vld [vmem:[%s333 + $0x1c8] sm:$0xff]
      %v407 = vld [vmem:[%s333 + $0x1d0] sm:$0xff]
      %v408 = vld [vmem:[%s333 + $0x1d8] sm:$0xf]
      %v409 = vld [vmem:[%s333 + $0x1dc] sm:$0xff]
      %v410 = vld [vmem:[%s333 + $0x1e4] sm:$0xff]
      %v411 = vld [vmem:[%s333 + $0x1ec] sm:$0xff]
      %v412 = vld [vmem:[%s333 + $0x1f4] sm:$0xf]
      %v413 = vld [vmem:[%s333 + $0x1f8] sm:$0xff]
      %v414 = vld [vmem:[%s333 + $0x200] sm:$0xff]
      %v415 = vld [vmem:[%s333 + $0x208] sm:$0xff]
      %v416 = vld [vmem:[%s333 + $0x210] sm:$0xf]
      %v417 = vld [vmem:[%s333 + $0x214] sm:$0xff]
      %v418 = vld [vmem:[%s333 + $0x21c] sm:$0xff]
      %v419 = vld [vmem:[%s333 + $0x224] sm:$0xff]
      %v420 = vld [vmem:[%s333 + $0x22c] sm:$0xf]
      %v421 = vld [vmem:[%s333 + $0x230] sm:$0xff]
      %v422 = vld [vmem:[%s333 + $0x238] sm:$0xff]
      %v423 = vld [vmem:[%s333 + $0x240] sm:$0xff]
      %v424 = vld [vmem:[%s333 + $0x248] sm:$0xf]
      %v425 = vld [vmem:[%s333 + $0x24c] sm:$0xff]
      %v426 = vld [vmem:[%s333 + $0x254] sm:$0xff]
      %v427 = vld [vmem:[%s333 + $0x25c] sm:$0xff]
      %v428 = vld [vmem:[%s333 + $0x264] sm:$0xf]
      %v429 = vld [vmem:[%s333 + $0x268] sm:$0xff]
      %v430 = vld [vmem:[%s333 + $0x270] sm:$0xff]
      %v431 = vld [vmem:[%s333 + $0x278] sm:$0xff]
      %v432 = vld [vmem:[%s333 + $0x280] sm:$0xf]
      %v433 = vld [vmem:[%s333 + $0x284] sm:$0xff]
      %v434 = vld [vmem:[%s333 + $0x28c] sm:$0xff]
      %v435 = vld [vmem:[%s333 + $0x294] sm:$0xff]
      %v436 = vld [vmem:[%s333 + $0x29c] sm:$0xf]
      %v437 = vld [vmem:[%s333 + $0x2a0] sm:$0xff]
      %v438 = vld [vmem:[%s333 + $0x2a8] sm:$0xff]
      %v439 = vld [vmem:[%s333 + $0x2b0] sm:$0xff]
      %v440 = vld [vmem:[%s333 + $0x2b8] sm:$0xf]
      %v441 = vld [vmem:[%s333 + $0x2bc] sm:$0xff]
      %v442 = vld [vmem:[%s333 + $0x2c4] sm:$0xff]
      %v443 = vld [vmem:[%s333 + $0x2cc] sm:$0xff]
      %v444 = vld [vmem:[%s333 + $0x2d4] sm:$0xf]
      %v445 = vld [vmem:[%s333 + $0x2d8] sm:$0xff]
      %v446 = vld [vmem:[%s333 + $0x2e0] sm:$0xff]
      %v447 = vld [vmem:[%s333 + $0x2e8] sm:$0xff]
      %v448 = vld [vmem:[%s333 + $0x2f0] sm:$0xf]
      %v449 = vld [vmem:[%s333 + $0x2f4] sm:$0xff]
      %v450 = vld [vmem:[%s333 + $0x2fc] sm:$0xff]
      %v451 = vld [vmem:[%s333 + $0x304] sm:$0xff]
      %v452 = vld [vmem:[%s333 + $0x30c] sm:$0xf]
      %v453 = vld [vmem:[%s333 + $0x310] sm:$0xff]
      %v454 = vld [vmem:[%s333 + $0x318] sm:$0xff]
      %v455 = vld [vmem:[%s333 + $0x320] sm:$0xff]
      %v456 = vld [vmem:[%s333 + $0x328] sm:$0xf]
      %v457 = vld [vmem:[%s333 + $0x32c] sm:$0xff]
      %v458 = vld [vmem:[%s333 + $0x334] sm:$0xff]
      %v459 = vld [vmem:[%s333 + $0x33c] sm:$0xff]
      %v460 = vld [vmem:[%s333 + $0x344] sm:$0xf]
      %v461 = vld [vmem:[%s333 + $0x348] sm:$0xff]
      %v462 = vld [vmem:[%s333 + $0x350] sm:$0xff]
      %v463 = vld [vmem:[%s333 + $0x358] sm:$0xff]
      %v464 = vld [vmem:[%s333 + $0x360] sm:$0xf]
      %v465 = vld [vmem:[%s333 + $0x364] sm:$0xff]
      %v466 = vld [vmem:[%s333 + $0x36c] sm:$0xff]
      %v467 = vld [vmem:[%s333 + $0x374] sm:$0xff]
      %v468 = vld [vmem:[%s333 + $0x37c] sm:$0xf]
      %v469 = vld [vmem:[%s1] sm:$0xff]
      %v470 = vld [vmem:[%s1 + $0x8] sm:$0xff]
      %v471 = vld [vmem:[%s1 + $0x10] sm:$0xff]
      %v472 = vld [vmem:[%s1 + $0x18] sm:$0xff]
      %v473 = vld [vmem:[%s1 + $0x20] sm:$0xff]
      %v474 = vld [vmem:[%s1 + $0x28] sm:$0xff]
      %v475 = vld [vmem:[%s1 + $0x30] sm:$0xff]
      %v476 = vld [vmem:[%s1 + $0x38] sm:$0xff]
      %v477 = vld [vmem:[%s1 + $0x40] sm:$0xff]
      %v478 = vld [vmem:[%s1 + $0x48] sm:$0xff]
      %v479 = vld [vmem:[%s1 + $0x50] sm:$0xff]
      %v480 = vld [vmem:[%s1 + $0x58] sm:$0xff]
      %v481 = vld [vmem:[%s1 + $0x60] sm:$0xff]
      %v482 = vld [vmem:[%s1 + $0x68] sm:$0xff]
      %v483 = vld [vmem:[%s1 + $0x70] sm:$0xff]
      %v484 = vld [vmem:[%s1 + $0x78] sm:$0xff]
      %v485 = vld [vmem:[%s1 + $0x80] sm:$0xff]
      %v486 = vld [vmem:[%s1 + $0x88] sm:$0xff]
      %v487 = vld [vmem:[%s1 + $0x90] sm:$0xff]
      %v488 = vld [vmem:[%s1 + $0x98] sm:$0xff]
      %v489 = vld [vmem:[%s1 + $0xa0] sm:$0xff]
      %v490 = vld [vmem:[%s1 + $0xa8] sm:$0xff]
      %v491 = vld [vmem:[%s1 + $0xb0] sm:$0xff]
      %v492 = vld [vmem:[%s1 + $0xb8] sm:$0xff]
      %v493 = vld [vmem:[%s1 + $0xc0] sm:$0xff]
      %v494 = vld [vmem:[%s1 + $0xc8] sm:$0xff]
      %v495 = vld [vmem:[%s1 + $0xd0] sm:$0xff]
      %v496 = vld [vmem:[%s1 + $0xd8] sm:$0xff]
      %v497 = vld [vmem:[%s1 + $0xe0] sm:$0xff]
      %v498 = vld [vmem:[%s1 + $0xe8] sm:$0xff]
      %v499 = vld [vmem:[%s1 + $0xf0] sm:$0xff]
      %v500 = vld [vmem:[%s1 + $0xf8] sm:$0xff]
      %v501 = vld [vmem:[%s1 + $0x100] sm:$0xff]
      %v502 = vld [vmem:[%s1 + $0x108] sm:$0xff]
      %v503 = vld [vmem:[%s1 + $0x110] sm:$0xff]
      %v504 = vld [vmem:[%s1 + $0x118] sm:$0xff]
      %v505 = vld [vmem:[%s1 + $0x120] sm:$0xff]
      %v506 = vld [vmem:[%s1 + $0x128] sm:$0xff]
      %v507 = vld [vmem:[%s1 + $0x130] sm:$0xff]
      %v508 = vld [vmem:[%s1 + $0x138] sm:$0xff]
      %v509 = vld [vmem:[%s1 + $0x140] sm:$0xff]
      %v510 = vld [vmem:[%s1 + $0x148] sm:$0xff]
      %v511 = vld [vmem:[%s1 + $0x150] sm:$0xff]
      %v512 = vld [vmem:[%s1 + $0x158] sm:$0xff]
      %v513 = vld [vmem:[%s1 + $0x160] sm:$0xff]
      %v514 = vld [vmem:[%s1 + $0x168] sm:$0xff]
      %v515 = vld [vmem:[%s1 + $0x170] sm:$0xff]
      %v516 = vld [vmem:[%s1 + $0x178] sm:$0xff]
      %v517 = vld [vmem:[%s1 + $0x180] sm:$0xff]
      %v518 = vld [vmem:[%s1 + $0x188] sm:$0xff]
      %v519 = vld [vmem:[%s1 + $0x190] sm:$0xff]
      %v520 = vld [vmem:[%s1 + $0x198] sm:$0xff]
      %v521 = vld [vmem:[%s1 + $0x1a0] sm:$0xff]
      %v522 = vld [vmem:[%s1 + $0x1a8] sm:$0xff]
      %v523 = vld [vmem:[%s1 + $0x1b0] sm:$0xff]
      %v524 = vld [vmem:[%s1 + $0x1b8] sm:$0xff]
      %v525 = vld [vmem:[%s1 + $0x1c0] sm:$0xff]
      %v526 = vld [vmem:[%s1 + $0x1c8] sm:$0xff]
      %v527 = vld [vmem:[%s1 + $0x1d0] sm:$0xff]
      %v528 = vld [vmem:[%s1 + $0x1d8] sm:$0xff]
      %v529 = vld [vmem:[%s1 + $0x1e0] sm:$0xff]
      %v530 = vld [vmem:[%s1 + $0x1e8] sm:$0xff]
      %v531 = vld [vmem:[%s1 + $0x1f0] sm:$0xff]
      %v532 = vld [vmem:[%s1 + $0x1f8] sm:$0xff]
      %v533 = vld [vmem:[%s1 + $0x200] sm:$0xff]
      %v534 = vld [vmem:[%s1 + $0x208] sm:$0xff]
      %v535 = vld [vmem:[%s1 + $0x210] sm:$0xff]
      %v536 = vld [vmem:[%s1 + $0x218] sm:$0xff]
      %v537 = vld [vmem:[%s1 + $0x220] sm:$0xff]
      %v538 = vld [vmem:[%s1 + $0x228] sm:$0xff]
      %v539 = vld [vmem:[%s1 + $0x230] sm:$0xff]
      %v540 = vld [vmem:[%s1 + $0x238] sm:$0xff]
      %v541 = vld [vmem:[%s1 + $0x240] sm:$0xff]
      %v542 = vld [vmem:[%s1 + $0x248] sm:$0xff]
      %v543 = vld [vmem:[%s1 + $0x250] sm:$0xff]
      %v544 = vld [vmem:[%s1 + $0x258] sm:$0xff]
      %v545 = vld [vmem:[%s1 + $0x260] sm:$0xff]
      %v546 = vld [vmem:[%s1 + $0x268] sm:$0xff]
      %v547 = vld [vmem:[%s1 + $0x270] sm:$0xff]
      %v548 = vld [vmem:[%s1 + $0x278] sm:$0xff]
      %v549 = vld [vmem:[%s1 + $0x280] sm:$0xff]
      %v550 = vld [vmem:[%s1 + $0x288] sm:$0xff]
      %v551 = vld [vmem:[%s1 + $0x290] sm:$0xff]
      %v552 = vld [vmem:[%s1 + $0x298] sm:$0xff]
      %v553 = vld [vmem:[%s1 + $0x2a0] sm:$0xff]
      %v554 = vld [vmem:[%s1 + $0x2a8] sm:$0xff]
      %v555 = vld [vmem:[%s1 + $0x2b0] sm:$0xff]
      %v556 = vld [vmem:[%s1 + $0x2b8] sm:$0xff]
      %v557 = vld [vmem:[%s1 + $0x2c0] sm:$0xff]
      %v558 = vld [vmem:[%s1 + $0x2c8] sm:$0xff]
      %v559 = vld [vmem:[%s1 + $0x2d0] sm:$0xff]
      %v560 = vld [vmem:[%s1 + $0x2d8] sm:$0xff]
      %v561 = vld [vmem:[%s1 + $0x2e0] sm:$0xff]
      %v562 = vld [vmem:[%s1 + $0x2e8] sm:$0xff]
      %v563 = vld [vmem:[%s1 + $0x2f0] sm:$0xff]
      %v564 = vld [vmem:[%s1 + $0x2f8] sm:$0xff]
      %v565 = vld [vmem:[%s1 + $0x300] sm:$0xff]
      %v566 = vld [vmem:[%s1 + $0x308] sm:$0xff]
      %v567 = vld [vmem:[%s1 + $0x310] sm:$0xff]
      %v568 = vld [vmem:[%s1 + $0x318] sm:$0xff]
      %v569 = vld [vmem:[%s1 + $0x320] sm:$0xff]
      %v570 = vld [vmem:[%s1 + $0x328] sm:$0xff]
      %v571 = vld [vmem:[%s1 + $0x330] sm:$0xff]
      %v572 = vld [vmem:[%s1 + $0x338] sm:$0xff]
      %v573 = vld [vmem:[%s1 + $0x340] sm:$0xff]
      %v574 = vld [vmem:[%s1 + $0x348] sm:$0xff]
      %v575 = vld [vmem:[%s1 + $0x350] sm:$0xff]
      %v576 = vld [vmem:[%s1 + $0x358] sm:$0xff]
      %v577 = vld [vmem:[%s1 + $0x360] sm:$0xff]
      %v578 = vld [vmem:[%s1 + $0x368] sm:$0xff]
      %v579 = vld [vmem:[%s1 + $0x370] sm:$0xff]
      %v580 = vld [vmem:[%s1 + $0x378] sm:$0xff]
      %v581 = vld [vmem:[%s2] sm:$0x3]
      %v583 = vperm.slane %v581, 0
      %v584 = vperm.slane %v581, 1
      %v715 = vunpack.c.l.b16 %v341
      %v716 = vunpack.c.h.b16 %v341
      %v717 = vunpack.c.l.b16 %v342
      %v718 = vunpack.c.h.b16 %v342
      %v719 = vunpack.c.l.b16 %v343
      %v720 = vunpack.c.h.b16 %v343
      %v721 = vunpack.c.l.b16 %v344
      %v722 = vunpack.c.l.b16 %v345
      %v723 = vunpack.c.h.b16 %v345
      %v724 = vunpack.c.l.b16 %v346
      %v725 = vunpack.c.h.b16 %v346
      %v726 = vunpack.c.l.b16 %v347
      %v727 = vunpack.c.h.b16 %v347
      %v728 = vunpack.c.l.b16 %v348
      %v729 = vunpack.c.l.b16 %v349
      %v730 = vunpack.c.h.b16 %v349
      %v731 = vunpack.c.l.b16 %v350
      %v732 = vunpack.c.h.b16 %v350
      %v733 = vunpack.c.l.b16 %v351
      %v734 = vunpack.c.h.b16 %v351
      %v735 = vunpack.c.l.b16 %v352
      %v736 = vunpack.c.l.b16 %v353
      %v737 = vunpack.c.h.b16 %v353
      %v738 = vunpack.c.l.b16 %v354
      %v739 = vunpack.c.h.b16 %v354
      %v740 = vunpack.c.l.b16 %v355
      %v741 = vunpack.c.h.b16 %v355
      %v742 = vunpack.c.l.b16 %v356
      %v743 = vunpack.c.l.b16 %v357
      %v744 = vunpack.c.h.b16 %v357
      %v745 = vunpack.c.l.b16 %v358
      %v746 = vunpack.c.h.b16 %v358
      %v747 = vunpack.c.l.b16 %v359
      %v748 = vunpack.c.h.b16 %v359
      %v749 = vunpack.c.l.b16 %v360
      %v750 = vunpack.c.l.b16 %v361
      %v751 = vunpack.c.h.b16 %v361
      %v752 = vunpack.c.l.b16 %v362
      %v753 = vunpack.c.h.b16 %v362
      %v754 = vunpack.c.l.b16 %v363
      %v755 = vunpack.c.h.b16 %v363
      %v756 = vunpack.c.l.b16 %v364
      %v757 = vunpack.c.l.b16 %v365
      %v758 = vunpack.c.h.b16 %v365
      %v759 = vunpack.c.l.b16 %v366
      %v760 = vunpack.c.h.b16 %v366
      %v761 = vunpack.c.l.b16 %v367
      %v762 = vunpack.c.h.b16 %v367
      %v763 = vunpack.c.l.b16 %v368
      %v764 = vunpack.c.l.b16 %v369
      %v765 = vunpack.c.h.b16 %v369
      %v766 = vunpack.c.l.b16 %v370
      %v767 = vunpack.c.h.b16 %v370
      %v768 = vunpack.c.l.b16 %v371
      %v769 = vunpack.c.h.b16 %v371
      %v770 = vunpack.c.l.b16 %v372
      %v771 = vunpack.c.l.b16 %v373
      %v772 = vunpack.c.h.b16 %v373
      %v773 = vunpack.c.l.b16 %v374
      %v774 = vunpack.c.h.b16 %v374
      %v775 = vunpack.c.l.b16 %v375
      %v776 = vunpack.c.h.b16 %v375
      %v777 = vunpack.c.l.b16 %v376
      %v778 = vunpack.c.l.b16 %v377
      %v779 = vunpack.c.h.b16 %v377
      %v780 = vunpack.c.l.b16 %v378
      %v781 = vunpack.c.h.b16 %v378
      %v782 = vunpack.c.l.b16 %v379
      %v783 = vunpack.c.h.b16 %v379
      %v784 = vunpack.c.l.b16 %v380
      %v785 = vunpack.c.l.b16 %v381
      %v786 = vunpack.c.h.b16 %v381
      %v787 = vunpack.c.l.b16 %v382
      %v788 = vunpack.c.h.b16 %v382
      %v789 = vunpack.c.l.b16 %v383
      %v790 = vunpack.c.h.b16 %v383
      %v791 = vunpack.c.l.b16 %v384
      %v792 = vunpack.c.l.b16 %v385
      %v793 = vunpack.c.h.b16 %v385
      %v794 = vunpack.c.l.b16 %v386
      %v795 = vunpack.c.h.b16 %v386
      %v796 = vunpack.c.l.b16 %v387
      %v797 = vunpack.c.h.b16 %v387
      %v798 = vunpack.c.l.b16 %v388
      %v799 = vunpack.c.l.b16 %v389
      %v800 = vunpack.c.h.b16 %v389
      %v801 = vunpack.c.l.b16 %v390
      %v802 = vunpack.c.h.b16 %v390
      %v803 = vunpack.c.l.b16 %v391
      %v804 = vunpack.c.h.b16 %v391
      %v805 = vunpack.c.l.b16 %v392
      %v806 = vunpack.c.l.b16 %v393
      %v807 = vunpack.c.h.b16 %v393
      %v808 = vunpack.c.l.b16 %v394
      %v809 = vunpack.c.h.b16 %v394
      %v810 = vunpack.c.l.b16 %v395
      %v811 = vunpack.c.h.b16 %v395
      %v812 = vunpack.c.l.b16 %v396
      %v813 = vunpack.c.l.b16 %v397
      %v814 = vunpack.c.h.b16 %v397
      %v815 = vunpack.c.l.b16 %v398
      %v816 = vunpack.c.h.b16 %v398
      %v817 = vunpack.c.l.b16 %v399
      %v818 = vunpack.c.h.b16 %v399
      %v819 = vunpack.c.l.b16 %v400
      %v820 = vunpack.c.l.b16 %v401
      %v821 = vunpack.c.h.b16 %v401
      %v822 = vunpack.c.l.b16 %v402
      %v823 = vunpack.c.h.b16 %v402
      %v824 = vunpack.c.l.b16 %v403
      %v825 = vunpack.c.h.b16 %v403
      %v826 = vunpack.c.l.b16 %v404
      %v827 = vunpack.c.l.b16 %v405
      %v828 = vunpack.c.h.b16 %v405
      %v829 = vunpack.c.l.b16 %v406
      %v830 = vunpack.c.h.b16 %v406
      %v831 = vunpack.c.l.b16 %v407
      %v832 = vunpack.c.h.b16 %v407
      %v833 = vunpack.c.l.b16 %v408
      %v834 = vunpack.c.l.b16 %v409
      %v835 = vunpack.c.h.b16 %v409
      %v836 = vunpack.c.l.b16 %v410
      %v837 = vunpack.c.h.b16 %v410
      %v838 = vunpack.c.l.b16 %v411
      %v839 = vunpack.c.h.b16 %v411
      %v840 = vunpack.c.l.b16 %v412
      %v841 = vunpack.c.l.b16 %v413
      %v842 = vunpack.c.h.b16 %v413
      %v843 = vunpack.c.l.b16 %v414
      %v844 = vunpack.c.h.b16 %v414
      %v845 = vunpack.c.l.b16 %v415
      %v846 = vunpack.c.h.b16 %v415
      %v847 = vunpack.c.l.b16 %v416
      %v848 = vunpack.c.l.b16 %v417
      %v849 = vunpack.c.h.b16 %v417
      %v850 = vunpack.c.l.b16 %v418
      %v851 = vunpack.c.h.b16 %v418
      %v852 = vunpack.c.l.b16 %v419
      %v853 = vunpack.c.h.b16 %v419
      %v854 = vunpack.c.l.b16 %v420
      %v855 = vunpack.c.l.b16 %v421
      %v856 = vunpack.c.h.b16 %v421
      %v857 = vunpack.c.l.b16 %v422
      %v858 = vunpack.c.h.b16 %v422
      %v859 = vunpack.c.l.b16 %v423
      %v860 = vunpack.c.h.b16 %v423
      %v861 = vunpack.c.l.b16 %v424
      %v862 = vunpack.c.l.b16 %v425
      %v863 = vunpack.c.h.b16 %v425
      %v864 = vunpack.c.l.b16 %v426
      %v865 = vunpack.c.h.b16 %v426
      %v866 = vunpack.c.l.b16 %v427
      %v867 = vunpack.c.h.b16 %v427
      %v868 = vunpack.c.l.b16 %v428
      %v869 = vunpack.c.l.b16 %v429
      %v870 = vunpack.c.h.b16 %v429
      %v871 = vunpack.c.l.b16 %v430
      %v872 = vunpack.c.h.b16 %v430
      %v873 = vunpack.c.l.b16 %v431
      %v874 = vunpack.c.h.b16 %v431
      %v875 = vunpack.c.l.b16 %v432
      %v876 = vunpack.c.l.b16 %v433
      %v877 = vunpack.c.h.b16 %v433
      %v878 = vunpack.c.l.b16 %v434
      %v879 = vunpack.c.h.b16 %v434
      %v880 = vunpack.c.l.b16 %v435
      %v881 = vunpack.c.h.b16 %v435
      %v882 = vunpack.c.l.b16 %v436
      %v883 = vunpack.c.l.b16 %v437
      %v884 = vunpack.c.h.b16 %v437
      %v885 = vunpack.c.l.b16 %v438
      %v886 = vunpack.c.h.b16 %v438
      %v887 = vunpack.c.l.b16 %v439
      %v888 = vunpack.c.h.b16 %v439
      %v889 = vunpack.c.l.b16 %v440
      %v890 = vunpack.c.l.b16 %v441
      %v891 = vunpack.c.h.b16 %v441
      %v892 = vunpack.c.l.b16 %v442
      %v893 = vunpack.c.h.b16 %v442
      %v894 = vunpack.c.l.b16 %v443
      %v895 = vunpack.c.h.b16 %v443
      %v896 = vunpack.c.l.b16 %v444
      %v897 = vunpack.c.l.b16 %v445
      %v898 = vunpack.c.h.b16 %v445
      %v899 = vunpack.c.l.b16 %v446
      %v900 = vunpack.c.h.b16 %v446
      %v901 = vunpack.c.l.b16 %v447
      %v902 = vunpack.c.h.b16 %v447
      %v903 = vunpack.c.l.b16 %v448
      %v904 = vunpack.c.l.b16 %v449
      %v905 = vunpack.c.h.b16 %v449
      %v906 = vunpack.c.l.b16 %v450
      %v907 = vunpack.c.h.b16 %v450
      %v908 = vunpack.c.l.b16 %v451
      %v909 = vunpack.c.h.b16 %v451
      %v910 = vunpack.c.l.b16 %v452
      %v911 = vunpack.c.l.b16 %v453
      %v912 = vunpack.c.h.b16 %v453
      %v913 = vunpack.c.l.b16 %v454
      %v914 = vunpack.c.h.b16 %v454
      %v915 = vunpack.c.l.b16 %v455
      %v916 = vunpack.c.h.b16 %v455
      %v917 = vunpack.c.l.b16 %v456
      %v918 = vunpack.c.l.b16 %v457
      %v919 = vunpack.c.h.b16 %v457
      %v920 = vunpack.c.l.b16 %v458
      %v921 = vunpack.c.h.b16 %v458
      %v922 = vunpack.c.l.b16 %v459
      %v923 = vunpack.c.h.b16 %v459
      %v924 = vunpack.c.l.b16 %v460
      %v925 = vunpack.c.l.b16 %v461
      %v926 = vunpack.c.h.b16 %v461
      %v927 = vunpack.c.l.b16 %v462
      %v928 = vunpack.c.h.b16 %v462
      %v929 = vunpack.c.l.b16 %v463
      %v930 = vunpack.c.h.b16 %v463
      %v931 = vunpack.c.l.b16 %v464
      %v932 = vunpack.c.l.b16 %v465
      %v933 = vunpack.c.h.b16 %v465
      %v934 = vunpack.c.l.b16 %v466
      %v935 = vunpack.c.h.b16 %v466
      %v936 = vunpack.c.l.b16 %v467
      %v937 = vunpack.c.h.b16 %v467
      %v938 = vunpack.c.l.b16 %v468
      %v939 = vpack.c.b16 %v722, %v715
      %v940 = vpack.c.b16 %v723, %v716
      %v941 = vpack.c.b16 %v724, %v717
      %v942 = vpack.c.b16 %v725, %v718
      %v943 = vpack.c.b16 %v726, %v719
      %v944 = vpack.c.b16 %v727, %v720
      %v945 = vpack.c.b16 %v728, %v721
      %v946 = vpack.c.b16 %v736, %v729
      %v947 = vpack.c.b16 %v737, %v730
      %v948 = vpack.c.b16 %v738, %v731
      %v949 = vpack.c.b16 %v739, %v732
      %v950 = vpack.c.b16 %v740, %v733
      %v951 = vpack.c.b16 %v741, %v734
      %v952 = vpack.c.b16 %v742, %v735
      %v953 = vpack.c.b16 %v750, %v743
      %v954 = vpack.c.b16 %v751, %v744
      %v955 = vpack.c.b16 %v752, %v745
      %v956 = vpack.c.b16 %v753, %v746
      %v957 = vpack.c.b16 %v754, %v747
      %v958 = vpack.c.b16 %v755, %v748
      %v959 = vpack.c.b16 %v756, %v749
      %v960 = vpack.c.b16 %v764, %v757
      %v961 = vpack.c.b16 %v765, %v758
      %v962 = vpack.c.b16 %v766, %v759
      %v963 = vpack.c.b16 %v767, %v760
      %v964 = vpack.c.b16 %v768, %v761
      %v965 = vpack.c.b16 %v769, %v762
      %v966 = vpack.c.b16 %v770, %v763
      %v967 = vpack.c.b16 %v778, %v771
      %v968 = vpack.c.b16 %v779, %v772
      %v969 = vpack.c.b16 %v780, %v773
      %v970 = vpack.c.b16 %v781, %v774
      %v971 = vpack.c.b16 %v782, %v775
      %v972 = vpack.c.b16 %v783, %v776
      %v973 = vpack.c.b16 %v784, %v777
      %v974 = vpack.c.b16 %v792, %v785
      %v975 = vpack.c.b16 %v793, %v786
      %v976 = vpack.c.b16 %v794, %v787
      %v977 = vpack.c.b16 %v795, %v788
      %v978 = vpack.c.b16 %v796, %v789
      %v979 = vpack.c.b16 %v797, %v790
      %v980 = vpack.c.b16 %v798, %v791
      %v981 = vpack.c.b16 %v806, %v799
      %v982 = vpack.c.b16 %v807, %v800
      %v983 = vpack.c.b16 %v808, %v801
      %v984 = vpack.c.b16 %v809, %v802
      %v985 = vpack.c.b16 %v810, %v803
      %v986 = vpack.c.b16 %v811, %v804
      %v987 = vpack.c.b16 %v812, %v805
      %v988 = vpack.c.b16 %v820, %v813
      %v989 = vpack.c.b16 %v821, %v814
      %v990 = vpack.c.b16 %v822, %v815
      %v991 = vpack.c.b16 %v823, %v816
      %v992 = vpack.c.b16 %v824, %v817
      %v993 = vpack.c.b16 %v825, %v818
      %v994 = vpack.c.b16 %v826, %v819
      %v995 = vpack.c.b16 %v834, %v827
      %v996 = vpack.c.b16 %v835, %v828
      %v997 = vpack.c.b16 %v836, %v829
      %v998 = vpack.c.b16 %v837, %v830
      %v999 = vpack.c.b16 %v838, %v831
      %v1000 = vpack.c.b16 %v839, %v832
      %v1001 = vpack.c.b16 %v840, %v833
      %v1002 = vpack.c.b16 %v848, %v841
      %v1003 = vpack.c.b16 %v849, %v842
      %v1004 = vpack.c.b16 %v850, %v843
      %v1005 = vpack.c.b16 %v851, %v844
      %v1006 = vpack.c.b16 %v852, %v845
      %v1007 = vpack.c.b16 %v853, %v846
      %v1008 = vpack.c.b16 %v854, %v847
      %v1009 = vpack.c.b16 %v862, %v855
      %v1010 = vpack.c.b16 %v863, %v856
      %v1011 = vpack.c.b16 %v864, %v857
      %v1012 = vpack.c.b16 %v865, %v858
      %v1013 = vpack.c.b16 %v866, %v859
      %v1014 = vpack.c.b16 %v867, %v860
      %v1015 = vpack.c.b16 %v868, %v861
      %v1016 = vpack.c.b16 %v876, %v869
      %v1017 = vpack.c.b16 %v877, %v870
      %v1018 = vpack.c.b16 %v878, %v871
      %v1019 = vpack.c.b16 %v879, %v872
      %v1020 = vpack.c.b16 %v880, %v873
      %v1021 = vpack.c.b16 %v881, %v874
      %v1022 = vpack.c.b16 %v882, %v875
      %v1023 = vpack.c.b16 %v890, %v883
      %v1024 = vpack.c.b16 %v891, %v884
      %v1025 = vpack.c.b16 %v892, %v885
      %v1026 = vpack.c.b16 %v893, %v886
      %v1027 = vpack.c.b16 %v894, %v887
      %v1028 = vpack.c.b16 %v895, %v888
      %v1029 = vpack.c.b16 %v896, %v889
      %v1030 = vpack.c.b16 %v904, %v897
      %v1031 = vpack.c.b16 %v905, %v898
      %v1032 = vpack.c.b16 %v906, %v899
      %v1033 = vpack.c.b16 %v907, %v900
      %v1034 = vpack.c.b16 %v908, %v901
      %v1035 = vpack.c.b16 %v909, %v902
      %v1036 = vpack.c.b16 %v910, %v903
      %v1037 = vpack.c.b16 %v918, %v911
      %v1038 = vpack.c.b16 %v919, %v912
      %v1039 = vpack.c.b16 %v920, %v913
      %v1040 = vpack.c.b16 %v921, %v914
      %v1041 = vpack.c.b16 %v922, %v915
      %v1042 = vpack.c.b16 %v923, %v916
      %v1043 = vpack.c.b16 %v924, %v917
      %v1044 = vpack.c.b16 %v932, %v925
      %v1045 = vpack.c.b16 %v933, %v926
      %v1046 = vpack.c.b16 %v934, %v927
      %v1047 = vpack.c.b16 %v935, %v928
      %v1048 = vpack.c.b16 %v936, %v929
      %v1049 = vpack.c.b16 %v937, %v930
      %v1050 = vpack.c.b16 %v938, %v931
      %v1275 = vunpack.c.l.b16 %v469
      %v1276 = vunpack.c.h.b16 %v469
      %v1277 = vunpack.c.l.b16 %v470
      %v1278 = vunpack.c.h.b16 %v470
      %v1279 = vunpack.c.l.b16 %v471
      %v1280 = vunpack.c.h.b16 %v471
      %v1281 = vunpack.c.l.b16 %v472
      %v1282 = vunpack.c.h.b16 %v472
      %v1283 = vunpack.c.l.b16 %v473
      %v1284 = vunpack.c.h.b16 %v473
      %v1285 = vunpack.c.l.b16 %v474
      %v1286 = vunpack.c.h.b16 %v474
      %v1287 = vunpack.c.l.b16 %v475
      %v1288 = vunpack.c.h.b16 %v475
      %v1289 = vunpack.c.l.b16 %v476
      %v1290 = vunpack.c.h.b16 %v476
      %v1291 = vunpack.c.l.b16 %v477
      %v1292 = vunpack.c.h.b16 %v477
      %v1293 = vunpack.c.l.b16 %v478
      %v1294 = vunpack.c.h.b16 %v478
      %v1295 = vunpack.c.l.b16 %v479
      %v1296 = vunpack.c.h.b16 %v479
      %v1297 = vunpack.c.l.b16 %v480
      %v1298 = vunpack.c.h.b16 %v480
      %v1299 = vunpack.c.l.b16 %v481
      %v1300 = vunpack.c.h.b16 %v481
      %v1301 = vunpack.c.l.b16 %v482
      %v1302 = vunpack.c.h.b16 %v482
      %v1303 = vunpack.c.l.b16 %v483
      %v1304 = vunpack.c.h.b16 %v483
      %v1305 = vunpack.c.l.b16 %v484
      %v1306 = vunpack.c.h.b16 %v484
      %v1307 = vunpack.c.l.b16 %v485
      %v1308 = vunpack.c.h.b16 %v485
      %v1309 = vunpack.c.l.b16 %v486
      %v1310 = vunpack.c.h.b16 %v486
      %v1311 = vunpack.c.l.b16 %v487
      %v1312 = vunpack.c.h.b16 %v487
      %v1313 = vunpack.c.l.b16 %v488
      %v1314 = vunpack.c.h.b16 %v488
      %v1315 = vunpack.c.l.b16 %v489
      %v1316 = vunpack.c.h.b16 %v489
      %v1317 = vunpack.c.l.b16 %v490
      %v1318 = vunpack.c.h.b16 %v490
      %v1319 = vunpack.c.l.b16 %v491
      %v1320 = vunpack.c.h.b16 %v491
      %v1321 = vunpack.c.l.b16 %v492
      %v1322 = vunpack.c.h.b16 %v492
      %v1323 = vunpack.c.l.b16 %v493
      %v1324 = vunpack.c.h.b16 %v493
      %v1325 = vunpack.c.l.b16 %v494
      %v1326 = vunpack.c.h.b16 %v494
      %v1327 = vunpack.c.l.b16 %v495
      %v1328 = vunpack.c.h.b16 %v495
      %v1329 = vunpack.c.l.b16 %v496
      %v1330 = vunpack.c.h.b16 %v496
      %v1331 = vunpack.c.l.b16 %v497
      %v1332 = vunpack.c.h.b16 %v497
      %v1333 = vunpack.c.l.b16 %v498
      %v1334 = vunpack.c.h.b16 %v498
      %v1335 = vunpack.c.l.b16 %v499
      %v1336 = vunpack.c.h.b16 %v499
      %v1337 = vunpack.c.l.b16 %v500
      %v1338 = vunpack.c.h.b16 %v500
      %v1339 = vunpack.c.l.b16 %v501
      %v1340 = vunpack.c.h.b16 %v501
      %v1341 = vunpack.c.l.b16 %v502
      %v1342 = vunpack.c.h.b16 %v502
      %v1343 = vunpack.c.l.b16 %v503
      %v1344 = vunpack.c.h.b16 %v503
      %v1345 = vunpack.c.l.b16 %v504
      %v1346 = vunpack.c.h.b16 %v504
      %v1347 = vunpack.c.l.b16 %v505
      %v1348 = vunpack.c.h.b16 %v505
      %v1349 = vunpack.c.l.b16 %v506
      %v1350 = vunpack.c.h.b16 %v506
      %v1351 = vunpack.c.l.b16 %v507
      %v1352 = vunpack.c.h.b16 %v507
      %v1353 = vunpack.c.l.b16 %v508
      %v1354 = vunpack.c.h.b16 %v508
      %v1355 = vunpack.c.l.b16 %v509
      %v1356 = vunpack.c.h.b16 %v509
      %v1357 = vunpack.c.l.b16 %v510
      %v1358 = vunpack.c.h.b16 %v510
      %v1359 = vunpack.c.l.b16 %v511
      %v1360 = vunpack.c.h.b16 %v511
      %v1361 = vunpack.c.l.b16 %v512
      %v1362 = vunpack.c.h.b16 %v512
      %v1363 = vunpack.c.l.b16 %v513
      %v1364 = vunpack.c.h.b16 %v513
      %v1365 = vunpack.c.l.b16 %v514
      %v1366 = vunpack.c.h.b16 %v514
      %v1367 = vunpack.c.l.b16 %v515
      %v1368 = vunpack.c.h.b16 %v515
      %v1369 = vunpack.c.l.b16 %v516
      %v1370 = vunpack.c.h.b16 %v516
      %v1371 = vunpack.c.l.b16 %v517
      %v1372 = vunpack.c.h.b16 %v517
      %v1373 = vunpack.c.l.b16 %v518
      %v1374 = vunpack.c.h.b16 %v518
      %v1375 = vunpack.c.l.b16 %v519
      %v1376 = vunpack.c.h.b16 %v519
      %v1377 = vunpack.c.l.b16 %v520
      %v1378 = vunpack.c.h.b16 %v520
      %v1379 = vunpack.c.l.b16 %v521
      %v1380 = vunpack.c.h.b16 %v521
      %v1381 = vunpack.c.l.b16 %v522
      %v1382 = vunpack.c.h.b16 %v522
      %v1383 = vunpack.c.l.b16 %v523
      %v1384 = vunpack.c.h.b16 %v523
      %v1385 = vunpack.c.l.b16 %v524
      %v1386 = vunpack.c.h.b16 %v524
      %v1387 = vunpack.c.l.b16 %v525
      %v1388 = vunpack.c.h.b16 %v525
      %v1389 = vunpack.c.l.b16 %v526
      %v1390 = vunpack.c.h.b16 %v526
      %v1391 = vunpack.c.l.b16 %v527
      %v1392 = vunpack.c.h.b16 %v527
      %v1393 = vunpack.c.l.b16 %v528
      %v1394 = vunpack.c.h.b16 %v528
      %v1395 = vunpack.c.l.b16 %v529
      %v1396 = vunpack.c.h.b16 %v529
      %v1397 = vunpack.c.l.b16 %v530
      %v1398 = vunpack.c.h.b16 %v530
      %v1399 = vunpack.c.l.b16 %v531
      %v1400 = vunpack.c.h.b16 %v531
      %v1401 = vunpack.c.l.b16 %v532
      %v1402 = vunpack.c.h.b16 %v532
      %v1403 = vunpack.c.l.b16 %v533
      %v1404 = vunpack.c.h.b16 %v533
      %v1405 = vunpack.c.l.b16 %v534
      %v1406 = vunpack.c.h.b16 %v534
      %v1407 = vunpack.c.l.b16 %v535
      %v1408 = vunpack.c.h.b16 %v535
      %v1409 = vunpack.c.l.b16 %v536
      %v1410 = vunpack.c.h.b16 %v536
      %v1411 = vunpack.c.l.b16 %v537
      %v1412 = vunpack.c.h.b16 %v537
      %v1413 = vunpack.c.l.b16 %v538
      %v1414 = vunpack.c.h.b16 %v538
      %v1415 = vunpack.c.l.b16 %v539
      %v1416 = vunpack.c.h.b16 %v539
      %v1417 = vunpack.c.l.b16 %v540
      %v1418 = vunpack.c.h.b16 %v540
      %v1419 = vunpack.c.l.b16 %v541
      %v1420 = vunpack.c.h.b16 %v541
      %v1421 = vunpack.c.l.b16 %v542
      %v1422 = vunpack.c.h.b16 %v542
      %v1423 = vunpack.c.l.b16 %v543
      %v1424 = vunpack.c.h.b16 %v543
      %v1425 = vunpack.c.l.b16 %v544
      %v1426 = vunpack.c.h.b16 %v544
      %v1427 = vunpack.c.l.b16 %v545
      %v1428 = vunpack.c.h.b16 %v545
      %v1429 = vunpack.c.l.b16 %v546
      %v1430 = vunpack.c.h.b16 %v546
      %v1431 = vunpack.c.l.b16 %v547
      %v1432 = vunpack.c.h.b16 %v547
      %v1433 = vunpack.c.l.b16 %v548
      %v1434 = vunpack.c.h.b16 %v548
      %v1435 = vunpack.c.l.b16 %v549
      %v1436 = vunpack.c.h.b16 %v549
      %v1437 = vunpack.c.l.b16 %v550
      %v1438 = vunpack.c.h.b16 %v550
      %v1439 = vunpack.c.l.b16 %v551
      %v1440 = vunpack.c.h.b16 %v551
      %v1441 = vunpack.c.l.b16 %v552
      %v1442 = vunpack.c.h.b16 %v552
      %v1443 = vunpack.c.l.b16 %v553
      %v1444 = vunpack.c.h.b16 %v553
      %v1445 = vunpack.c.l.b16 %v554
      %v1446 = vunpack.c.h.b16 %v554
      %v1447 = vunpack.c.l.b16 %v555
      %v1448 = vunpack.c.h.b16 %v555
      %v1449 = vunpack.c.l.b16 %v556
      %v1450 = vunpack.c.h.b16 %v556
      %v1451 = vunpack.c.l.b16 %v557
      %v1452 = vunpack.c.h.b16 %v557
      %v1453 = vunpack.c.l.b16 %v558
      %v1454 = vunpack.c.h.b16 %v558
      %v1455 = vunpack.c.l.b16 %v559
      %v1456 = vunpack.c.h.b16 %v559
      %v1457 = vunpack.c.l.b16 %v560
      %v1458 = vunpack.c.h.b16 %v560
      %v1459 = vunpack.c.l.b16 %v561
      %v1460 = vunpack.c.h.b16 %v561
      %v1461 = vunpack.c.l.b16 %v562
      %v1462 = vunpack.c.h.b16 %v562
      %v1463 = vunpack.c.l.b16 %v563
      %v1464 = vunpack.c.h.b16 %v563
      %v1465 = vunpack.c.l.b16 %v564
      %v1466 = vunpack.c.h.b16 %v564
      %v1467 = vunpack.c.l.b16 %v565
      %v1468 = vunpack.c.h.b16 %v565
      %v1469 = vunpack.c.l.b16 %v566
      %v1470 = vunpack.c.h.b16 %v566
      %v1471 = vunpack.c.l.b16 %v567
      %v1472 = vunpack.c.h.b16 %v567
      %v1473 = vunpack.c.l.b16 %v568
      %v1474 = vunpack.c.h.b16 %v568
      %v1475 = vunpack.c.l.b16 %v569
      %v1476 = vunpack.c.h.b16 %v569
      %v1477 = vunpack.c.l.b16 %v570
      %v1478 = vunpack.c.h.b16 %v570
      %v1479 = vunpack.c.l.b16 %v571
      %v1480 = vunpack.c.h.b16 %v571
      %v1481 = vunpack.c.l.b16 %v572
      %v1482 = vunpack.c.h.b16 %v572
      %v1483 = vunpack.c.l.b16 %v573
      %v1484 = vunpack.c.h.b16 %v573
      %v1485 = vunpack.c.l.b16 %v574
      %v1486 = vunpack.c.h.b16 %v574
      %v1487 = vunpack.c.l.b16 %v575
      %v1488 = vunpack.c.h.b16 %v575
      %v1489 = vunpack.c.l.b16 %v576
      %v1490 = vunpack.c.h.b16 %v576
      %v1491 = vunpack.c.l.b16 %v577
      %v1492 = vunpack.c.h.b16 %v577
      %v1493 = vunpack.c.l.b16 %v578
      %v1494 = vunpack.c.h.b16 %v578
      %v1495 = vunpack.c.l.b16 %v579
      %v1496 = vunpack.c.h.b16 %v579
      %v1497 = vunpack.c.l.b16 %v580
      %v1498 = vunpack.c.h.b16 %v580
      %v1499 = vpack.c.b16 %v1277, %v1275
      %v1500 = vpack.c.b16 %v1278, %v1276
      %v1501 = vpack.c.b16 %v1281, %v1279
      %v1502 = vpack.c.b16 %v1282, %v1280
      %v1503 = vpack.c.b16 %v1285, %v1283
      %v1504 = vpack.c.b16 %v1286, %v1284
      %v1505 = vpack.c.b16 %v1289, %v1287
      %v1506 = vpack.c.b16 %v1290, %v1288
      %v1507 = vpack.c.b16 %v1293, %v1291
      %v1508 = vpack.c.b16 %v1294, %v1292
      %v1509 = vpack.c.b16 %v1297, %v1295
      %v1510 = vpack.c.b16 %v1298, %v1296
      %v1511 = vpack.c.b16 %v1301, %v1299
      %v1512 = vpack.c.b16 %v1302, %v1300
      %v1513 = vpack.c.b16 %v1305, %v1303
      %v1514 = vpack.c.b16 %v1306, %v1304
      %v1515 = vpack.c.b16 %v1309, %v1307
      %v1516 = vpack.c.b16 %v1310, %v1308
      %v1517 = vpack.c.b16 %v1313, %v1311
      %v1518 = vpack.c.b16 %v1314, %v1312
      %v1519 = vpack.c.b16 %v1317, %v1315
      %v1520 = vpack.c.b16 %v1318, %v1316
      %v1521 = vpack.c.b16 %v1321, %v1319
      %v1522 = vpack.c.b16 %v1322, %v1320
      %v1523 = vpack.c.b16 %v1325, %v1323
      %v1524 = vpack.c.b16 %v1326, %v1324
      %v1525 = vpack.c.b16 %v1329, %v1327
      %v1526 = vpack.c.b16 %v1330, %v1328
      %v1527 = vpack.c.b16 %v1333, %v1331
      %v1528 = vpack.c.b16 %v1334, %v1332
      %v1529 = vpack.c.b16 %v1337, %v1335
      %v1530 = vpack.c.b16 %v1338, %v1336
      %v1531 = vpack.c.b16 %v1341, %v1339
      %v1532 = vpack.c.b16 %v1342, %v1340
      %v1533 = vpack.c.b16 %v1345, %v1343
      %v1534 = vpack.c.b16 %v1346, %v1344
      %v1535 = vpack.c.b16 %v1349, %v1347
      %v1536 = vpack.c.b16 %v1350, %v1348
      %v1537 = vpack.c.b16 %v1353, %v1351
      %v1538 = vpack.c.b16 %v1354, %v1352
      %v1539 = vpack.c.b16 %v1357, %v1355
      %v1540 = vpack.c.b16 %v1358, %v1356
      %v1541 = vpack.c.b16 %v1361, %v1359
      %v1542 = vpack.c.b16 %v1362, %v1360
      %v1543 = vpack.c.b16 %v1365, %v1363
      %v1544 = vpack.c.b16 %v1366, %v1364
      %v1545 = vpack.c.b16 %v1369, %v1367
      %v1546 = vpack.c.b16 %v1370, %v1368
      %v1547 = vpack.c.b16 %v1373, %v1371
      %v1548 = vpack.c.b16 %v1374, %v1372
      %v1549 = vpack.c.b16 %v1377, %v1375
      %v1550 = vpack.c.b16 %v1378, %v1376
      %v1551 = vpack.c.b16 %v1381, %v1379
      %v1552 = vpack.c.b16 %v1382, %v1380
      %v1553 = vpack.c.b16 %v1385, %v1383
      %v1554 = vpack.c.b16 %v1386, %v1384
      %v1555 = vpack.c.b16 %v1389, %v1387
      %v1556 = vpack.c.b16 %v1390, %v1388
      %v1557 = vpack.c.b16 %v1393, %v1391
      %v1558 = vpack.c.b16 %v1394, %v1392
      %v1559 = vpack.c.b16 %v1397, %v1395
      %v1560 = vpack.c.b16 %v1398, %v1396
      %v1561 = vpack.c.b16 %v1401, %v1399
      %v1562 = vpack.c.b16 %v1402, %v1400
      %v1563 = vpack.c.b16 %v1405, %v1403
      %v1564 = vpack.c.b16 %v1406, %v1404
      %v1565 = vpack.c.b16 %v1409, %v1407
      %v1566 = vpack.c.b16 %v1410, %v1408
      %v1567 = vpack.c.b16 %v1413, %v1411
      %v1568 = vpack.c.b16 %v1414, %v1412
      %v1569 = vpack.c.b16 %v1417, %v1415
      %v1570 = vpack.c.b16 %v1418, %v1416
      %v1571 = vpack.c.b16 %v1421, %v1419
      %v1572 = vpack.c.b16 %v1422, %v1420
      %v1573 = vpack.c.b16 %v1425, %v1423
      %v1574 = vpack.c.b16 %v1426, %v1424
      %v1575 = vpack.c.b16 %v1429, %v1427
      %v1576 = vpack.c.b16 %v1430, %v1428
      %v1577 = vpack.c.b16 %v1433, %v1431
      %v1578 = vpack.c.b16 %v1434, %v1432
      %v1579 = vpack.c.b16 %v1437, %v1435
      %v1580 = vpack.c.b16 %v1438, %v1436
      %v1581 = vpack.c.b16 %v1441, %v1439
      %v1582 = vpack.c.b16 %v1442, %v1440
      %v1583 = vpack.c.b16 %v1445, %v1443
      %v1584 = vpack.c.b16 %v1446, %v1444
      %v1585 = vpack.c.b16 %v1449, %v1447
      %v1586 = vpack.c.b16 %v1450, %v1448
      %v1587 = vpack.c.b16 %v1453, %v1451
      %v1588 = vpack.c.b16 %v1454, %v1452
      %v1589 = vpack.c.b16 %v1457, %v1455
      %v1590 = vpack.c.b16 %v1458, %v1456
      %v1591 = vpack.c.b16 %v1461, %v1459
      %v1592 = vpack.c.b16 %v1462, %v1460
      %v1593 = vpack.c.b16 %v1465, %v1463
      %v1594 = vpack.c.b16 %v1466, %v1464
      %v1595 = vpack.c.b16 %v1469, %v1467
      %v1596 = vpack.c.b16 %v1470, %v1468
      %v1597 = vpack.c.b16 %v1473, %v1471
      %v1598 = vpack.c.b16 %v1474, %v1472
      %v1599 = vpack.c.b16 %v1477, %v1475
      %v1600 = vpack.c.b16 %v1478, %v1476
      %v1601 = vpack.c.b16 %v1481, %v1479
      %v1602 = vpack.c.b16 %v1482, %v1480
      %v1603 = vpack.c.b16 %v1485, %v1483
      %v1604 = vpack.c.b16 %v1486, %v1484
      %v1605 = vpack.c.b16 %v1489, %v1487
      %v1606 = vpack.c.b16 %v1490, %v1488
      %v1607 = vpack.c.b16 %v1493, %v1491
      %v1608 = vpack.c.b16 %v1494, %v1492
      %v1609 = vpack.c.b16 %v1497, %v1495
      %v1610 = vpack.c.b16 %v1498, %v1496
      %1723 = vmatpush.bf16.msra.mxu0 %v1513
      %1724 = vmatpush.bf16.msra.mxu0 %v1511
      %1725 = vmatpush.bf16.msra.mxu0 %v1509
      %1726 = vmatpush.bf16.msra.mxu0 %v1507
      %1727 = vmatpush.bf16.msra.mxu0 %v1505
      %1728 = vmatpush.bf16.msra.mxu0 %v1503
      %1729 = vmatpush.bf16.msra.mxu0 %v1501
      %1730 = vmatpush.bf16.msra.mxu0 %v1499
      %1731 = vmatmul.bf16.gmra.mxu0 %v939
      %v1732 = vpop.f32.mrf.mxu0
      %v1733 = vadd.f32 %v583, %v1732
      %v1734 = vpop.f32.mrf.mxu0
      %v1735 = vadd.f32 %v583, %v1734
      %1736 = vmatmul.bf16.gmra.mxu0 %v946
      %v1737 = vpop.f32.mrf.mxu0
      %v1738 = vadd.f32 %v583, %v1737
      %v1739 = vpop.f32.mrf.mxu0
      %v1740 = vadd.f32 %v583, %v1739
      %1741 = vmatmul.bf16.gmra.mxu0 %v953
      %v1742 = vpop.f32.mrf.mxu0
      %v1743 = vadd.f32 %v583, %v1742
      %v1744 = vpop.f32.mrf.mxu0
      %v1745 = vadd.f32 %v583, %v1744
      %1746 = vmatmul.bf16.gmra.mxu0 %v960
      %v1747 = vpop.f32.mrf.mxu0
      %v1748 = vadd.f32 %v583, %v1747
      %v1749 = vpop.f32.mrf.mxu0
      %v1750 = vadd.f32 %v583, %v1749
      %1751 = vmatmul.bf16.gmra.mxu0 %v967
      %v1752 = vpop.f32.mrf.mxu0
      %v1753 = vadd.f32 %v583, %v1752
      %v1754 = vpop.f32.mrf.mxu0
      %v1755 = vadd.f32 %v583, %v1754
      %1756 = vmatmul.bf16.gmra.mxu0 %v974
      %v1757 = vpop.f32.mrf.mxu0
      %v1758 = vadd.f32 %v583, %v1757
      %v1759 = vpop.f32.mrf.mxu0
      %v1760 = vadd.f32 %v583, %v1759
      %1761 = vmatmul.bf16.gmra.mxu0 %v981
      %v1762 = vpop.f32.mrf.mxu0
      %v1763 = vadd.f32 %v583, %v1762
      %v1764 = vpop.f32.mrf.mxu0
      %v1765 = vadd.f32 %v583, %v1764
      %1766 = vmatmul.bf16.gmra.mxu0 %v988
      %v1767 = vpop.f32.mrf.mxu0
      %v1768 = vadd.f32 %v583, %v1767
      %v1769 = vpop.f32.mrf.mxu0
      %v1770 = vadd.f32 %v583, %v1769
      %1771 = vmatmul.bf16.gmra.mxu0 %v995
      %v1772 = vpop.f32.mrf.mxu0
      %v1773 = vadd.f32 %v583, %v1772
      %v1774 = vpop.f32.mrf.mxu0
      %v1775 = vadd.f32 %v583, %v1774
      %1776 = vmatmul.bf16.gmra.mxu0 %v1002
      %v1777 = vpop.f32.mrf.mxu0
      %v1778 = vadd.f32 %v583, %v1777
      %v1779 = vpop.f32.mrf.mxu0
      %v1780 = vadd.f32 %v583, %v1779
      %1781 = vmatmul.bf16.gmra.mxu0 %v1009
      %v1782 = vpop.f32.mrf.mxu0
      %v1783 = vadd.f32 %v583, %v1782
      %v1784 = vpop.f32.mrf.mxu0
      %v1785 = vadd.f32 %v583, %v1784
      %1786 = vmatmul.bf16.gmra.mxu0 %v1016
      %v1787 = vpop.f32.mrf.mxu0
      %v1788 = vadd.f32 %v583, %v1787
      %v1789 = vpop.f32.mrf.mxu0
      %v1790 = vadd.f32 %v583, %v1789
      %1791 = vmatmul.bf16.gmra.mxu0 %v1023
      %v1792 = vpop.f32.mrf.mxu0
      %v1793 = vadd.f32 %v583, %v1792
      %v1794 = vpop.f32.mrf.mxu0
      %v1795 = vadd.f32 %v583, %v1794
      %1796 = vmatmul.bf16.gmra.mxu0 %v1030
      %v1797 = vpop.f32.mrf.mxu0
      %v1798 = vadd.f32 %v583, %v1797
      %v1799 = vpop.f32.mrf.mxu0
      %v1800 = vadd.f32 %v583, %v1799
      %1801 = vmatmul.bf16.gmra.mxu0 %v1037
      %v1802 = vpop.f32.mrf.mxu0
      %v1803 = vadd.f32 %v583, %v1802
      %v1804 = vpop.f32.mrf.mxu0
      %v1805 = vadd.f32 %v583, %v1804
      %1806 = vmatmul.bf16.gmra.mxu0 %v1044
      %v1807 = vpop.f32.mrf.mxu0
      %v1808 = vadd.f32 %v583, %v1807
      %v1809 = vpop.f32.mrf.mxu0
      %v1810 = vadd.f32 %v583, %v1809
      %1811 = vdwg.mxu0
      %1812 = vmatpush.bf16.msra.mxu0 %v1529
      %1813 = vmatpush.bf16.msra.mxu0 %v1527
      %1814 = vmatpush.bf16.msra.mxu0 %v1525
      %1815 = vmatpush.bf16.msra.mxu0 %v1523
      %1816 = vmatpush.bf16.msra.mxu0 %v1521
      %1817 = vmatpush.bf16.msra.mxu0 %v1519
      %1818 = vmatpush.bf16.msra.mxu0 %v1517
      %1819 = vmatpush.bf16.msra.mxu0 %v1515
      %1820 = vmatmul.bf16.gmra.mxu0 %v940
      %v1821 = vpop.f32.mrf.mxu0
      %v1822 = vadd.f32 %v1733, %v1821
      %v1823 = vpop.f32.mrf.mxu0
      %v1824 = vadd.f32 %v1735, %v1823
      %1825 = vmatmul.bf16.gmra.mxu0 %v947
      %v1826 = vpop.f32.mrf.mxu0
      %v1827 = vadd.f32 %v1738, %v1826
      %v1828 = vpop.f32.mrf.mxu0
      %v1829 = vadd.f32 %v1740, %v1828
      %1830 = vmatmul.bf16.gmra.mxu0 %v954
      %v1831 = vpop.f32.mrf.mxu0
      %v1832 = vadd.f32 %v1743, %v1831
      %v1833 = vpop.f32.mrf.mxu0
      %v1834 = vadd.f32 %v1745, %v1833
      %1835 = vmatmul.bf16.gmra.mxu0 %v961
      %v1836 = vpop.f32.mrf.mxu0
      %v1837 = vadd.f32 %v1748, %v1836
      %v1838 = vpop.f32.mrf.mxu0
      %v1839 = vadd.f32 %v1750, %v1838
      %1840 = vmatmul.bf16.gmra.mxu0 %v968
      %v1841 = vpop.f32.mrf.mxu0
      %v1842 = vadd.f32 %v1753, %v1841
      %v1843 = vpop.f32.mrf.mxu0
      %v1844 = vadd.f32 %v1755, %v1843
      %1845 = vmatmul.bf16.gmra.mxu0 %v975
      %v1846 = vpop.f32.mrf.mxu0
      %v1847 = vadd.f32 %v1758, %v1846
      %v1848 = vpop.f32.mrf.mxu0
      %v1849 = vadd.f32 %v1760, %v1848
      %1850 = vmatmul.bf16.gmra.mxu0 %v982
      %v1851 = vpop.f32.mrf.mxu0
      %v1852 = vadd.f32 %v1763, %v1851
      %v1853 = vpop.f32.mrf.mxu0
      %v1854 = vadd.f32 %v1765, %v1853
      %1855 = vmatmul.bf16.gmra.mxu0 %v989
      %v1856 = vpop.f32.mrf.mxu0
      %v1857 = vadd.f32 %v1768, %v1856
      %v1858 = vpop.f32.mrf.mxu0
      %v1859 = vadd.f32 %v1770, %v1858
      %1860 = vmatmul.bf16.gmra.mxu0 %v996
      %v1861 = vpop.f32.mrf.mxu0
      %v1862 = vadd.f32 %v1773, %v1861
      %v1863 = vpop.f32.mrf.mxu0
      %v1864 = vadd.f32 %v1775, %v1863
      %1865 = vmatmul.bf16.gmra.mxu0 %v1003
      %v1866 = vpop.f32.mrf.mxu0
      %v1867 = vadd.f32 %v1778, %v1866
      %v1868 = vpop.f32.mrf.mxu0
      %v1869 = vadd.f32 %v1780, %v1868
      %1870 = vmatmul.bf16.gmra.mxu0 %v1010
      %v1871 = vpop.f32.mrf.mxu0
      %v1872 = vadd.f32 %v1783, %v1871
      %v1873 = vpop.f32.mrf.mxu0
      %v1874 = vadd.f32 %v1785, %v1873
      %1875 = vmatmul.bf16.gmra.mxu0 %v1017
      %v1876 = vpop.f32.mrf.mxu0
      %v1877 = vadd.f32 %v1788, %v1876
      %v1878 = vpop.f32.mrf.mxu0
      %v1879 = vadd.f32 %v1790, %v1878
      %1880 = vmatmul.bf16.gmra.mxu0 %v1024
      %v1881 = vpop.f32.mrf.mxu0
      %v1882 = vadd.f32 %v1793, %v1881
      %v1883 = vpop.f32.mrf.mxu0
      %v1884 = vadd.f32 %v1795, %v1883
      %1885 = vmatmul.bf16.gmra.mxu0 %v1031
      %v1886 = vpop.f32.mrf.mxu0
      %v1887 = vadd.f32 %v1798, %v1886
      %v1888 = vpop.f32.mrf.mxu0
      %v1889 = vadd.f32 %v1800, %v1888
      %1890 = vmatmul.bf16.gmra.mxu0 %v1038
      %v1891 = vpop.f32.mrf.mxu0
      %v1892 = vadd.f32 %v1803, %v1891
      %v1893 = vpop.f32.mrf.mxu0
      %v1894 = vadd.f32 %v1805, %v1893
      %1895 = vmatmul.bf16.gmra.mxu0 %v1045
      %v1896 = vpop.f32.mrf.mxu0
      %v1897 = vadd.f32 %v1808, %v1896
      %v1898 = vpop.f32.mrf.mxu0
      %v1899 = vadd.f32 %v1810, %v1898
      %1900 = vdwg.mxu0
      %1901 = vmatpush.bf16.msra.mxu0 %v1545
      %1902 = vmatpush.bf16.msra.mxu0 %v1543
      %1903 = vmatpush.bf16.msra.mxu0 %v1541
      %1904 = vmatpush.bf16.msra.mxu0 %v1539
      %1905 = vmatpush.bf16.msra.mxu0 %v1537
      %1906 = vmatpush.bf16.msra.mxu0 %v1535
      %1907 = vmatpush.bf16.msra.mxu0 %v1533
      %1908 = vmatpush.bf16.msra.mxu0 %v1531
      %1909 = vmatmul.bf16.gmra.mxu0 %v941
      %v1910 = vpop.f32.mrf.mxu0
      %v1911 = vadd.f32 %v1822, %v1910
      %v1912 = vpop.f32.mrf.mxu0
      %v1913 = vadd.f32 %v1824, %v1912
      %1914 = vmatmul.bf16.gmra.mxu0 %v948
      %v1915 = vpop.f32.mrf.mxu0
      %v1916 = vadd.f32 %v1827, %v1915
      %v1917 = vpop.f32.mrf.mxu0
      %v1918 = vadd.f32 %v1829, %v1917
      %1919 = vmatmul.bf16.gmra.mxu0 %v955
      %v1920 = vpop.f32.mrf.mxu0
      %v1921 = vadd.f32 %v1832, %v1920
      %v1922 = vpop.f32.mrf.mxu0
      %v1923 = vadd.f32 %v1834, %v1922
      %1924 = vmatmul.bf16.gmra.mxu0 %v962
      %v1925 = vpop.f32.mrf.mxu0
      %v1926 = vadd.f32 %v1837, %v1925
      %v1927 = vpop.f32.mrf.mxu0
      %v1928 = vadd.f32 %v1839, %v1927
      %1929 = vmatmul.bf16.gmra.mxu0 %v969
      %v1930 = vpop.f32.mrf.mxu0
      %v1931 = vadd.f32 %v1842, %v1930
      %v1932 = vpop.f32.mrf.mxu0
      %v1933 = vadd.f32 %v1844, %v1932
      %1934 = vmatmul.bf16.gmra.mxu0 %v976
      %v1935 = vpop.f32.mrf.mxu0
      %v1936 = vadd.f32 %v1847, %v1935
      %v1937 = vpop.f32.mrf.mxu0
      %v1938 = vadd.f32 %v1849, %v1937
      %1939 = vmatmul.bf16.gmra.mxu0 %v983
      %v1940 = vpop.f32.mrf.mxu0
      %v1941 = vadd.f32 %v1852, %v1940
      %v1942 = vpop.f32.mrf.mxu0
      %v1943 = vadd.f32 %v1854, %v1942
      %1944 = vmatmul.bf16.gmra.mxu0 %v990
      %v1945 = vpop.f32.mrf.mxu0
      %v1946 = vadd.f32 %v1857, %v1945
      %v1947 = vpop.f32.mrf.mxu0
      %v1948 = vadd.f32 %v1859, %v1947
      %1949 = vmatmul.bf16.gmra.mxu0 %v997
      %v1950 = vpop.f32.mrf.mxu0
      %v1951 = vadd.f32 %v1862, %v1950
      %v1952 = vpop.f32.mrf.mxu0
      %v1953 = vadd.f32 %v1864, %v1952
      %1954 = vmatmul.bf16.gmra.mxu0 %v1004
      %v1955 = vpop.f32.mrf.mxu0
      %v1956 = vadd.f32 %v1867, %v1955
      %v1957 = vpop.f32.mrf.mxu0
      %v1958 = vadd.f32 %v1869, %v1957
      %1959 = vmatmul.bf16.gmra.mxu0 %v1011
      %v1960 = vpop.f32.mrf.mxu0
      %v1961 = vadd.f32 %v1872, %v1960
      %v1962 = vpop.f32.mrf.mxu0
      %v1963 = vadd.f32 %v1874, %v1962
      %1964 = vmatmul.bf16.gmra.mxu0 %v1018
      %v1965 = vpop.f32.mrf.mxu0
      %v1966 = vadd.f32 %v1877, %v1965
      %v1967 = vpop.f32.mrf.mxu0
      %v1968 = vadd.f32 %v1879, %v1967
      %1969 = vmatmul.bf16.gmra.mxu0 %v1025
      %v1970 = vpop.f32.mrf.mxu0
      %v1971 = vadd.f32 %v1882, %v1970
      %v1972 = vpop.f32.mrf.mxu0
      %v1973 = vadd.f32 %v1884, %v1972
      %1974 = vmatmul.bf16.gmra.mxu0 %v1032
      %v1975 = vpop.f32.mrf.mxu0
      %v1976 = vadd.f32 %v1887, %v1975
      %v1977 = vpop.f32.mrf.mxu0
      %v1978 = vadd.f32 %v1889, %v1977
      %1979 = vmatmul.bf16.gmra.mxu0 %v1039
      %v1980 = vpop.f32.mrf.mxu0
      %v1981 = vadd.f32 %v1892, %v1980
      %v1982 = vpop.f32.mrf.mxu0
      %v1983 = vadd.f32 %v1894, %v1982
      %1984 = vmatmul.bf16.gmra.mxu0 %v1046
      %v1985 = vpop.f32.mrf.mxu0
      %v1986 = vadd.f32 %v1897, %v1985
      %v1987 = vpop.f32.mrf.mxu0
      %v1988 = vadd.f32 %v1899, %v1987
      %1989 = vdwg.mxu0
      %1990 = vmatpush.bf16.msra.mxu0 %v1561
      %1991 = vmatpush.bf16.msra.mxu0 %v1559
      %1992 = vmatpush.bf16.msra.mxu0 %v1557
      %1993 = vmatpush.bf16.msra.mxu0 %v1555
      %1994 = vmatpush.bf16.msra.mxu0 %v1553
      %1995 = vmatpush.bf16.msra.mxu0 %v1551
      %1996 = vmatpush.bf16.msra.mxu0 %v1549
      %1997 = vmatpush.bf16.msra.mxu0 %v1547
      %1998 = vmatmul.bf16.gmra.mxu0 %v942
      %v1999 = vpop.f32.mrf.mxu0
      %v2000 = vadd.f32 %v1911, %v1999
      %v2001 = vpop.f32.mrf.mxu0
      %v2002 = vadd.f32 %v1913, %v2001
      %2003 = vmatmul.bf16.gmra.mxu0 %v949
      %v2004 = vpop.f32.mrf.mxu0
      %v2005 = vadd.f32 %v1916, %v2004
      %v2006 = vpop.f32.mrf.mxu0
      %v2007 = vadd.f32 %v1918, %v2006
      %2008 = vmatmul.bf16.gmra.mxu0 %v956
      %v2009 = vpop.f32.mrf.mxu0
      %v2010 = vadd.f32 %v1921, %v2009
      %v2011 = vpop.f32.mrf.mxu0
      %v2012 = vadd.f32 %v1923, %v2011
      %2013 = vmatmul.bf16.gmra.mxu0 %v963
      %v2014 = vpop.f32.mrf.mxu0
      %v2015 = vadd.f32 %v1926, %v2014
      %v2016 = vpop.f32.mrf.mxu0
      %v2017 = vadd.f32 %v1928, %v2016
      %2018 = vmatmul.bf16.gmra.mxu0 %v970
      %v2019 = vpop.f32.mrf.mxu0
      %v2020 = vadd.f32 %v1931, %v2019
      %v2021 = vpop.f32.mrf.mxu0
      %v2022 = vadd.f32 %v1933, %v2021
      %2023 = vmatmul.bf16.gmra.mxu0 %v977
      %v2024 = vpop.f32.mrf.mxu0
      %v2025 = vadd.f32 %v1936, %v2024
      %v2026 = vpop.f32.mrf.mxu0
      %v2027 = vadd.f32 %v1938, %v2026
      %2028 = vmatmul.bf16.gmra.mxu0 %v984
      %v2029 = vpop.f32.mrf.mxu0
      %v2030 = vadd.f32 %v1941, %v2029
      %v2031 = vpop.f32.mrf.mxu0
      %v2032 = vadd.f32 %v1943, %v2031
      %2033 = vmatmul.bf16.gmra.mxu0 %v991
      %v2034 = vpop.f32.mrf.mxu0
      %v2035 = vadd.f32 %v1946, %v2034
      %v2036 = vpop.f32.mrf.mxu0
      %v2037 = vadd.f32 %v1948, %v2036
      %2038 = vmatmul.bf16.gmra.mxu0 %v998
      %v2039 = vpop.f32.mrf.mxu0
      %v2040 = vadd.f32 %v1951, %v2039
      %v2041 = vpop.f32.mrf.mxu0
      %v2042 = vadd.f32 %v1953, %v2041
      %2043 = vmatmul.bf16.gmra.mxu0 %v1005
      %v2044 = vpop.f32.mrf.mxu0
      %v2045 = vadd.f32 %v1956, %v2044
      %v2046 = vpop.f32.mrf.mxu0
      %v2047 = vadd.f32 %v1958, %v2046
      %2048 = vmatmul.bf16.gmra.mxu0 %v1012
      %v2049 = vpop.f32.mrf.mxu0
      %v2050 = vadd.f32 %v1961, %v2049
      %v2051 = vpop.f32.mrf.mxu0
      %v2052 = vadd.f32 %v1963, %v2051
      %2053 = vmatmul.bf16.gmra.mxu0 %v1019
      %v2054 = vpop.f32.mrf.mxu0
      %v2055 = vadd.f32 %v1966, %v2054
      %v2056 = vpop.f32.mrf.mxu0
      %v2057 = vadd.f32 %v1968, %v2056
      %2058 = vmatmul.bf16.gmra.mxu0 %v1026
      %v2059 = vpop.f32.mrf.mxu0
      %v2060 = vadd.f32 %v1971, %v2059
      %v2061 = vpop.f32.mrf.mxu0
      %v2062 = vadd.f32 %v1973, %v2061
      %2063 = vmatmul.bf16.gmra.mxu0 %v1033
      %v2064 = vpop.f32.mrf.mxu0
      %v2065 = vadd.f32 %v1976, %v2064
      %v2066 = vpop.f32.mrf.mxu0
      %v2067 = vadd.f32 %v1978, %v2066
      %2068 = vmatmul.bf16.gmra.mxu0 %v1040
      %v2069 = vpop.f32.mrf.mxu0
      %v2070 = vadd.f32 %v1981, %v2069
      %v2071 = vpop.f32.mrf.mxu0
      %v2072 = vadd.f32 %v1983, %v2071
      %2073 = vmatmul.bf16.gmra.mxu0 %v1047
      %v2074 = vpop.f32.mrf.mxu0
      %v2075 = vadd.f32 %v1986, %v2074
      %v2076 = vpop.f32.mrf.mxu0
      %v2077 = vadd.f32 %v1988, %v2076
      %2078 = vdwg.mxu0
      %2079 = vmatpush.bf16.msra.mxu0 %v1577
      %2080 = vmatpush.bf16.msra.mxu0 %v1575
      %2081 = vmatpush.bf16.msra.mxu0 %v1573
      %2082 = vmatpush.bf16.msra.mxu0 %v1571
      %2083 = vmatpush.bf16.msra.mxu0 %v1569
      %2084 = vmatpush.bf16.msra.mxu0 %v1567
      %2085 = vmatpush.bf16.msra.mxu0 %v1565
      %2086 = vmatpush.bf16.msra.mxu0 %v1563
      %2087 = vmatmul.bf16.gmra.mxu0 %v943
      %v2088 = vpop.f32.mrf.mxu0
      %v2089 = vadd.f32 %v2000, %v2088
      %v2090 = vpop.f32.mrf.mxu0
      %v2091 = vadd.f32 %v2002, %v2090
      %2092 = vmatmul.bf16.gmra.mxu0 %v950
      %v2093 = vpop.f32.mrf.mxu0
      %v2094 = vadd.f32 %v2005, %v2093
      %v2095 = vpop.f32.mrf.mxu0
      %v2096 = vadd.f32 %v2007, %v2095
      %2097 = vmatmul.bf16.gmra.mxu0 %v957
      %v2098 = vpop.f32.mrf.mxu0
      %v2099 = vadd.f32 %v2010, %v2098
      %v2100 = vpop.f32.mrf.mxu0
      %v2101 = vadd.f32 %v2012, %v2100
      %2102 = vmatmul.bf16.gmra.mxu0 %v964
      %v2103 = vpop.f32.mrf.mxu0
      %v2104 = vadd.f32 %v2015, %v2103
      %v2105 = vpop.f32.mrf.mxu0
      %v2106 = vadd.f32 %v2017, %v2105
      %2107 = vmatmul.bf16.gmra.mxu0 %v971
      %v2108 = vpop.f32.mrf.mxu0
      %v2109 = vadd.f32 %v2020, %v2108
      %v2110 = vpop.f32.mrf.mxu0
      %v2111 = vadd.f32 %v2022, %v2110
      %2112 = vmatmul.bf16.gmra.mxu0 %v978
      %v2113 = vpop.f32.mrf.mxu0
      %v2114 = vadd.f32 %v2025, %v2113
      %v2115 = vpop.f32.mrf.mxu0
      %v2116 = vadd.f32 %v2027, %v2115
      %2117 = vmatmul.bf16.gmra.mxu0 %v985
      %v2118 = vpop.f32.mrf.mxu0
      %v2119 = vadd.f32 %v2030, %v2118
      %v2120 = vpop.f32.mrf.mxu0
      %v2121 = vadd.f32 %v2032, %v2120
      %2122 = vmatmul.bf16.gmra.mxu0 %v992
      %v2123 = vpop.f32.mrf.mxu0
      %v2124 = vadd.f32 %v2035, %v2123
      %v2125 = vpop.f32.mrf.mxu0
      %v2126 = vadd.f32 %v2037, %v2125
      %2127 = vmatmul.bf16.gmra.mxu0 %v999
      %v2128 = vpop.f32.mrf.mxu0
      %v2129 = vadd.f32 %v2040, %v2128
      %v2130 = vpop.f32.mrf.mxu0
      %v2131 = vadd.f32 %v2042, %v2130
      %2132 = vmatmul.bf16.gmra.mxu0 %v1006
      %v2133 = vpop.f32.mrf.mxu0
      %v2134 = vadd.f32 %v2045, %v2133
      %v2135 = vpop.f32.mrf.mxu0
      %v2136 = vadd.f32 %v2047, %v2135
      %2137 = vmatmul.bf16.gmra.mxu0 %v1013
      %v2138 = vpop.f32.mrf.mxu0
      %v2139 = vadd.f32 %v2050, %v2138
      %v2140 = vpop.f32.mrf.mxu0
      %v2141 = vadd.f32 %v2052, %v2140
      %2142 = vmatmul.bf16.gmra.mxu0 %v1020
      %v2143 = vpop.f32.mrf.mxu0
      %v2144 = vadd.f32 %v2055, %v2143
      %v2145 = vpop.f32.mrf.mxu0
      %v2146 = vadd.f32 %v2057, %v2145
      %2147 = vmatmul.bf16.gmra.mxu0 %v1027
      %v2148 = vpop.f32.mrf.mxu0
      %v2149 = vadd.f32 %v2060, %v2148
      %v2150 = vpop.f32.mrf.mxu0
      %v2151 = vadd.f32 %v2062, %v2150
      %2152 = vmatmul.bf16.gmra.mxu0 %v1034
      %v2153 = vpop.f32.mrf.mxu0
      %v2154 = vadd.f32 %v2065, %v2153
      %v2155 = vpop.f32.mrf.mxu0
      %v2156 = vadd.f32 %v2067, %v2155
      %2157 = vmatmul.bf16.gmra.mxu0 %v1041
      %v2158 = vpop.f32.mrf.mxu0
      %v2159 = vadd.f32 %v2070, %v2158
      %v2160 = vpop.f32.mrf.mxu0
      %v2161 = vadd.f32 %v2072, %v2160
      %2162 = vmatmul.bf16.gmra.mxu0 %v1048
      %v2163 = vpop.f32.mrf.mxu0
      %v2164 = vadd.f32 %v2075, %v2163
      %v2165 = vpop.f32.mrf.mxu0
      %v2166 = vadd.f32 %v2077, %v2165
      %2167 = vdwg.mxu0
      %2168 = vmatpush.bf16.msra.mxu0 %v1593
      %2169 = vmatpush.bf16.msra.mxu0 %v1591
      %2170 = vmatpush.bf16.msra.mxu0 %v1589
      %2171 = vmatpush.bf16.msra.mxu0 %v1587
      %2172 = vmatpush.bf16.msra.mxu0 %v1585
      %2173 = vmatpush.bf16.msra.mxu0 %v1583
      %2174 = vmatpush.bf16.msra.mxu0 %v1581
      %2175 = vmatpush.bf16.msra.mxu0 %v1579
      %2176 = vmatmul.bf16.gmra.mxu0 %v944
      %v2177 = vpop.f32.mrf.mxu0
      %v2178 = vadd.f32 %v2089, %v2177
      %v2179 = vpop.f32.mrf.mxu0
      %v2180 = vadd.f32 %v2091, %v2179
      %2181 = vmatmul.bf16.gmra.mxu0 %v951
      %v2182 = vpop.f32.mrf.mxu0
      %v2183 = vadd.f32 %v2094, %v2182
      %v2184 = vpop.f32.mrf.mxu0
      %v2185 = vadd.f32 %v2096, %v2184
      %2186 = vmatmul.bf16.gmra.mxu0 %v958
      %v2187 = vpop.f32.mrf.mxu0
      %v2188 = vadd.f32 %v2099, %v2187
      %v2189 = vpop.f32.mrf.mxu0
      %v2190 = vadd.f32 %v2101, %v2189
      %2191 = vmatmul.bf16.gmra.mxu0 %v965
      %v2192 = vpop.f32.mrf.mxu0
      %v2193 = vadd.f32 %v2104, %v2192
      %v2194 = vpop.f32.mrf.mxu0
      %v2195 = vadd.f32 %v2106, %v2194
      %2196 = vmatmul.bf16.gmra.mxu0 %v972
      %v2197 = vpop.f32.mrf.mxu0
      %v2198 = vadd.f32 %v2109, %v2197
      %v2199 = vpop.f32.mrf.mxu0
      %v2200 = vadd.f32 %v2111, %v2199
      %2201 = vmatmul.bf16.gmra.mxu0 %v979
      %v2202 = vpop.f32.mrf.mxu0
      %v2203 = vadd.f32 %v2114, %v2202
      %v2204 = vpop.f32.mrf.mxu0
      %v2205 = vadd.f32 %v2116, %v2204
      %2206 = vmatmul.bf16.gmra.mxu0 %v986
      %v2207 = vpop.f32.mrf.mxu0
      %v2208 = vadd.f32 %v2119, %v2207
      %v2209 = vpop.f32.mrf.mxu0
      %v2210 = vadd.f32 %v2121, %v2209
      %2211 = vmatmul.bf16.gmra.mxu0 %v993
      %v2212 = vpop.f32.mrf.mxu0
      %v2213 = vadd.f32 %v2124, %v2212
      %v2214 = vpop.f32.mrf.mxu0
      %v2215 = vadd.f32 %v2126, %v2214
      %2216 = vmatmul.bf16.gmra.mxu0 %v1000
      %v2217 = vpop.f32.mrf.mxu0
      %v2218 = vadd.f32 %v2129, %v2217
      %v2219 = vpop.f32.mrf.mxu0
      %v2220 = vadd.f32 %v2131, %v2219
      %2221 = vmatmul.bf16.gmra.mxu0 %v1007
      %v2222 = vpop.f32.mrf.mxu0
      %v2223 = vadd.f32 %v2134, %v2222
      %v2224 = vpop.f32.mrf.mxu0
      %v2225 = vadd.f32 %v2136, %v2224
      %2226 = vmatmul.bf16.gmra.mxu0 %v1014
      %v2227 = vpop.f32.mrf.mxu0
      %v2228 = vadd.f32 %v2139, %v2227
      %v2229 = vpop.f32.mrf.mxu0
      %v2230 = vadd.f32 %v2141, %v2229
      %2231 = vmatmul.bf16.gmra.mxu0 %v1021
      %v2232 = vpop.f32.mrf.mxu0
      %v2233 = vadd.f32 %v2144, %v2232
      %v2234 = vpop.f32.mrf.mxu0
      %v2235 = vadd.f32 %v2146, %v2234
      %2236 = vmatmul.bf16.gmra.mxu0 %v1028
      %v2237 = vpop.f32.mrf.mxu0
      %v2238 = vadd.f32 %v2149, %v2237
      %v2239 = vpop.f32.mrf.mxu0
      %v2240 = vadd.f32 %v2151, %v2239
      %2241 = vmatmul.bf16.gmra.mxu0 %v1035
      %v2242 = vpop.f32.mrf.mxu0
      %v2243 = vadd.f32 %v2154, %v2242
      %v2244 = vpop.f32.mrf.mxu0
      %v2245 = vadd.f32 %v2156, %v2244
      %2246 = vmatmul.bf16.gmra.mxu0 %v1042
      %v2247 = vpop.f32.mrf.mxu0
      %v2248 = vadd.f32 %v2159, %v2247
      %v2249 = vpop.f32.mrf.mxu0
      %v2250 = vadd.f32 %v2161, %v2249
      %2251 = vmatmul.bf16.gmra.mxu0 %v1049
      %v2252 = vpop.f32.mrf.mxu0
      %v2253 = vadd.f32 %v2164, %v2252
      %v2254 = vpop.f32.mrf.mxu0
      %v2255 = vadd.f32 %v2166, %v2254
      %2256 = vdwg.mxu0
      %2257 = vmatpush.bf16.msra.mxu0 %v1609
      %2258 = vmatpush.bf16.msra.mxu0 %v1607
      %2259 = vmatpush.bf16.msra.mxu0 %v1605
      %2260 = vmatpush.bf16.msra.mxu0 %v1603
      %2261 = vmatpush.bf16.msra.mxu0 %v1601
      %2262 = vmatpush.bf16.msra.mxu0 %v1599
      %2263 = vmatpush.bf16.msra.mxu0 %v1597
      %2264 = vmatpush.bf16.msra.mxu0 %v1595
      %2265 = vmatmul.bf16.gmra.mxu0 %v945
      %v2266 = vpop.f32.mrf.mxu0
      %v2267 = vadd.f32 %v2178, %v2266
      %v2268 = vpop.f32.mrf.mxu0
      %v2269 = vadd.f32 %v2180, %v2268
      %2270 = vmatmul.bf16.gmra.mxu0 %v952
      %v2271 = vpop.f32.mrf.mxu0
      %v2272 = vadd.f32 %v2183, %v2271
      %v2273 = vpop.f32.mrf.mxu0
      %v2274 = vadd.f32 %v2185, %v2273
      %2275 = vmatmul.bf16.gmra.mxu0 %v959
      %v2276 = vpop.f32.mrf.mxu0
      %v2277 = vadd.f32 %v2188, %v2276
      %v2278 = vpop.f32.mrf.mxu0
      %v2279 = vadd.f32 %v2190, %v2278
      %2280 = vmatmul.bf16.gmra.mxu0 %v966
      %v2281 = vpop.f32.mrf.mxu0
      %v2282 = vadd.f32 %v2193, %v2281
      %v2283 = vpop.f32.mrf.mxu0
      %v2284 = vadd.f32 %v2195, %v2283
      %2285 = vmatmul.bf16.gmra.mxu0 %v973
      %v2286 = vpop.f32.mrf.mxu0
      %v2287 = vadd.f32 %v2198, %v2286
      %v2288 = vpop.f32.mrf.mxu0
      %v2289 = vadd.f32 %v2200, %v2288
      %2290 = vmatmul.bf16.gmra.mxu0 %v980
      %v2291 = vpop.f32.mrf.mxu0
      %v2292 = vadd.f32 %v2203, %v2291
      %v2293 = vpop.f32.mrf.mxu0
      %v2294 = vadd.f32 %v2205, %v2293
      %2295 = vmatmul.bf16.gmra.mxu0 %v987
      %v2296 = vpop.f32.mrf.mxu0
      %v2297 = vadd.f32 %v2208, %v2296
      %v2298 = vpop.f32.mrf.mxu0
      %v2299 = vadd.f32 %v2210, %v2298
      %2300 = vmatmul.bf16.gmra.mxu0 %v994
      %v2301 = vpop.f32.mrf.mxu0
      %v2302 = vadd.f32 %v2213, %v2301
      %v2303 = vpop.f32.mrf.mxu0
      %v2304 = vadd.f32 %v2215, %v2303
      %2305 = vmatmul.bf16.gmra.mxu0 %v1001
      %v2306 = vpop.f32.mrf.mxu0
      %v2307 = vadd.f32 %v2218, %v2306
      %v2308 = vpop.f32.mrf.mxu0
      %v2309 = vadd.f32 %v2220, %v2308
      %2310 = vmatmul.bf16.gmra.mxu0 %v1008
      %v2311 = vpop.f32.mrf.mxu0
      %v2312 = vadd.f32 %v2223, %v2311
      %v2313 = vpop.f32.mrf.mxu0
      %v2314 = vadd.f32 %v2225, %v2313
      %2315 = vmatmul.bf16.gmra.mxu0 %v1015
      %v2316 = vpop.f32.mrf.mxu0
      %v2317 = vadd.f32 %v2228, %v2316
      %v2318 = vpop.f32.mrf.mxu0
      %v2319 = vadd.f32 %v2230, %v2318
      %2320 = vmatmul.bf16.gmra.mxu0 %v1022
      %v2321 = vpop.f32.mrf.mxu0
      %v2322 = vadd.f32 %v2233, %v2321
      %v2323 = vpop.f32.mrf.mxu0
      %v2324 = vadd.f32 %v2235, %v2323
      %2325 = vmatmul.bf16.gmra.mxu0 %v1029
      %v2326 = vpop.f32.mrf.mxu0
      %v2327 = vadd.f32 %v2238, %v2326
      %v2328 = vpop.f32.mrf.mxu0
      %v2329 = vadd.f32 %v2240, %v2328
      %2330 = vmatmul.bf16.gmra.mxu0 %v1036
      %v2331 = vpop.f32.mrf.mxu0
      %v2332 = vadd.f32 %v2243, %v2331
      %v2333 = vpop.f32.mrf.mxu0
      %v2334 = vadd.f32 %v2245, %v2333
      %2335 = vmatmul.bf16.gmra.mxu0 %v1043
      %v2336 = vpop.f32.mrf.mxu0
      %v2337 = vadd.f32 %v2248, %v2336
      %v2338 = vpop.f32.mrf.mxu0
      %v2339 = vadd.f32 %v2250, %v2338
      %2340 = vmatmul.bf16.gmra.mxu0 %v1050
      %v2341 = vpop.f32.mrf.mxu0
      %v2342 = vadd.f32 %v2253, %v2341
      %v2343 = vpop.f32.mrf.mxu0
      %v2344 = vadd.f32 %v2255, %v2343
      %2345 = vdwg.mxu0
      %2346 = vmatpush.bf16.msra.mxu0 %v1514
      %2347 = vmatpush.bf16.msra.mxu0 %v1512
      %2348 = vmatpush.bf16.msra.mxu0 %v1510
      %2349 = vmatpush.bf16.msra.mxu0 %v1508
      %2350 = vmatpush.bf16.msra.mxu0 %v1506
      %2351 = vmatpush.bf16.msra.mxu0 %v1504
      %2352 = vmatpush.bf16.msra.mxu0 %v1502
      %2353 = vmatpush.bf16.msra.mxu0 %v1500
      %2354 = vmatmul.bf16.gmra.mxu0 %v939
      %v2355 = vpop.f32.mrf.mxu0
      %v2356 = vadd.f32 %v584, %v2355
      %v2357 = vpop.f32.mrf.mxu0
      %v2358 = vadd.f32 %v584, %v2357
      %2359 = vmatmul.bf16.gmra.mxu0 %v946
      %v2360 = vpop.f32.mrf.mxu0
      %v2361 = vadd.f32 %v584, %v2360
      %v2362 = vpop.f32.mrf.mxu0
      %v2363 = vadd.f32 %v584, %v2362
      %2364 = vmatmul.bf16.gmra.mxu0 %v953
      %v2365 = vpop.f32.mrf.mxu0
      %v2366 = vadd.f32 %v584, %v2365
      %v2367 = vpop.f32.mrf.mxu0
      %v2368 = vadd.f32 %v584, %v2367
      %2369 = vmatmul.bf16.gmra.mxu0 %v960
      %v2370 = vpop.f32.mrf.mxu0
      %v2371 = vadd.f32 %v584, %v2370
      %v2372 = vpop.f32.mrf.mxu0
      %v2373 = vadd.f32 %v584, %v2372
      %2374 = vmatmul.bf16.gmra.mxu0 %v967
      %v2375 = vpop.f32.mrf.mxu0
      %v2376 = vadd.f32 %v584, %v2375
      %v2377 = vpop.f32.mrf.mxu0
      %v2378 = vadd.f32 %v584, %v2377
      %2379 = vmatmul.bf16.gmra.mxu0 %v974
      %v2380 = vpop.f32.mrf.mxu0
      %v2381 = vadd.f32 %v584, %v2380
      %v2382 = vpop.f32.mrf.mxu0
      %v2383 = vadd.f32 %v584, %v2382
      %2384 = vmatmul.bf16.gmra.mxu0 %v981
      %v2385 = vpop.f32.mrf.mxu0
      %v2386 = vadd.f32 %v584, %v2385
      %v2387 = vpop.f32.mrf.mxu0
      %v2388 = vadd.f32 %v584, %v2387
      %2389 = vmatmul.bf16.gmra.mxu0 %v988
      %v2390 = vpop.f32.mrf.mxu0
      %v2391 = vadd.f32 %v584, %v2390
      %v2392 = vpop.f32.mrf.mxu0
      %v2393 = vadd.f32 %v584, %v2392
      %2394 = vmatmul.bf16.gmra.mxu0 %v995
      %v2395 = vpop.f32.mrf.mxu0
      %v2396 = vadd.f32 %v584, %v2395
      %v2397 = vpop.f32.mrf.mxu0
      %v2398 = vadd.f32 %v584, %v2397
      %2399 = vmatmul.bf16.gmra.mxu0 %v1002
      %v2400 = vpop.f32.mrf.mxu0
      %v2401 = vadd.f32 %v584, %v2400
      %v2402 = vpop.f32.mrf.mxu0
      %v2403 = vadd.f32 %v584, %v2402
      %2404 = vmatmul.bf16.gmra.mxu0 %v1009
      %v2405 = vpop.f32.mrf.mxu0
      %v2406 = vadd.f32 %v584, %v2405
      %v2407 = vpop.f32.mrf.mxu0
      %v2408 = vadd.f32 %v584, %v2407
      %2409 = vmatmul.bf16.gmra.mxu0 %v1016
      %v2410 = vpop.f32.mrf.mxu0
      %v2411 = vadd.f32 %v584, %v2410
      %v2412 = vpop.f32.mrf.mxu0
      %v2413 = vadd.f32 %v584, %v2412
      %2414 = vmatmul.bf16.gmra.mxu0 %v1023
      %v2415 = vpop.f32.mrf.mxu0
      %v2416 = vadd.f32 %v584, %v2415
      %v2417 = vpop.f32.mrf.mxu0
      %v2418 = vadd.f32 %v584, %v2417
      %2419 = vmatmul.bf16.gmra.mxu0 %v1030
      %v2420 = vpop.f32.mrf.mxu0
      %v2421 = vadd.f32 %v584, %v2420
      %v2422 = vpop.f32.mrf.mxu0
      %v2423 = vadd.f32 %v584, %v2422
      %2424 = vmatmul.bf16.gmra.mxu0 %v1037
      %v2425 = vpop.f32.mrf.mxu0
      %v2426 = vadd.f32 %v584, %v2425
      %v2427 = vpop.f32.mrf.mxu0
      %v2428 = vadd.f32 %v584, %v2427
      %2429 = vmatmul.bf16.gmra.mxu0 %v1044
      %v2430 = vpop.f32.mrf.mxu0
      %v2431 = vadd.f32 %v584, %v2430
      %v2432 = vpop.f32.mrf.mxu0
      %v2433 = vadd.f32 %v584, %v2432
      %2434 = vdwg.mxu0
      %2435 = vmatpush.bf16.msra.mxu0 %v1530
      %2436 = vmatpush.bf16.msra.mxu0 %v1528
      %2437 = vmatpush.bf16.msra.mxu0 %v1526
      %2438 = vmatpush.bf16.msra.mxu0 %v1524
      %2439 = vmatpush.bf16.msra.mxu0 %v1522
      %2440 = vmatpush.bf16.msra.mxu0 %v1520
      %2441 = vmatpush.bf16.msra.mxu0 %v1518
      %2442 = vmatpush.bf16.msra.mxu0 %v1516
      %2443 = vmatmul.bf16.gmra.mxu0 %v940
      %v2444 = vpop.f32.mrf.mxu0
      %v2445 = vadd.f32 %v2356, %v2444
      %v2446 = vpop.f32.mrf.mxu0
      %v2447 = vadd.f32 %v2358, %v2446
      %2448 = vmatmul.bf16.gmra.mxu0 %v947
      %v2449 = vpop.f32.mrf.mxu0
      %v2450 = vadd.f32 %v2361, %v2449
      %v2451 = vpop.f32.mrf.mxu0
      %v2452 = vadd.f32 %v2363, %v2451
      %2453 = vmatmul.bf16.gmra.mxu0 %v954
      %v2454 = vpop.f32.mrf.mxu0
      %v2455 = vadd.f32 %v2366, %v2454
      %v2456 = vpop.f32.mrf.mxu0
      %v2457 = vadd.f32 %v2368, %v2456
      %2458 = vmatmul.bf16.gmra.mxu0 %v961
      %v2459 = vpop.f32.mrf.mxu0
      %v2460 = vadd.f32 %v2371, %v2459
      %v2461 = vpop.f32.mrf.mxu0
      %v2462 = vadd.f32 %v2373, %v2461
      %2463 = vmatmul.bf16.gmra.mxu0 %v968
      %v2464 = vpop.f32.mrf.mxu0
      %v2465 = vadd.f32 %v2376, %v2464
      %v2466 = vpop.f32.mrf.mxu0
      %v2467 = vadd.f32 %v2378, %v2466
      %2468 = vmatmul.bf16.gmra.mxu0 %v975
      %v2469 = vpop.f32.mrf.mxu0
      %v2470 = vadd.f32 %v2381, %v2469
      %v2471 = vpop.f32.mrf.mxu0
      %v2472 = vadd.f32 %v2383, %v2471
      %2473 = vmatmul.bf16.gmra.mxu0 %v982
      %v2474 = vpop.f32.mrf.mxu0
      %v2475 = vadd.f32 %v2386, %v2474
      %v2476 = vpop.f32.mrf.mxu0
      %v2477 = vadd.f32 %v2388, %v2476
      %2478 = vmatmul.bf16.gmra.mxu0 %v989
      %v2479 = vpop.f32.mrf.mxu0
      %v2480 = vadd.f32 %v2391, %v2479
      %v2481 = vpop.f32.mrf.mxu0
      %v2482 = vadd.f32 %v2393, %v2481
      %2483 = vmatmul.bf16.gmra.mxu0 %v996
      %v2484 = vpop.f32.mrf.mxu0
      %v2485 = vadd.f32 %v2396, %v2484
      %v2486 = vpop.f32.mrf.mxu0
      %v2487 = vadd.f32 %v2398, %v2486
      %2488 = vmatmul.bf16.gmra.mxu0 %v1003
      %v2489 = vpop.f32.mrf.mxu0
      %v2490 = vadd.f32 %v2401, %v2489
      %v2491 = vpop.f32.mrf.mxu0
      %v2492 = vadd.f32 %v2403, %v2491
      %2493 = vmatmul.bf16.gmra.mxu0 %v1010
      %v2494 = vpop.f32.mrf.mxu0
      %v2495 = vadd.f32 %v2406, %v2494
      %v2496 = vpop.f32.mrf.mxu0
      %v2497 = vadd.f32 %v2408, %v2496
      %2498 = vmatmul.bf16.gmra.mxu0 %v1017
      %v2499 = vpop.f32.mrf.mxu0
      %v2500 = vadd.f32 %v2411, %v2499
      %v2501 = vpop.f32.mrf.mxu0
      %v2502 = vadd.f32 %v2413, %v2501
      %2503 = vmatmul.bf16.gmra.mxu0 %v1024
      %v2504 = vpop.f32.mrf.mxu0
      %v2505 = vadd.f32 %v2416, %v2504
      %v2506 = vpop.f32.mrf.mxu0
      %v2507 = vadd.f32 %v2418, %v2506
      %2508 = vmatmul.bf16.gmra.mxu0 %v1031
      %v2509 = vpop.f32.mrf.mxu0
      %v2510 = vadd.f32 %v2421, %v2509
      %v2511 = vpop.f32.mrf.mxu0
      %v2512 = vadd.f32 %v2423, %v2511
      %2513 = vmatmul.bf16.gmra.mxu0 %v1038
      %v2514 = vpop.f32.mrf.mxu0
      %v2515 = vadd.f32 %v2426, %v2514
      %v2516 = vpop.f32.mrf.mxu0
      %v2517 = vadd.f32 %v2428, %v2516
      %2518 = vmatmul.bf16.gmra.mxu0 %v1045
      %v2519 = vpop.f32.mrf.mxu0
      %v2520 = vadd.f32 %v2431, %v2519
      %v2521 = vpop.f32.mrf.mxu0
      %v2522 = vadd.f32 %v2433, %v2521
      %2523 = vdwg.mxu0
      %2524 = vmatpush.bf16.msra.mxu0 %v1546
      %2525 = vmatpush.bf16.msra.mxu0 %v1544
      %2526 = vmatpush.bf16.msra.mxu0 %v1542
      %2527 = vmatpush.bf16.msra.mxu0 %v1540
      %2528 = vmatpush.bf16.msra.mxu0 %v1538
      %2529 = vmatpush.bf16.msra.mxu0 %v1536
      %2530 = vmatpush.bf16.msra.mxu0 %v1534
      %2531 = vmatpush.bf16.msra.mxu0 %v1532
      %2532 = vmatmul.bf16.gmra.mxu0 %v941
      %v2533 = vpop.f32.mrf.mxu0
      %v2534 = vadd.f32 %v2445, %v2533
      %v2535 = vpop.f32.mrf.mxu0
      %v2536 = vadd.f32 %v2447, %v2535
      %2537 = vmatmul.bf16.gmra.mxu0 %v948
      %v2538 = vpop.f32.mrf.mxu0
      %v2539 = vadd.f32 %v2450, %v2538
      %v2540 = vpop.f32.mrf.mxu0
      %v2541 = vadd.f32 %v2452, %v2540
      %2542 = vmatmul.bf16.gmra.mxu0 %v955
      %v2543 = vpop.f32.mrf.mxu0
      %v2544 = vadd.f32 %v2455, %v2543
      %v2545 = vpop.f32.mrf.mxu0
      %v2546 = vadd.f32 %v2457, %v2545
      %2547 = vmatmul.bf16.gmra.mxu0 %v962
      %v2548 = vpop.f32.mrf.mxu0
      %v2549 = vadd.f32 %v2460, %v2548
      %v2550 = vpop.f32.mrf.mxu0
      %v2551 = vadd.f32 %v2462, %v2550
      %2552 = vmatmul.bf16.gmra.mxu0 %v969
      %v2553 = vpop.f32.mrf.mxu0
      %v2554 = vadd.f32 %v2465, %v2553
      %v2555 = vpop.f32.mrf.mxu0
      %v2556 = vadd.f32 %v2467, %v2555
      %2557 = vmatmul.bf16.gmra.mxu0 %v976
      %v2558 = vpop.f32.mrf.mxu0
      %v2559 = vadd.f32 %v2470, %v2558
      %v2560 = vpop.f32.mrf.mxu0
      %v2561 = vadd.f32 %v2472, %v2560
      %2562 = vmatmul.bf16.gmra.mxu0 %v983
      %v2563 = vpop.f32.mrf.mxu0
      %v2564 = vadd.f32 %v2475, %v2563
      %v2565 = vpop.f32.mrf.mxu0
      %v2566 = vadd.f32 %v2477, %v2565
      %2567 = vmatmul.bf16.gmra.mxu0 %v990
      %v2568 = vpop.f32.mrf.mxu0
      %v2569 = vadd.f32 %v2480, %v2568
      %v2570 = vpop.f32.mrf.mxu0
      %v2571 = vadd.f32 %v2482, %v2570
      %2572 = vmatmul.bf16.gmra.mxu0 %v997
      %v2573 = vpop.f32.mrf.mxu0
      %v2574 = vadd.f32 %v2485, %v2573
      %v2575 = vpop.f32.mrf.mxu0
      %v2576 = vadd.f32 %v2487, %v2575
      %2577 = vmatmul.bf16.gmra.mxu0 %v1004
      %v2578 = vpop.f32.mrf.mxu0
      %v2579 = vadd.f32 %v2490, %v2578
      %v2580 = vpop.f32.mrf.mxu0
      %v2581 = vadd.f32 %v2492, %v2580
      %2582 = vmatmul.bf16.gmra.mxu0 %v1011
      %v2583 = vpop.f32.mrf.mxu0
      %v2584 = vadd.f32 %v2495, %v2583
      %v2585 = vpop.f32.mrf.mxu0
      %v2586 = vadd.f32 %v2497, %v2585
      %2587 = vmatmul.bf16.gmra.mxu0 %v1018
      %v2588 = vpop.f32.mrf.mxu0
      %v2589 = vadd.f32 %v2500, %v2588
      %v2590 = vpop.f32.mrf.mxu0
      %v2591 = vadd.f32 %v2502, %v2590
      %2592 = vmatmul.bf16.gmra.mxu0 %v1025
      %v2593 = vpop.f32.mrf.mxu0
      %v2594 = vadd.f32 %v2505, %v2593
      %v2595 = vpop.f32.mrf.mxu0
      %v2596 = vadd.f32 %v2507, %v2595
      %2597 = vmatmul.bf16.gmra.mxu0 %v1032
      %v2598 = vpop.f32.mrf.mxu0
      %v2599 = vadd.f32 %v2510, %v2598
      %v2600 = vpop.f32.mrf.mxu0
      %v2601 = vadd.f32 %v2512, %v2600
      %2602 = vmatmul.bf16.gmra.mxu0 %v1039
      %v2603 = vpop.f32.mrf.mxu0
      %v2604 = vadd.f32 %v2515, %v2603
      %v2605 = vpop.f32.mrf.mxu0
      %v2606 = vadd.f32 %v2517, %v2605
      %2607 = vmatmul.bf16.gmra.mxu0 %v1046
      %v2608 = vpop.f32.mrf.mxu0
      %v2609 = vadd.f32 %v2520, %v2608
      %v2610 = vpop.f32.mrf.mxu0
      %v2611 = vadd.f32 %v2522, %v2610
      %2612 = vdwg.mxu0
      %2613 = vmatpush.bf16.msra.mxu0 %v1562
      %2614 = vmatpush.bf16.msra.mxu0 %v1560
      %2615 = vmatpush.bf16.msra.mxu0 %v1558
      %2616 = vmatpush.bf16.msra.mxu0 %v1556
      %2617 = vmatpush.bf16.msra.mxu0 %v1554
      %2618 = vmatpush.bf16.msra.mxu0 %v1552
      %2619 = vmatpush.bf16.msra.mxu0 %v1550
      %2620 = vmatpush.bf16.msra.mxu0 %v1548
      %2621 = vmatmul.bf16.gmra.mxu0 %v942
      %v2622 = vpop.f32.mrf.mxu0
      %v2623 = vadd.f32 %v2534, %v2622
      %v2624 = vpop.f32.mrf.mxu0
      %v2625 = vadd.f32 %v2536, %v2624
      %2626 = vmatmul.bf16.gmra.mxu0 %v949
      %v2627 = vpop.f32.mrf.mxu0
      %v2628 = vadd.f32 %v2539, %v2627
      %v2629 = vpop.f32.mrf.mxu0
      %v2630 = vadd.f32 %v2541, %v2629
      %2631 = vmatmul.bf16.gmra.mxu0 %v956
      %v2632 = vpop.f32.mrf.mxu0
      %v2633 = vadd.f32 %v2544, %v2632
      %v2634 = vpop.f32.mrf.mxu0
      %v2635 = vadd.f32 %v2546, %v2634
      %2636 = vmatmul.bf16.gmra.mxu0 %v963
      %v2637 = vpop.f32.mrf.mxu0
      %v2638 = vadd.f32 %v2549, %v2637
      %v2639 = vpop.f32.mrf.mxu0
      %v2640 = vadd.f32 %v2551, %v2639
      %2641 = vmatmul.bf16.gmra.mxu0 %v970
      %v2642 = vpop.f32.mrf.mxu0
      %v2643 = vadd.f32 %v2554, %v2642
      %v2644 = vpop.f32.mrf.mxu0
      %v2645 = vadd.f32 %v2556, %v2644
      %2646 = vmatmul.bf16.gmra.mxu0 %v977
      %v2647 = vpop.f32.mrf.mxu0
      %v2648 = vadd.f32 %v2559, %v2647
      %v2649 = vpop.f32.mrf.mxu0
      %v2650 = vadd.f32 %v2561, %v2649
      %2651 = vmatmul.bf16.gmra.mxu0 %v984
      %v2652 = vpop.f32.mrf.mxu0
      %v2653 = vadd.f32 %v2564, %v2652
      %v2654 = vpop.f32.mrf.mxu0
      %v2655 = vadd.f32 %v2566, %v2654
      %2656 = vmatmul.bf16.gmra.mxu0 %v991
      %v2657 = vpop.f32.mrf.mxu0
      %v2658 = vadd.f32 %v2569, %v2657
      %v2659 = vpop.f32.mrf.mxu0
      %v2660 = vadd.f32 %v2571, %v2659
      %2661 = vmatmul.bf16.gmra.mxu0 %v998
      %v2662 = vpop.f32.mrf.mxu0
      %v2663 = vadd.f32 %v2574, %v2662
      %v2664 = vpop.f32.mrf.mxu0
      %v2665 = vadd.f32 %v2576, %v2664
      %2666 = vmatmul.bf16.gmra.mxu0 %v1005
      %v2667 = vpop.f32.mrf.mxu0
      %v2668 = vadd.f32 %v2579, %v2667
      %v2669 = vpop.f32.mrf.mxu0
      %v2670 = vadd.f32 %v2581, %v2669
      %2671 = vmatmul.bf16.gmra.mxu0 %v1012
      %v2672 = vpop.f32.mrf.mxu0
      %v2673 = vadd.f32 %v2584, %v2672
      %v2674 = vpop.f32.mrf.mxu0
      %v2675 = vadd.f32 %v2586, %v2674
      %2676 = vmatmul.bf16.gmra.mxu0 %v1019
      %v2677 = vpop.f32.mrf.mxu0
      %v2678 = vadd.f32 %v2589, %v2677
      %v2679 = vpop.f32.mrf.mxu0
      %v2680 = vadd.f32 %v2591, %v2679
      %2681 = vmatmul.bf16.gmra.mxu0 %v1026
      %v2682 = vpop.f32.mrf.mxu0
      %v2683 = vadd.f32 %v2594, %v2682
      %v2684 = vpop.f32.mrf.mxu0
      %v2685 = vadd.f32 %v2596, %v2684
      %2686 = vmatmul.bf16.gmra.mxu0 %v1033
      %v2687 = vpop.f32.mrf.mxu0
      %v2688 = vadd.f32 %v2599, %v2687
      %v2689 = vpop.f32.mrf.mxu0
      %v2690 = vadd.f32 %v2601, %v2689
      %2691 = vmatmul.bf16.gmra.mxu0 %v1040
      %v2692 = vpop.f32.mrf.mxu0
      %v2693 = vadd.f32 %v2604, %v2692
      %v2694 = vpop.f32.mrf.mxu0
      %v2695 = vadd.f32 %v2606, %v2694
      %2696 = vmatmul.bf16.gmra.mxu0 %v1047
      %v2697 = vpop.f32.mrf.mxu0
      %v2698 = vadd.f32 %v2609, %v2697
      %v2699 = vpop.f32.mrf.mxu0
      %v2700 = vadd.f32 %v2611, %v2699
      %2701 = vdwg.mxu0
      %2702 = vmatpush.bf16.msra.mxu0 %v1578
      %2703 = vmatpush.bf16.msra.mxu0 %v1576
      %2704 = vmatpush.bf16.msra.mxu0 %v1574
      %2705 = vmatpush.bf16.msra.mxu0 %v1572
      %2706 = vmatpush.bf16.msra.mxu0 %v1570
      %2707 = vmatpush.bf16.msra.mxu0 %v1568
      %2708 = vmatpush.bf16.msra.mxu0 %v1566
      %2709 = vmatpush.bf16.msra.mxu0 %v1564
      %2710 = vmatmul.bf16.gmra.mxu0 %v943
      %v2711 = vpop.f32.mrf.mxu0
      %v2712 = vadd.f32 %v2623, %v2711
      %v2713 = vpop.f32.mrf.mxu0
      %v2714 = vadd.f32 %v2625, %v2713
      %2715 = vmatmul.bf16.gmra.mxu0 %v950
      %v2716 = vpop.f32.mrf.mxu0
      %v2717 = vadd.f32 %v2628, %v2716
      %v2718 = vpop.f32.mrf.mxu0
      %v2719 = vadd.f32 %v2630, %v2718
      %2720 = vmatmul.bf16.gmra.mxu0 %v957
      %v2721 = vpop.f32.mrf.mxu0
      %v2722 = vadd.f32 %v2633, %v2721
      %v2723 = vpop.f32.mrf.mxu0
      %v2724 = vadd.f32 %v2635, %v2723
      %2725 = vmatmul.bf16.gmra.mxu0 %v964
      %v2726 = vpop.f32.mrf.mxu0
      %v2727 = vadd.f32 %v2638, %v2726
      %v2728 = vpop.f32.mrf.mxu0
      %v2729 = vadd.f32 %v2640, %v2728
      %2730 = vmatmul.bf16.gmra.mxu0 %v971
      %v2731 = vpop.f32.mrf.mxu0
      %v2732 = vadd.f32 %v2643, %v2731
      %v2733 = vpop.f32.mrf.mxu0
      %v2734 = vadd.f32 %v2645, %v2733
      %2735 = vmatmul.bf16.gmra.mxu0 %v978
      %v2736 = vpop.f32.mrf.mxu0
      %v2737 = vadd.f32 %v2648, %v2736
      %v2738 = vpop.f32.mrf.mxu0
      %v2739 = vadd.f32 %v2650, %v2738
      %2740 = vmatmul.bf16.gmra.mxu0 %v985
      %v2741 = vpop.f32.mrf.mxu0
      %v2742 = vadd.f32 %v2653, %v2741
      %v2743 = vpop.f32.mrf.mxu0
      %v2744 = vadd.f32 %v2655, %v2743
      %2745 = vmatmul.bf16.gmra.mxu0 %v992
      %v2746 = vpop.f32.mrf.mxu0
      %v2747 = vadd.f32 %v2658, %v2746
      %v2748 = vpop.f32.mrf.mxu0
      %v2749 = vadd.f32 %v2660, %v2748
      %2750 = vmatmul.bf16.gmra.mxu0 %v999
      %v2751 = vpop.f32.mrf.mxu0
      %v2752 = vadd.f32 %v2663, %v2751
      %v2753 = vpop.f32.mrf.mxu0
      %v2754 = vadd.f32 %v2665, %v2753
      %2755 = vmatmul.bf16.gmra.mxu0 %v1006
      %v2756 = vpop.f32.mrf.mxu0
      %v2757 = vadd.f32 %v2668, %v2756
      %v2758 = vpop.f32.mrf.mxu0
      %v2759 = vadd.f32 %v2670, %v2758
      %2760 = vmatmul.bf16.gmra.mxu0 %v1013
      %v2761 = vpop.f32.mrf.mxu0
      %v2762 = vadd.f32 %v2673, %v2761
      %v2763 = vpop.f32.mrf.mxu0
      %v2764 = vadd.f32 %v2675, %v2763
      %2765 = vmatmul.bf16.gmra.mxu0 %v1020
      %v2766 = vpop.f32.mrf.mxu0
      %v2767 = vadd.f32 %v2678, %v2766
      %v2768 = vpop.f32.mrf.mxu0
      %v2769 = vadd.f32 %v2680, %v2768
      %2770 = vmatmul.bf16.gmra.mxu0 %v1027
      %v2771 = vpop.f32.mrf.mxu0
      %v2772 = vadd.f32 %v2683, %v2771
      %v2773 = vpop.f32.mrf.mxu0
      %v2774 = vadd.f32 %v2685, %v2773
      %2775 = vmatmul.bf16.gmra.mxu0 %v1034
      %v2776 = vpop.f32.mrf.mxu0
      %v2777 = vadd.f32 %v2688, %v2776
      %v2778 = vpop.f32.mrf.mxu0
      %v2779 = vadd.f32 %v2690, %v2778
      %2780 = vmatmul.bf16.gmra.mxu0 %v1041
      %v2781 = vpop.f32.mrf.mxu0
      %v2782 = vadd.f32 %v2693, %v2781
      %v2783 = vpop.f32.mrf.mxu0
      %v2784 = vadd.f32 %v2695, %v2783
      %2785 = vmatmul.bf16.gmra.mxu0 %v1048
      %v2786 = vpop.f32.mrf.mxu0
      %v2787 = vadd.f32 %v2698, %v2786
      %v2788 = vpop.f32.mrf.mxu0
      %v2789 = vadd.f32 %v2700, %v2788
      %2790 = vdwg.mxu0
      %2791 = vmatpush.bf16.msra.mxu0 %v1594
      %2792 = vmatpush.bf16.msra.mxu0 %v1592
      %2793 = vmatpush.bf16.msra.mxu0 %v1590
      %2794 = vmatpush.bf16.msra.mxu0 %v1588
      %2795 = vmatpush.bf16.msra.mxu0 %v1586
      %2796 = vmatpush.bf16.msra.mxu0 %v1584
      %2797 = vmatpush.bf16.msra.mxu0 %v1582
      %2798 = vmatpush.bf16.msra.mxu0 %v1580
      %2799 = vmatmul.bf16.gmra.mxu0 %v944
      %v2800 = vpop.f32.mrf.mxu0
      %v2801 = vadd.f32 %v2712, %v2800
      %v2802 = vpop.f32.mrf.mxu0
      %v2803 = vadd.f32 %v2714, %v2802
      %2804 = vmatmul.bf16.gmra.mxu0 %v951
      %v2805 = vpop.f32.mrf.mxu0
      %v2806 = vadd.f32 %v2717, %v2805
      %v2807 = vpop.f32.mrf.mxu0
      %v2808 = vadd.f32 %v2719, %v2807
      %2809 = vmatmul.bf16.gmra.mxu0 %v958
      %v2810 = vpop.f32.mrf.mxu0
      %v2811 = vadd.f32 %v2722, %v2810
      %v2812 = vpop.f32.mrf.mxu0
      %v2813 = vadd.f32 %v2724, %v2812
      %2814 = vmatmul.bf16.gmra.mxu0 %v965
      %v2815 = vpop.f32.mrf.mxu0
      %v2816 = vadd.f32 %v2727, %v2815
      %v2817 = vpop.f32.mrf.mxu0
      %v2818 = vadd.f32 %v2729, %v2817
      %2819 = vmatmul.bf16.gmra.mxu0 %v972
      %v2820 = vpop.f32.mrf.mxu0
      %v2821 = vadd.f32 %v2732, %v2820
      %v2822 = vpop.f32.mrf.mxu0
      %v2823 = vadd.f32 %v2734, %v2822
      %2824 = vmatmul.bf16.gmra.mxu0 %v979
      %v2825 = vpop.f32.mrf.mxu0
      %v2826 = vadd.f32 %v2737, %v2825
      %v2827 = vpop.f32.mrf.mxu0
      %v2828 = vadd.f32 %v2739, %v2827
      %2829 = vmatmul.bf16.gmra.mxu0 %v986
      %v2830 = vpop.f32.mrf.mxu0
      %v2831 = vadd.f32 %v2742, %v2830
      %v2832 = vpop.f32.mrf.mxu0
      %v2833 = vadd.f32 %v2744, %v2832
      %2834 = vmatmul.bf16.gmra.mxu0 %v993
      %v2835 = vpop.f32.mrf.mxu0
      %v2836 = vadd.f32 %v2747, %v2835
      %v2837 = vpop.f32.mrf.mxu0
      %v2838 = vadd.f32 %v2749, %v2837
      %2839 = vmatmul.bf16.gmra.mxu0 %v1000
      %v2840 = vpop.f32.mrf.mxu0
      %v2841 = vadd.f32 %v2752, %v2840
      %v2842 = vpop.f32.mrf.mxu0
      %v2843 = vadd.f32 %v2754, %v2842
      %2844 = vmatmul.bf16.gmra.mxu0 %v1007
      %v2845 = vpop.f32.mrf.mxu0
      %v2846 = vadd.f32 %v2757, %v2845
      %v2847 = vpop.f32.mrf.mxu0
      %v2848 = vadd.f32 %v2759, %v2847
      %2849 = vmatmul.bf16.gmra.mxu0 %v1014
      %v2850 = vpop.f32.mrf.mxu0
      %v2851 = vadd.f32 %v2762, %v2850
      %v2852 = vpop.f32.mrf.mxu0
      %v2853 = vadd.f32 %v2764, %v2852
      %2854 = vmatmul.bf16.gmra.mxu0 %v1021
      %v2855 = vpop.f32.mrf.mxu0
      %v2856 = vadd.f32 %v2767, %v2855
      %v2857 = vpop.f32.mrf.mxu0
      %v2858 = vadd.f32 %v2769, %v2857
      %2859 = vmatmul.bf16.gmra.mxu0 %v1028
      %v2860 = vpop.f32.mrf.mxu0
      %v2861 = vadd.f32 %v2772, %v2860
      %v2862 = vpop.f32.mrf.mxu0
      %v2863 = vadd.f32 %v2774, %v2862
      %2864 = vmatmul.bf16.gmra.mxu0 %v1035
      %v2865 = vpop.f32.mrf.mxu0
      %v2866 = vadd.f32 %v2777, %v2865
      %v2867 = vpop.f32.mrf.mxu0
      %v2868 = vadd.f32 %v2779, %v2867
      %2869 = vmatmul.bf16.gmra.mxu0 %v1042
      %v2870 = vpop.f32.mrf.mxu0
      %v2871 = vadd.f32 %v2782, %v2870
      %v2872 = vpop.f32.mrf.mxu0
      %v2873 = vadd.f32 %v2784, %v2872
      %2874 = vmatmul.bf16.gmra.mxu0 %v1049
      %v2875 = vpop.f32.mrf.mxu0
      %v2876 = vadd.f32 %v2787, %v2875
      %v2877 = vpop.f32.mrf.mxu0
      %v2878 = vadd.f32 %v2789, %v2877
      %2879 = vdwg.mxu0
      %2880 = vmatpush.bf16.msra.mxu0 %v1610
      %2881 = vmatpush.bf16.msra.mxu0 %v1608
      %2882 = vmatpush.bf16.msra.mxu0 %v1606
      %2883 = vmatpush.bf16.msra.mxu0 %v1604
      %2884 = vmatpush.bf16.msra.mxu0 %v1602
      %2885 = vmatpush.bf16.msra.mxu0 %v1600
      %2886 = vmatpush.bf16.msra.mxu0 %v1598
      %2887 = vmatpush.bf16.msra.mxu0 %v1596
      %2888 = vmatmul.bf16.gmra.mxu0 %v945
      %v2889 = vpop.f32.mrf.mxu0
      %v2890 = vadd.f32 %v2801, %v2889
      %v2891 = vpop.f32.mrf.mxu0
      %v2892 = vadd.f32 %v2803, %v2891
      %2893 = vmatmul.bf16.gmra.mxu0 %v952
      %v2894 = vpop.f32.mrf.mxu0
      %v2895 = vadd.f32 %v2806, %v2894
      %v2896 = vpop.f32.mrf.mxu0
      %v2897 = vadd.f32 %v2808, %v2896
      %2898 = vmatmul.bf16.gmra.mxu0 %v959
      %v2899 = vpop.f32.mrf.mxu0
      %v2900 = vadd.f32 %v2811, %v2899
      %v2901 = vpop.f32.mrf.mxu0
      %v2902 = vadd.f32 %v2813, %v2901
      %2903 = vmatmul.bf16.gmra.mxu0 %v966
      %v2904 = vpop.f32.mrf.mxu0
      %v2905 = vadd.f32 %v2816, %v2904
      %v2906 = vpop.f32.mrf.mxu0
      %v2907 = vadd.f32 %v2818, %v2906
      %2908 = vmatmul.bf16.gmra.mxu0 %v973
      %v2909 = vpop.f32.mrf.mxu0
      %v2910 = vadd.f32 %v2821, %v2909
      %v2911 = vpop.f32.mrf.mxu0
      %v2912 = vadd.f32 %v2823, %v2911
      %2913 = vmatmul.bf16.gmra.mxu0 %v980
      %v2914 = vpop.f32.mrf.mxu0
      %v2915 = vadd.f32 %v2826, %v2914
      %v2916 = vpop.f32.mrf.mxu0
      %v2917 = vadd.f32 %v2828, %v2916
      %2918 = vmatmul.bf16.gmra.mxu0 %v987
      %v2919 = vpop.f32.mrf.mxu0
      %v2920 = vadd.f32 %v2831, %v2919
      %v2921 = vpop.f32.mrf.mxu0
      %v2922 = vadd.f32 %v2833, %v2921
      %2923 = vmatmul.bf16.gmra.mxu0 %v994
      %v2924 = vpop.f32.mrf.mxu0
      %v2925 = vadd.f32 %v2836, %v2924
      %v2926 = vpop.f32.mrf.mxu0
      %v2927 = vadd.f32 %v2838, %v2926
      %2928 = vmatmul.bf16.gmra.mxu0 %v1001
      %v2929 = vpop.f32.mrf.mxu0
      %v2930 = vadd.f32 %v2841, %v2929
      %v2931 = vpop.f32.mrf.mxu0
      %v2932 = vadd.f32 %v2843, %v2931
      %2933 = vmatmul.bf16.gmra.mxu0 %v1008
      %v2934 = vpop.f32.mrf.mxu0
      %v2935 = vadd.f32 %v2846, %v2934
      %v2936 = vpop.f32.mrf.mxu0
      %v2937 = vadd.f32 %v2848, %v2936
      %2938 = vmatmul.bf16.gmra.mxu0 %v1015
      %v2939 = vpop.f32.mrf.mxu0
      %v2940 = vadd.f32 %v2851, %v2939
      %v2941 = vpop.f32.mrf.mxu0
      %v2942 = vadd.f32 %v2853, %v2941
      %2943 = vmatmul.bf16.gmra.mxu0 %v1022
      %v2944 = vpop.f32.mrf.mxu0
      %v2945 = vadd.f32 %v2856, %v2944
      %v2946 = vpop.f32.mrf.mxu0
      %v2947 = vadd.f32 %v2858, %v2946
      %2948 = vmatmul.bf16.gmra.mxu0 %v1029
      %v2949 = vpop.f32.mrf.mxu0
      %v2950 = vadd.f32 %v2861, %v2949
      %v2951 = vpop.f32.mrf.mxu0
      %v2952 = vadd.f32 %v2863, %v2951
      %2953 = vmatmul.bf16.gmra.mxu0 %v1036
      %v2954 = vpop.f32.mrf.mxu0
      %v2955 = vadd.f32 %v2866, %v2954
      %v2956 = vpop.f32.mrf.mxu0
      %v2957 = vadd.f32 %v2868, %v2956
      %2958 = vmatmul.bf16.gmra.mxu0 %v1043
      %v2959 = vpop.f32.mrf.mxu0
      %v2960 = vadd.f32 %v2871, %v2959
      %v2961 = vpop.f32.mrf.mxu0
      %v2962 = vadd.f32 %v2873, %v2961
      %2963 = vmatmul.bf16.gmra.mxu0 %v1050
      %v2964 = vpop.f32.mrf.mxu0
      %v2965 = vadd.f32 %v2876, %v2964
      %v2966 = vpop.f32.mrf.mxu0
      %v2967 = vadd.f32 %v2878, %v2966
      %2968 = vdwg.mxu0
      %v2969 = vmul.f32 %v2267, 0.2
      %v2970 = vmul.f32 %v2890, 0.2
      %v2971 = vmul.f32 %v2269, 0.2
      %v2972 = vmul.f32 %v2892, 0.2
      %v2973 = vmul.f32 %v2272, 0.2
      %v2974 = vmul.f32 %v2895, 0.2
      %v2975 = vmul.f32 %v2274, 0.2
      %v2976 = vmul.f32 %v2897, 0.2
      %v2977 = vmul.f32 %v2277, 0.2
      %v2978 = vmul.f32 %v2900, 0.2
      %v2979 = vmul.f32 %v2279, 0.2
      %v2980 = vmul.f32 %v2902, 0.2
      %v2981 = vmul.f32 %v2282, 0.2
      %v2982 = vmul.f32 %v2905, 0.2
      %v2983 = vmul.f32 %v2284, 0.2
      %v2984 = vmul.f32 %v2907, 0.2
      %v2985 = vmul.f32 %v2287, 0.2
      %v2986 = vmul.f32 %v2910, 0.2
      %v2987 = vmul.f32 %v2289, 0.2
      %v2988 = vmul.f32 %v2912, 0.2
      %v2989 = vmul.f32 %v2292, 0.2
      %v2990 = vmul.f32 %v2915, 0.2
      %v2991 = vmul.f32 %v2294, 0.2
      %v2992 = vmul.f32 %v2917, 0.2
      %v2993 = vmul.f32 %v2297, 0.2
      %v2994 = vmul.f32 %v2920, 0.2
      %v2995 = vmul.f32 %v2299, 0.2
      %v2996 = vmul.f32 %v2922, 0.2
      %v2997 = vmul.f32 %v2302, 0.2
      %v2998 = vmul.f32 %v2925, 0.2
      %v2999 = vmul.f32 %v2304, 0.2
      %v3000 = vmul.f32 %v2927, 0.2
      %v3001 = vmul.f32 %v2307, 0.2
      %v3002 = vmul.f32 %v2930, 0.2
      %v3003 = vmul.f32 %v2309, 0.2
      %v3004 = vmul.f32 %v2932, 0.2
      %v3005 = vmul.f32 %v2312, 0.2
      %v3006 = vmul.f32 %v2935, 0.2
      %v3007 = vmul.f32 %v2314, 0.2
      %v3008 = vmul.f32 %v2937, 0.2
      %v3009 = vmul.f32 %v2317, 0.2
      %v3010 = vmul.f32 %v2940, 0.2
      %v3011 = vmul.f32 %v2319, 0.2
      %v3012 = vmul.f32 %v2942, 0.2
      %v3013 = vmul.f32 %v2322, 0.2
      %v3014 = vmul.f32 %v2945, 0.2
      %v3015 = vmul.f32 %v2324, 0.2
      %v3016 = vmul.f32 %v2947, 0.2
      %v3017 = vmul.f32 %v2327, 0.2
      %v3018 = vmul.f32 %v2950, 0.2
      %v3019 = vmul.f32 %v2329, 0.2
      %v3020 = vmul.f32 %v2952, 0.2
      %v3021 = vmul.f32 %v2332, 0.2
      %v3022 = vmul.f32 %v2955, 0.2
      %v3023 = vmul.f32 %v2334, 0.2
      %v3024 = vmul.f32 %v2957, 0.2
      %v3025 = vmul.f32 %v2337, 0.2
      %v3026 = vmul.f32 %v2960, 0.2
      %v3027 = vmul.f32 %v2339, 0.2
      %v3028 = vmul.f32 %v2962, 0.2
      %v3029 = vmul.f32 %v2342, 0.2
      %v3030 = vmul.f32 %v2965, 0.2
      %v3031 = vmul.f32 %v2344, 0.2
      %v3032 = vmul.f32 %v2967, 0.2
      %v3033 = vmax.f32 %v2267, %v2969
      %v3034 = vmax.f32 %v2890, %v2970
      %v3035 = vmax.f32 %v2269, %v2971
      %v3036 = vmax.f32 %v2892, %v2972
      %v3037 = vmax.f32 %v2272, %v2973
      %v3038 = vmax.f32 %v2895, %v2974
      %v3039 = vmax.f32 %v2274, %v2975
      %v3040 = vmax.f32 %v2897, %v2976
      %v3041 = vmax.f32 %v2277, %v2977
      %v3042 = vmax.f32 %v2900, %v2978
      %v3043 = vmax.f32 %v2279, %v2979
      %v3044 = vmax.f32 %v2902, %v2980
      %v3045 = vmax.f32 %v2282, %v2981
      %v3046 = vmax.f32 %v2905, %v2982
      %v3047 = vmax.f32 %v2284, %v2983
      %v3048 = vmax.f32 %v2907, %v2984
      %v3049 = vmax.f32 %v2287, %v2985
      %v3050 = vmax.f32 %v2910, %v2986
      %v3051 = vmax.f32 %v2289, %v2987
      %v3052 = vmax.f32 %v2912, %v2988
      %v3053 = vmax.f32 %v2292, %v2989
      %v3054 = vmax.f32 %v2915, %v2990
      %v3055 = vmax.f32 %v2294, %v2991
      %v3056 = vmax.f32 %v2917, %v2992
      %v3057 = vmax.f32 %v2297, %v2993
      %v3058 = vmax.f32 %v2920, %v2994
      %v3059 = vmax.f32 %v2299, %v2995
      %v3060 = vmax.f32 %v2922, %v2996
      %v3061 = vmax.f32 %v2302, %v2997
      %v3062 = vmax.f32 %v2925, %v2998
      %v3063 = vmax.f32 %v2304, %v2999
      %v3064 = vmax.f32 %v2927, %v3000
      %v3065 = vmax.f32 %v2307, %v3001
      %v3066 = vmax.f32 %v2930, %v3002
      %v3067 = vmax.f32 %v2309, %v3003
      %v3068 = vmax.f32 %v2932, %v3004
      %v3069 = vmax.f32 %v2312, %v3005
      %v3070 = vmax.f32 %v2935, %v3006
      %v3071 = vmax.f32 %v2314, %v3007
      %v3072 = vmax.f32 %v2937, %v3008
      %v3073 = vmax.f32 %v2317, %v3009
      %v3074 = vmax.f32 %v2940, %v3010
      %v3075 = vmax.f32 %v2319, %v3011
      %v3076 = vmax.f32 %v2942, %v3012
      %v3077 = vmax.f32 %v2322, %v3013
      %v3078 = vmax.f32 %v2945, %v3014
      %v3079 = vmax.f32 %v2324, %v3015
      %v3080 = vmax.f32 %v2947, %v3016
      %v3081 = vmax.f32 %v2327, %v3017
      %v3082 = vmax.f32 %v2950, %v3018
      %v3083 = vmax.f32 %v2329, %v3019
      %v3084 = vmax.f32 %v2952, %v3020
      %v3085 = vmax.f32 %v2332, %v3021
      %v3086 = vmax.f32 %v2955, %v3022
      %v3087 = vmax.f32 %v2334, %v3023
      %v3088 = vmax.f32 %v2957, %v3024
      %v3089 = vmax.f32 %v2337, %v3025
      %v3090 = vmax.f32 %v2960, %v3026
      %v3091 = vmax.f32 %v2339, %v3027
      %v3092 = vmax.f32 %v2962, %v3028
      %v3093 = vmax.f32 %v2342, %v3029
      %v3094 = vmax.f32 %v2965, %v3030
      %v3095 = vmax.f32 %v2344, %v3031
      %v3096 = vmax.f32 %v2967, %v3032
      %v3097 = vpack.c.bf16 %v3035, %v3033
      %v3098 = vpack.c.bf16 %v3036, %v3034
      %v3099 = vpack.c.bf16 %v3039, %v3037
      %v3100 = vpack.c.bf16 %v3040, %v3038
      %v3101 = vpack.c.bf16 %v3043, %v3041
      %v3102 = vpack.c.bf16 %v3044, %v3042
      %v3103 = vpack.c.bf16 %v3047, %v3045
      %v3104 = vpack.c.bf16 %v3048, %v3046
      %v3105 = vpack.c.bf16 %v3051, %v3049
      %v3106 = vpack.c.bf16 %v3052, %v3050
      %v3107 = vpack.c.bf16 %v3055, %v3053
      %v3108 = vpack.c.bf16 %v3056, %v3054
      %v3109 = vpack.c.bf16 %v3059, %v3057
      %v3110 = vpack.c.bf16 %v3060, %v3058
      %v3111 = vpack.c.bf16 %v3063, %v3061
      %v3112 = vpack.c.bf16 %v3064, %v3062
      %v3113 = vpack.c.bf16 %v3067, %v3065
      %v3114 = vpack.c.bf16 %v3068, %v3066
      %v3115 = vpack.c.bf16 %v3071, %v3069
      %v3116 = vpack.c.bf16 %v3072, %v3070
      %v3117 = vpack.c.bf16 %v3075, %v3073
      %v3118 = vpack.c.bf16 %v3076, %v3074
      %v3119 = vpack.c.bf16 %v3079, %v3077
      %v3120 = vpack.c.bf16 %v3080, %v3078
      %v3121 = vpack.c.bf16 %v3083, %v3081
      %v3122 = vpack.c.bf16 %v3084, %v3082
      %v3123 = vpack.c.bf16 %v3087, %v3085
      %v3124 = vpack.c.bf16 %v3088, %v3086
      %v3125 = vpack.c.bf16 %v3091, %v3089
      %v3126 = vpack.c.bf16 %v3092, %v3090
      %v3127 = vpack.c.bf16 %v3095, %v3093
      %v3128 = vpack.c.bf16 %v3096, %v3094
      %v3129 = vld [vmem:[%s3] sm:$0xf]
      %v3130 = vld [vmem:[%s3 + $0x4] sm:$0xf]
      %v3131 = vld [vmem:[%s3 + $0x8] sm:$0xf]
      %v3132 = vld [vmem:[%s3 + $0xc] sm:$0xf]
      %v3133 = vld [vmem:[%s3 + $0x10] sm:$0xf]
      %v3134 = vld [vmem:[%s3 + $0x14] sm:$0xf]
      %v3135 = vld [vmem:[%s3 + $0x18] sm:$0xf]
      %v3136 = vld [vmem:[%s3 + $0x1c] sm:$0xf]
      %v3137 = vld [vmem:[%s3 + $0x20] sm:$0xf]
      %v3138 = vld [vmem:[%s3 + $0x24] sm:$0xf]
      %v3139 = vld [vmem:[%s3 + $0x28] sm:$0xf]
      %v3140 = vld [vmem:[%s3 + $0x2c] sm:$0xf]
      %v3141 = vld [vmem:[%s3 + $0x30] sm:$0xf]
      %v3142 = vld [vmem:[%s3 + $0x34] sm:$0xf]
      %v3143 = vld [vmem:[%s3 + $0x38] sm:$0xf]
      %v3144 = vld [vmem:[%s3 + $0x3c] sm:$0xf]
      %v3145 = vld [vmem:[%s3 + $0x40] sm:$0xf]
      %v3146 = vld [vmem:[%s3 + $0x44] sm:$0xf]
      %v3147 = vld [vmem:[%s3 + $0x48] sm:$0xf]
      %v3148 = vld [vmem:[%s3 + $0x4c] sm:$0xf]
      %v3149 = vld [vmem:[%s3 + $0x50] sm:$0xf]
      %v3150 = vld [vmem:[%s3 + $0x54] sm:$0xf]
      %v3151 = vld [vmem:[%s3 + $0x58] sm:$0xf]
      %v3152 = vld [vmem:[%s3 + $0x5c] sm:$0xf]
      %v3153 = vld [vmem:[%s3 + $0x60] sm:$0xf]
      %v3154 = vld [vmem:[%s3 + $0x64] sm:$0xf]
      %v3155 = vld [vmem:[%s3 + $0x68] sm:$0xf]
      %v3156 = vld [vmem:[%s3 + $0x6c] sm:$0xf]
      %v3157 = vld [vmem:[%s3 + $0x70] sm:$0xf]
      %v3158 = vld [vmem:[%s3 + $0x74] sm:$0xf]
      %v3159 = vld [vmem:[%s3 + $0x78] sm:$0xf]
      %v3160 = vld [vmem:[%s3 + $0x7c] sm:$0xf]
      %v3161 = vld [vmem:[%s4] sm:$0x1]
      %v3163 = vperm.slane %v3161, 0
      %v3197 = vunpack.c.l.b16 %v3129
      %v3198 = vunpack.c.l.b16 %v3130
      %v3199 = vunpack.c.l.b16 %v3131
      %v3200 = vunpack.c.l.b16 %v3132
      %v3201 = vunpack.c.l.b16 %v3133
      %v3202 = vunpack.c.l.b16 %v3134
      %v3203 = vunpack.c.l.b16 %v3135
      %v3204 = vunpack.c.l.b16 %v3136
      %v3205 = vunpack.c.l.b16 %v3137
      %v3206 = vunpack.c.l.b16 %v3138
      %v3207 = vunpack.c.l.b16 %v3139
      %v3208 = vunpack.c.l.b16 %v3140
      %v3209 = vunpack.c.l.b16 %v3141
      %v3210 = vunpack.c.l.b16 %v3142
      %v3211 = vunpack.c.l.b16 %v3143
      %v3212 = vunpack.c.l.b16 %v3144
      %v3213 = vunpack.c.l.b16 %v3145
      %v3214 = vunpack.c.l.b16 %v3146
      %v3215 = vunpack.c.l.b16 %v3147
      %v3216 = vunpack.c.l.b16 %v3148
      %v3217 = vunpack.c.l.b16 %v3149
      %v3218 = vunpack.c.l.b16 %v3150
      %v3219 = vunpack.c.l.b16 %v3151
      %v3220 = vunpack.c.l.b16 %v3152
      %v3221 = vunpack.c.l.b16 %v3153
      %v3222 = vunpack.c.l.b16 %v3154
      %v3223 = vunpack.c.l.b16 %v3155
      %v3224 = vunpack.c.l.b16 %v3156
      %v3225 = vunpack.c.l.b16 %v3157
      %v3226 = vunpack.c.l.b16 %v3158
      %v3227 = vunpack.c.l.b16 %v3159
      %v3228 = vunpack.c.l.b16 %v3160
      %v3229 = vpack.c.b16 %v3198, %v3197
      %v3230 = vpack.c.b16 %v3200, %v3199
      %v3231 = vpack.c.b16 %v3202, %v3201
      %v3232 = vpack.c.b16 %v3204, %v3203
      %v3233 = vpack.c.b16 %v3206, %v3205
      %v3234 = vpack.c.b16 %v3208, %v3207
      %v3235 = vpack.c.b16 %v3210, %v3209
      %v3236 = vpack.c.b16 %v3212, %v3211
      %v3237 = vpack.c.b16 %v3214, %v3213
      %v3238 = vpack.c.b16 %v3216, %v3215
      %v3239 = vpack.c.b16 %v3218, %v3217
      %v3240 = vpack.c.b16 %v3220, %v3219
      %v3241 = vpack.c.b16 %v3222, %v3221
      %v3242 = vpack.c.b16 %v3224, %v3223
      %v3243 = vpack.c.b16 %v3226, %v3225
      %v3244 = vpack.c.b16 %v3228, %v3227
      %3261 = vmatpush.bf16.msra.mxu0 %v3236
      %3262 = vmatpush.bf16.msra.mxu0 %v3235
      %3263 = vmatpush.bf16.msra.mxu0 %v3234
      %3264 = vmatpush.bf16.msra.mxu0 %v3233
      %3265 = vmatpush.bf16.msra.mxu0 %v3232
      %3266 = vmatpush.bf16.msra.mxu0 %v3231
      %3267 = vmatpush.bf16.msra.mxu0 %v3230
      %3268 = vmatpush.bf16.msra.mxu0 %v3229
      %3269 = vmatmul.bf16.gmra.mxu0 %v3097
      %v3270 = vpop.f32.mrf.mxu0
      %v3271 = vadd.f32 %v3163, %v3270
      %v3272 = vpop.f32.mrf.mxu0
      %v3273 = vadd.f32 %v3163, %v3272
      %3274 = vmatmul.bf16.gmra.mxu0 %v3099
      %v3275 = vpop.f32.mrf.mxu0
      %v3276 = vadd.f32 %v3163, %v3275
      %v3277 = vpop.f32.mrf.mxu0
      %v3278 = vadd.f32 %v3163, %v3277
      %3279 = vmatmul.bf16.gmra.mxu0 %v3101
      %v3280 = vpop.f32.mrf.mxu0
      %v3281 = vadd.f32 %v3163, %v3280
      %v3282 = vpop.f32.mrf.mxu0
      %v3283 = vadd.f32 %v3163, %v3282
      %3284 = vmatmul.bf16.gmra.mxu0 %v3103
      %v3285 = vpop.f32.mrf.mxu0
      %v3286 = vadd.f32 %v3163, %v3285
      %v3287 = vpop.f32.mrf.mxu0
      %v3288 = vadd.f32 %v3163, %v3287
      %3289 = vmatmul.bf16.gmra.mxu0 %v3105
      %v3290 = vpop.f32.mrf.mxu0
      %v3291 = vadd.f32 %v3163, %v3290
      %v3292 = vpop.f32.mrf.mxu0
      %v3293 = vadd.f32 %v3163, %v3292
      %3294 = vmatmul.bf16.gmra.mxu0 %v3107
      %v3295 = vpop.f32.mrf.mxu0
      %v3296 = vadd.f32 %v3163, %v3295
      %v3297 = vpop.f32.mrf.mxu0
      %v3298 = vadd.f32 %v3163, %v3297
      %3299 = vmatmul.bf16.gmra.mxu0 %v3109
      %v3300 = vpop.f32.mrf.mxu0
      %v3301 = vadd.f32 %v3163, %v3300
      %v3302 = vpop.f32.mrf.mxu0
      %v3303 = vadd.f32 %v3163, %v3302
      %3304 = vmatmul.bf16.gmra.mxu0 %v3111
      %v3305 = vpop.f32.mrf.mxu0
      %v3306 = vadd.f32 %v3163, %v3305
      %v3307 = vpop.f32.mrf.mxu0
      %v3308 = vadd.f32 %v3163, %v3307
      %3309 = vmatmul.bf16.gmra.mxu0 %v3113
      %v3310 = vpop.f32.mrf.mxu0
      %v3311 = vadd.f32 %v3163, %v3310
      %v3312 = vpop.f32.mrf.mxu0
      %v3313 = vadd.f32 %v3163, %v3312
      %3314 = vmatmul.bf16.gmra.mxu0 %v3115
      %v3315 = vpop.f32.mrf.mxu0
      %v3316 = vadd.f32 %v3163, %v3315
      %v3317 = vpop.f32.mrf.mxu0
      %v3318 = vadd.f32 %v3163, %v3317
      %3319 = vmatmul.bf16.gmra.mxu0 %v3117
      %v3320 = vpop.f32.mrf.mxu0
      %v3321 = vadd.f32 %v3163, %v3320
      %v3322 = vpop.f32.mrf.mxu0
      %v3323 = vadd.f32 %v3163, %v3322
      %3324 = vmatmul.bf16.gmra.mxu0 %v3119
      %v3325 = vpop.f32.mrf.mxu0
      %v3326 = vadd.f32 %v3163, %v3325
      %v3327 = vpop.f32.mrf.mxu0
      %v3328 = vadd.f32 %v3163, %v3327
      %3329 = vmatmul.bf16.gmra.mxu0 %v3121
      %v3330 = vpop.f32.mrf.mxu0
      %v3331 = vadd.f32 %v3163, %v3330
      %v3332 = vpop.f32.mrf.mxu0
      %v3333 = vadd.f32 %v3163, %v3332
      %3334 = vmatmul.bf16.gmra.mxu0 %v3123
      %v3335 = vpop.f32.mrf.mxu0
      %v3336 = vadd.f32 %v3163, %v3335
      %v3337 = vpop.f32.mrf.mxu0
      %v3338 = vadd.f32 %v3163, %v3337
      %3339 = vmatmul.bf16.gmra.mxu0 %v3125
      %v3340 = vpop.f32.mrf.mxu0
      %v3341 = vadd.f32 %v3163, %v3340
      %v3342 = vpop.f32.mrf.mxu0
      %v3343 = vadd.f32 %v3163, %v3342
      %3344 = vmatmul.bf16.gmra.mxu0 %v3127
      %v3345 = vpop.f32.mrf.mxu0
      %v3346 = vadd.f32 %v3163, %v3345
      %v3347 = vpop.f32.mrf.mxu0
      %v3348 = vadd.f32 %v3163, %v3347
      %3349 = vdwg.mxu0
      %3350 = vmatpush.bf16.msra.mxu0 %v3244
      %3351 = vmatpush.bf16.msra.mxu0 %v3243
      %3352 = vmatpush.bf16.msra.mxu0 %v3242
      %3353 = vmatpush.bf16.msra.mxu0 %v3241
      %3354 = vmatpush.bf16.msra.mxu0 %v3240
      %3355 = vmatpush.bf16.msra.mxu0 %v3239
      %3356 = vmatpush.bf16.msra.mxu0 %v3238
      %3357 = vmatpush.bf16.msra.mxu0 %v3237
      %3358 = vmatmul.bf16.gmra.mxu0 %v3098
      %v3359 = vpop.f32.mrf.mxu0
      %v3360 = vadd.f32 %v3271, %v3359
      %v3361 = vpop.f32.mrf.mxu0
      %v3362 = vadd.f32 %v3273, %v3361
      %3363 = vmatmul.bf16.gmra.mxu0 %v3100
      %v3364 = vpop.f32.mrf.mxu0
      %v3365 = vadd.f32 %v3276, %v3364
      %v3366 = vpop.f32.mrf.mxu0
      %v3367 = vadd.f32 %v3278, %v3366
      %3368 = vmatmul.bf16.gmra.mxu0 %v3102
      %v3369 = vpop.f32.mrf.mxu0
      %v3370 = vadd.f32 %v3281, %v3369
      %v3371 = vpop.f32.mrf.mxu0
      %v3372 = vadd.f32 %v3283, %v3371
      %3373 = vmatmul.bf16.gmra.mxu0 %v3104
      %v3374 = vpop.f32.mrf.mxu0
      %v3375 = vadd.f32 %v3286, %v3374
      %v3376 = vpop.f32.mrf.mxu0
      %v3377 = vadd.f32 %v3288, %v3376
      %3378 = vmatmul.bf16.gmra.mxu0 %v3106
      %v3379 = vpop.f32.mrf.mxu0
      %v3380 = vadd.f32 %v3291, %v3379
      %v3381 = vpop.f32.mrf.mxu0
      %v3382 = vadd.f32 %v3293, %v3381
      %3383 = vmatmul.bf16.gmra.mxu0 %v3108
      %v3384 = vpop.f32.mrf.mxu0
      %v3385 = vadd.f32 %v3296, %v3384
      %v3386 = vpop.f32.mrf.mxu0
      %v3387 = vadd.f32 %v3298, %v3386
      %3388 = vmatmul.bf16.gmra.mxu0 %v3110
      %v3389 = vpop.f32.mrf.mxu0
      %v3390 = vadd.f32 %v3301, %v3389
      %v3391 = vpop.f32.mrf.mxu0
      %v3392 = vadd.f32 %v3303, %v3391
      %3393 = vmatmul.bf16.gmra.mxu0 %v3112
      %v3394 = vpop.f32.mrf.mxu0
      %v3395 = vadd.f32 %v3306, %v3394
      %v3396 = vpop.f32.mrf.mxu0
      %v3397 = vadd.f32 %v3308, %v3396
      %3398 = vmatmul.bf16.gmra.mxu0 %v3114
      %v3399 = vpop.f32.mrf.mxu0
      %v3400 = vadd.f32 %v3311, %v3399
      %v3401 = vpop.f32.mrf.mxu0
      %v3402 = vadd.f32 %v3313, %v3401
      %3403 = vmatmul.bf16.gmra.mxu0 %v3116
      %v3404 = vpop.f32.mrf.mxu0
      %v3405 = vadd.f32 %v3316, %v3404
      %v3406 = vpop.f32.mrf.mxu0
      %v3407 = vadd.f32 %v3318, %v3406
      %3408 = vmatmul.bf16.gmra.mxu0 %v3118
      %v3409 = vpop.f32.mrf.mxu0
      %v3410 = vadd.f32 %v3321, %v3409
      %v3411 = vpop.f32.mrf.mxu0
      %v3412 = vadd.f32 %v3323, %v3411
      %3413 = vmatmul.bf16.gmra.mxu0 %v3120
      %v3414 = vpop.f32.mrf.mxu0
      %v3415 = vadd.f32 %v3326, %v3414
      %v3416 = vpop.f32.mrf.mxu0
      %v3417 = vadd.f32 %v3328, %v3416
      %3418 = vmatmul.bf16.gmra.mxu0 %v3122
      %v3419 = vpop.f32.mrf.mxu0
      %v3420 = vadd.f32 %v3331, %v3419
      %v3421 = vpop.f32.mrf.mxu0
      %v3422 = vadd.f32 %v3333, %v3421
      %3423 = vmatmul.bf16.gmra.mxu0 %v3124
      %v3424 = vpop.f32.mrf.mxu0
      %v3425 = vadd.f32 %v3336, %v3424
      %v3426 = vpop.f32.mrf.mxu0
      %v3427 = vadd.f32 %v3338, %v3426
      %3428 = vmatmul.bf16.gmra.mxu0 %v3126
      %v3429 = vpop.f32.mrf.mxu0
      %v3430 = vadd.f32 %v3341, %v3429
      %v3431 = vpop.f32.mrf.mxu0
      %v3432 = vadd.f32 %v3343, %v3431
      %3433 = vmatmul.bf16.gmra.mxu0 %v3128
      %v3434 = vpop.f32.mrf.mxu0
      %v3435 = vadd.f32 %v3346, %v3434
      %v3436 = vpop.f32.mrf.mxu0
      %v3437 = vadd.f32 %v3348, %v3436
      %3438 = vdwg.mxu0
      %v3439 = vrot.slane %v3360, 4
      %v3440 = vadd.f32 %v3360, %v3439
      %v3441 = vrot.slane %v3440, 2
      %v3442 = vadd.f32 %v3440, %v3441
      %v3443 = vrot.slane %v3442, 1
      %v3444 = vadd.f32 %v3442, %v3443
      %v3445 = vrot.slane %v3362, 4
      %v3446 = vadd.f32 %v3362, %v3445
      %v3447 = vrot.slane %v3446, 2
      %v3448 = vadd.f32 %v3446, %v3447
      %v3449 = vrot.slane %v3448, 1
      %v3450 = vadd.f32 %v3448, %v3449
      %v3451 = vrot.slane %v3365, 4
      %v3452 = vadd.f32 %v3365, %v3451
      %v3453 = vrot.slane %v3452, 2
      %v3454 = vadd.f32 %v3452, %v3453
      %v3455 = vrot.slane %v3454, 1
      %v3456 = vadd.f32 %v3454, %v3455
      %v3457 = vrot.slane %v3367, 4
      %v3458 = vadd.f32 %v3367, %v3457
      %v3459 = vrot.slane %v3458, 2
      %v3460 = vadd.f32 %v3458, %v3459
      %v3461 = vrot.slane %v3460, 1
      %v3462 = vadd.f32 %v3460, %v3461
      %v3463 = vrot.slane %v3370, 4
      %v3464 = vadd.f32 %v3370, %v3463
      %v3465 = vrot.slane %v3464, 2
      %v3466 = vadd.f32 %v3464, %v3465
      %v3467 = vrot.slane %v3466, 1
      %v3468 = vadd.f32 %v3466, %v3467
      %v3469 = vrot.slane %v3372, 4
      %v3470 = vadd.f32 %v3372, %v3469
      %v3471 = vrot.slane %v3470, 2
      %v3472 = vadd.f32 %v3470, %v3471
      %v3473 = vrot.slane %v3472, 1
      %v3474 = vadd.f32 %v3472, %v3473
      %v3475 = vrot.slane %v3375, 4
      %v3476 = vadd.f32 %v3375, %v3475
      %v3477 = vrot.slane %v3476, 2
      %v3478 = vadd.f32 %v3476, %v3477
      %v3479 = vrot.slane %v3478, 1
      %v3480 = vadd.f32 %v3478, %v3479
      %v3481 = vrot.slane %v3377, 4
      %v3482 = vadd.f32 %v3377, %v3481
      %v3483 = vrot.slane %v3482, 2
      %v3484 = vadd.f32 %v3482, %v3483
      %v3485 = vrot.slane %v3484, 1
      %v3486 = vadd.f32 %v3484, %v3485
      %v3487 = vrot.slane %v3380, 4
      %v3488 = vadd.f32 %v3380, %v3487
      %v3489 = vrot.slane %v3488, 2
      %v3490 = vadd.f32 %v3488, %v3489
      %v3491 = vrot.slane %v3490, 1
      %v3492 = vadd.f32 %v3490, %v3491
      %v3493 = vrot.slane %v3382, 4
      %v3494 = vadd.f32 %v3382, %v3493
      %v3495 = vrot.slane %v3494, 2
      %v3496 = vadd.f32 %v3494, %v3495
      %v3497 = vrot.slane %v3496, 1
      %v3498 = vadd.f32 %v3496, %v3497
      %v3499 = vrot.slane %v3385, 4
      %v3500 = vadd.f32 %v3385, %v3499
      %v3501 = vrot.slane %v3500, 2
      %v3502 = vadd.f32 %v3500, %v3501
      %v3503 = vrot.slane %v3502, 1
      %v3504 = vadd.f32 %v3502, %v3503
      %v3505 = vrot.slane %v3387, 4
      %v3506 = vadd.f32 %v3387, %v3505
      %v3507 = vrot.slane %v3506, 2
      %v3508 = vadd.f32 %v3506, %v3507
      %v3509 = vrot.slane %v3508, 1
      %v3510 = vadd.f32 %v3508, %v3509
      %v3511 = vrot.slane %v3390, 4
      %v3512 = vadd.f32 %v3390, %v3511
      %v3513 = vrot.slane %v3512, 2
      %v3514 = vadd.f32 %v3512, %v3513
      %v3515 = vrot.slane %v3514, 1
      %v3516 = vadd.f32 %v3514, %v3515
      %v3517 = vrot.slane %v3392, 4
      %v3518 = vadd.f32 %v3392, %v3517
      %v3519 = vrot.slane %v3518, 2
      %v3520 = vadd.f32 %v3518, %v3519
      %v3521 = vrot.slane %v3520, 1
      %v3522 = vadd.f32 %v3520, %v3521
      %v3523 = vrot.slane %v3395, 4
      %v3524 = vadd.f32 %v3395, %v3523
      %v3525 = vrot.slane %v3524, 2
      %v3526 = vadd.f32 %v3524, %v3525
      %v3527 = vrot.slane %v3526, 1
      %v3528 = vadd.f32 %v3526, %v3527
      %v3529 = vrot.slane %v3397, 4
      %v3530 = vadd.f32 %v3397, %v3529
      %v3531 = vrot.slane %v3530, 2
      %v3532 = vadd.f32 %v3530, %v3531
      %v3533 = vrot.slane %v3532, 1
      %v3534 = vadd.f32 %v3532, %v3533
      %v3535 = vrot.slane %v3400, 4
      %v3536 = vadd.f32 %v3400, %v3535
      %v3537 = vrot.slane %v3536, 2
      %v3538 = vadd.f32 %v3536, %v3537
      %v3539 = vrot.slane %v3538, 1
      %v3540 = vadd.f32 %v3538, %v3539
      %v3541 = vrot.slane %v3402, 4
      %v3542 = vadd.f32 %v3402, %v3541
      %v3543 = vrot.slane %v3542, 2
      %v3544 = vadd.f32 %v3542, %v3543
      %v3545 = vrot.slane %v3544, 1
      %v3546 = vadd.f32 %v3544, %v3545
      %v3547 = vrot.slane %v3405, 4
      %v3548 = vadd.f32 %v3405, %v3547
      %v3549 = vrot.slane %v3548, 2
      %v3550 = vadd.f32 %v3548, %v3549
      %v3551 = vrot.slane %v3550, 1
      %v3552 = vadd.f32 %v3550, %v3551
      %v3553 = vrot.slane %v3407, 4
      %v3554 = vadd.f32 %v3407, %v3553
      %v3555 = vrot.slane %v3554, 2
      %v3556 = vadd.f32 %v3554, %v3555
      %v3557 = vrot.slane %v3556, 1
      %v3558 = vadd.f32 %v3556, %v3557
      %v3559 = vrot.slane %v3410, 4
      %v3560 = vadd.f32 %v3410, %v3559
      %v3561 = vrot.slane %v3560, 2
      %v3562 = vadd.f32 %v3560, %v3561
      %v3563 = vrot.slane %v3562, 1
      %v3564 = vadd.f32 %v3562, %v3563
      %v3565 = vrot.slane %v3412, 4
      %v3566 = vadd.f32 %v3412, %v3565
      %v3567 = vrot.slane %v3566, 2
      %v3568 = vadd.f32 %v3566, %v3567
      %v3569 = vrot.slane %v3568, 1
      %v3570 = vadd.f32 %v3568, %v3569
      %v3571 = vrot.slane %v3415, 4
      %v3572 = vadd.f32 %v3415, %v3571
      %v3573 = vrot.slane %v3572, 2
      %v3574 = vadd.f32 %v3572, %v3573
      %v3575 = vrot.slane %v3574, 1
      %v3576 = vadd.f32 %v3574, %v3575
      %v3577 = vrot.slane %v3417, 4
      %v3578 = vadd.f32 %v3417, %v3577
      %v3579 = vrot.slane %v3578, 2
      %v3580 = vadd.f32 %v3578, %v3579
      %v3581 = vrot.slane %v3580, 1
      %v3582 = vadd.f32 %v3580, %v3581
      %v3583 = vrot.slane %v3420, 4
      %v3584 = vadd.f32 %v3420, %v3583
      %v3585 = vrot.slane %v3584, 2
      %v3586 = vadd.f32 %v3584, %v3585
      %v3587 = vrot.slane %v3586, 1
      %v3588 = vadd.f32 %v3586, %v3587
      %v3589 = vrot.slane %v3422, 4
      %v3590 = vadd.f32 %v3422, %v3589
      %v3591 = vrot.slane %v3590, 2
      %v3592 = vadd.f32 %v3590, %v3591
      %v3593 = vrot.slane %v3592, 1
      %v3594 = vadd.f32 %v3592, %v3593
      %v3595 = vrot.slane %v3425, 4
      %v3596 = vadd.f32 %v3425, %v3595
      %v3597 = vrot.slane %v3596, 2
      %v3598 = vadd.f32 %v3596, %v3597
      %v3599 = vrot.slane %v3598, 1
      %v3600 = vadd.f32 %v3598, %v3599
      %v3601 = vrot.slane %v3427, 4
      %v3602 = vadd.f32 %v3427, %v3601
      %v3603 = vrot.slane %v3602, 2
      %v3604 = vadd.f32 %v3602, %v3603
      %v3605 = vrot.slane %v3604, 1
      %v3606 = vadd.f32 %v3604, %v3605
      %v3607 = vrot.slane %v3430, 4
      %v3608 = vadd.f32 %v3430, %v3607
      %v3609 = vrot.slane %v3608, 2
      %v3610 = vadd.f32 %v3608, %v3609
      %v3611 = vrot.slane %v3610, 1
      %v3612 = vadd.f32 %v3610, %v3611
      %v3613 = vrot.slane %v3432, 4
      %v3614 = vadd.f32 %v3432, %v3613
      %v3615 = vrot.slane %v3614, 2
      %v3616 = vadd.f32 %v3614, %v3615
      %v3617 = vrot.slane %v3616, 1
      %v3618 = vadd.f32 %v3616, %v3617
      %v3619 = vrot.slane %v3435, 4
      %v3620 = vadd.f32 %v3435, %v3619
      %v3621 = vrot.slane %v3620, 2
      %v3622 = vadd.f32 %v3620, %v3621
      %v3623 = vrot.slane %v3622, 1
      %v3624 = vadd.f32 %v3622, %v3623
      %v3625 = vrot.slane %v3437, 4
      %v3626 = vadd.f32 %v3437, %v3625
      %v3627 = vrot.slane %v3626, 2
      %v3628 = vadd.f32 %v3626, %v3627
      %v3629 = vrot.slane %v3628, 1
      %v3630 = vadd.f32 %v3628, %v3629
      %v3631 = vrcp.pop 8.0
      %v3632 = vmul.f32 8.0, %v3631
      %v3633 = vsub.f32 1.0, %v3632
      %v3634 = vmul.f32 %v3631, %v3633
      %v3635 = vadd.f32 %v3631, %v3634
      %vm3636 = vweird.f32 %v3631
      %v3637 = vsel %vm3636, %v3631, %v3635
      %v3638 = vmul.f32 %v3444, %v3637
      %v3639 = vmul.f32 %v3450, %v3637
      %v3640 = vmul.f32 %v3456, %v3637
      %v3641 = vmul.f32 %v3462, %v3637
      %v3642 = vmul.f32 %v3468, %v3637
      %v3643 = vmul.f32 %v3474, %v3637
      %v3644 = vmul.f32 %v3480, %v3637
      %v3645 = vmul.f32 %v3486, %v3637
      %v3646 = vmul.f32 %v3492, %v3637
      %v3647 = vmul.f32 %v3498, %v3637
      %v3648 = vmul.f32 %v3504, %v3637
      %v3649 = vmul.f32 %v3510, %v3637
      %v3650 = vmul.f32 %v3516, %v3637
      %v3651 = vmul.f32 %v3522, %v3637
      %v3652 = vmul.f32 %v3528, %v3637
      %v3653 = vmul.f32 %v3534, %v3637
      %v3654 = vmul.f32 %v3540, %v3637
      %v3655 = vmul.f32 %v3546, %v3637
      %v3656 = vmul.f32 %v3552, %v3637
      %v3657 = vmul.f32 %v3558, %v3637
      %v3658 = vmul.f32 %v3564, %v3637
      %v3659 = vmul.f32 %v3570, %v3637
      %v3660 = vmul.f32 %v3576, %v3637
      %v3661 = vmul.f32 %v3582, %v3637
      %v3662 = vmul.f32 %v3588, %v3637
      %v3663 = vmul.f32 %v3594, %v3637
      %v3664 = vmul.f32 %v3600, %v3637
      %v3665 = vmul.f32 %v3606, %v3637
      %v3666 = vmul.f32 %v3612, %v3637
      %v3667 = vmul.f32 %v3618, %v3637
      %v3668 = vmul.f32 %v3624, %v3637
      %v3669 = vmul.f32 %v3630, %v3637
      %v3670 = vsub.f32 %v3360, %v3638
      %v3671 = vsub.f32 %v3362, %v3639
      %v3672 = vsub.f32 %v3365, %v3640
      %v3673 = vsub.f32 %v3367, %v3641
      %v3674 = vsub.f32 %v3370, %v3642
      %v3675 = vsub.f32 %v3372, %v3643
      %v3676 = vsub.f32 %v3375, %v3644
      %v3677 = vsub.f32 %v3377, %v3645
      %v3678 = vsub.f32 %v3380, %v3646
      %v3679 = vsub.f32 %v3382, %v3647
      %v3680 = vsub.f32 %v3385, %v3648
      %v3681 = vsub.f32 %v3387, %v3649
      %v3682 = vsub.f32 %v3390, %v3650
      %v3683 = vsub.f32 %v3392, %v3651
      %v3684 = vsub.f32 %v3395, %v3652
      %v3685 = vsub.f32 %v3397, %v3653
      %v3686 = vsub.f32 %v3400, %v3654
      %v3687 = vsub.f32 %v3402, %v3655
      %v3688 = vsub.f32 %v3405, %v3656
      %v3689 = vsub.f32 %v3407, %v3657
      %v3690 = vsub.f32 %v3410, %v3658
      %v3691 = vsub.f32 %v3412, %v3659
      %v3692 = vsub.f32 %v3415, %v3660
      %v3693 = vsub.f32 %v3417, %v3661
      %v3694 = vsub.f32 %v3420, %v3662
      %v3695 = vsub.f32 %v3422, %v3663
      %v3696 = vsub.f32 %v3425, %v3664
      %v3697 = vsub.f32 %v3427, %v3665
      %v3698 = vsub.f32 %v3430, %v3666
      %v3699 = vsub.f32 %v3432, %v3667
      %v3700 = vsub.f32 %v3435, %v3668
      %v3701 = vsub.f32 %v3437, %v3669
      %v3702 = vmul.f32 %v3670, %v3670
      %v3703 = vmul.f32 %v3671, %v3671
      %v3704 = vmul.f32 %v3672, %v3672
      %v3705 = vmul.f32 %v3673, %v3673
      %v3706 = vmul.f32 %v3674, %v3674
      %v3707 = vmul.f32 %v3675, %v3675
      %v3708 = vmul.f32 %v3676, %v3676
      %v3709 = vmul.f32 %v3677, %v3677
      %v3710 = vmul.f32 %v3678, %v3678
      %v3711 = vmul.f32 %v3679, %v3679
      %v3712 = vmul.f32 %v3680, %v3680
      %v3713 = vmul.f32 %v3681, %v3681
      %v3714 = vmul.f32 %v3682, %v3682
      %v3715 = vmul.f32 %v3683, %v3683
      %v3716 = vmul.f32 %v3684, %v3684
      %v3717 = vmul.f32 %v3685, %v3685
      %v3718 = vmul.f32 %v3686, %v3686
      %v3719 = vmul.f32 %v3687, %v3687
      %v3720 = vmul.f32 %v3688, %v3688
      %v3721 = vmul.f32 %v3689, %v3689
      %v3722 = vmul.f32 %v3690, %v3690
      %v3723 = vmul.f32 %v3691, %v3691
      %v3724 = vmul.f32 %v3692, %v3692
      %v3725 = vmul.f32 %v3693, %v3693
      %v3726 = vmul.f32 %v3694, %v3694
      %v3727 = vmul.f32 %v3695, %v3695
      %v3728 = vmul.f32 %v3696, %v3696
      %v3729 = vmul.f32 %v3697, %v3697
      %v3730 = vmul.f32 %v3698, %v3698
      %v3731 = vmul.f32 %v3699, %v3699
      %v3732 = vmul.f32 %v3700, %v3700
      %v3733 = vmul.f32 %v3701, %v3701
      %v3734 = vrot.slane %v3702, 4
      %v3735 = vadd.f32 %v3702, %v3734
      %v3736 = vrot.slane %v3735, 2
      %v3737 = vadd.f32 %v3735, %v3736
      %v3738 = vrot.slane %v3737, 1
      %v3739 = vadd.f32 %v3737, %v3738
      %v3740 = vrot.slane %v3703, 4
      %v3741 = vadd.f32 %v3703, %v3740
      %v3742 = vrot.slane %v3741, 2
      %v3743 = vadd.f32 %v3741, %v3742
      %v3744 = vrot.slane %v3743, 1
      %v3745 = vadd.f32 %v3743, %v3744
      %v3746 = vrot.slane %v3704, 4
      %v3747 = vadd.f32 %v3704, %v3746
      %v3748 = vrot.slane %v3747, 2
      %v3749 = vadd.f32 %v3747, %v3748
      %v3750 = vrot.slane %v3749, 1
      %v3751 = vadd.f32 %v3749, %v3750
      %v3752 = vrot.slane %v3705, 4
      %v3753 = vadd.f32 %v3705, %v3752
      %v3754 = vrot.slane %v3753, 2
      %v3755 = vadd.f32 %v3753, %v3754
      %v3756 = vrot.slane %v3755, 1
      %v3757 = vadd.f32 %v3755, %v3756
      %v3758 = vrot.slane %v3706, 4
      %v3759 = vadd.f32 %v3706, %v3758
      %v3760 = vrot.slane %v3759, 2
      %v3761 = vadd.f32 %v3759, %v3760
      %v3762 = vrot.slane %v3761, 1
      %v3763 = vadd.f32 %v3761, %v3762
      %v3764 = vrot.slane %v3707, 4
      %v3765 = vadd.f32 %v3707, %v3764
      %v3766 = vrot.slane %v3765, 2
      %v3767 = vadd.f32 %v3765, %v3766
      %v3768 = vrot.slane %v3767, 1
      %v3769 = vadd.f32 %v3767, %v3768
      %v3770 = vrot.slane %v3708, 4
      %v3771 = vadd.f32 %v3708, %v3770
      %v3772 = vrot.slane %v3771, 2
      %v3773 = vadd.f32 %v3771, %v3772
      %v3774 = vrot.slane %v3773, 1
      %v3775 = vadd.f32 %v3773, %v3774
      %v3776 = vrot.slane %v3709, 4
      %v3777 = vadd.f32 %v3709, %v3776
      %v3778 = vrot.slane %v3777, 2
      %v3779 = vadd.f32 %v3777, %v3778
      %v3780 = vrot.slane %v3779, 1
      %v3781 = vadd.f32 %v3779, %v3780
      %v3782 = vrot.slane %v3710, 4
      %v3783 = vadd.f32 %v3710, %v3782
      %v3784 = vrot.slane %v3783, 2
      %v3785 = vadd.f32 %v3783, %v3784
      %v3786 = vrot.slane %v3785, 1
      %v3787 = vadd.f32 %v3785, %v3786
      %v3788 = vrot.slane %v3711, 4
      %v3789 = vadd.f32 %v3711, %v3788
      %v3790 = vrot.slane %v3789, 2
      %v3791 = vadd.f32 %v3789, %v3790
      %v3792 = vrot.slane %v3791, 1
      %v3793 = vadd.f32 %v3791, %v3792
      %v3794 = vrot.slane %v3712, 4
      %v3795 = vadd.f32 %v3712, %v3794
      %v3796 = vrot.slane %v3795, 2
      %v3797 = vadd.f32 %v3795, %v3796
      %v3798 = vrot.slane %v3797, 1
      %v3799 = vadd.f32 %v3797, %v3798
      %v3800 = vrot.slane %v3713, 4
      %v3801 = vadd.f32 %v3713, %v3800
      %v3802 = vrot.slane %v3801, 2
      %v3803 = vadd.f32 %v3801, %v3802
      %v3804 = vrot.slane %v3803, 1
      %v3805 = vadd.f32 %v3803, %v3804
      %v3806 = vrot.slane %v3714, 4
      %v3807 = vadd.f32 %v3714, %v3806
      %v3808 = vrot.slane %v3807, 2
      %v3809 = vadd.f32 %v3807, %v3808
      %v3810 = vrot.slane %v3809, 1
      %v3811 = vadd.f32 %v3809, %v3810
      %v3812 = vrot.slane %v3715, 4
      %v3813 = vadd.f32 %v3715, %v3812
      %v3814 = vrot.slane %v3813, 2
      %v3815 = vadd.f32 %v3813, %v3814
      %v3816 = vrot.slane %v3815, 1
      %v3817 = vadd.f32 %v3815, %v3816
      %v3818 = vrot.slane %v3716, 4
      %v3819 = vadd.f32 %v3716, %v3818
      %v3820 = vrot.slane %v3819, 2
      %v3821 = vadd.f32 %v3819, %v3820
      %v3822 = vrot.slane %v3821, 1
      %v3823 = vadd.f32 %v3821, %v3822
      %v3824 = vrot.slane %v3717, 4
      %v3825 = vadd.f32 %v3717, %v3824
      %v3826 = vrot.slane %v3825, 2
      %v3827 = vadd.f32 %v3825, %v3826
      %v3828 = vrot.slane %v3827, 1
      %v3829 = vadd.f32 %v3827, %v3828
      %v3830 = vrot.slane %v3718, 4
      %v3831 = vadd.f32 %v3718, %v3830
      %v3832 = vrot.slane %v3831, 2
      %v3833 = vadd.f32 %v3831, %v3832
      %v3834 = vrot.slane %v3833, 1
      %v3835 = vadd.f32 %v3833, %v3834
      %v3836 = vrot.slane %v3719, 4
      %v3837 = vadd.f32 %v3719, %v3836
      %v3838 = vrot.slane %v3837, 2
      %v3839 = vadd.f32 %v3837, %v3838
      %v3840 = vrot.slane %v3839, 1
      %v3841 = vadd.f32 %v3839, %v3840
      %v3842 = vrot.slane %v3720, 4
      %v3843 = vadd.f32 %v3720, %v3842
      %v3844 = vrot.slane %v3843, 2
      %v3845 = vadd.f32 %v3843, %v3844
      %v3846 = vrot.slane %v3845, 1
      %v3847 = vadd.f32 %v3845, %v3846
      %v3848 = vrot.slane %v3721, 4
      %v3849 = vadd.f32 %v3721, %v3848
      %v3850 = vrot.slane %v3849, 2
      %v3851 = vadd.f32 %v3849, %v3850
      %v3852 = vrot.slane %v3851, 1
      %v3853 = vadd.f32 %v3851, %v3852
      %v3854 = vrot.slane %v3722, 4
      %v3855 = vadd.f32 %v3722, %v3854
      %v3856 = vrot.slane %v3855, 2
      %v3857 = vadd.f32 %v3855, %v3856
      %v3858 = vrot.slane %v3857, 1
      %v3859 = vadd.f32 %v3857, %v3858
      %v3860 = vrot.slane %v3723, 4
      %v3861 = vadd.f32 %v3723, %v3860
      %v3862 = vrot.slane %v3861, 2
      %v3863 = vadd.f32 %v3861, %v3862
      %v3864 = vrot.slane %v3863, 1
      %v3865 = vadd.f32 %v3863, %v3864
      %v3866 = vrot.slane %v3724, 4
      %v3867 = vadd.f32 %v3724, %v3866
      %v3868 = vrot.slane %v3867, 2
      %v3869 = vadd.f32 %v3867, %v3868
      %v3870 = vrot.slane %v3869, 1
      %v3871 = vadd.f32 %v3869, %v3870
      %v3872 = vrot.slane %v3725, 4
      %v3873 = vadd.f32 %v3725, %v3872
      %v3874 = vrot.slane %v3873, 2
      %v3875 = vadd.f32 %v3873, %v3874
      %v3876 = vrot.slane %v3875, 1
      %v3877 = vadd.f32 %v3875, %v3876
      %v3878 = vrot.slane %v3726, 4
      %v3879 = vadd.f32 %v3726, %v3878
      %v3880 = vrot.slane %v3879, 2
      %v3881 = vadd.f32 %v3879, %v3880
      %v3882 = vrot.slane %v3881, 1
      %v3883 = vadd.f32 %v3881, %v3882
      %v3884 = vrot.slane %v3727, 4
      %v3885 = vadd.f32 %v3727, %v3884
      %v3886 = vrot.slane %v3885, 2
      %v3887 = vadd.f32 %v3885, %v3886
      %v3888 = vrot.slane %v3887, 1
      %v3889 = vadd.f32 %v3887, %v3888
      %v3890 = vrot.slane %v3728, 4
      %v3891 = vadd.f32 %v3728, %v3890
      %v3892 = vrot.slane %v3891, 2
      %v3893 = vadd.f32 %v3891, %v3892
      %v3894 = vrot.slane %v3893, 1
      %v3895 = vadd.f32 %v3893, %v3894
      %v3896 = vrot.slane %v3729, 4
      %v3897 = vadd.f32 %v3729, %v3896
      %v3898 = vrot.slane %v3897, 2
      %v3899 = vadd.f32 %v3897, %v3898
      %v3900 = vrot.slane %v3899, 1
      %v3901 = vadd.f32 %v3899, %v3900
      %v3902 = vrot.slane %v3730, 4
      %v3903 = vadd.f32 %v3730, %v3902
      %v3904 = vrot.slane %v3903, 2
      %v3905 = vadd.f32 %v3903, %v3904
      %v3906 = vrot.slane %v3905, 1
      %v3907 = vadd.f32 %v3905, %v3906
      %v3908 = vrot.slane %v3731, 4
      %v3909 = vadd.f32 %v3731, %v3908
      %v3910 = vrot.slane %v3909, 2
      %v3911 = vadd.f32 %v3909, %v3910
      %v3912 = vrot.slane %v3911, 1
      %v3913 = vadd.f32 %v3911, %v3912
      %v3914 = vrot.slane %v3732, 4
      %v3915 = vadd.f32 %v3732, %v3914
      %v3916 = vrot.slane %v3915, 2
      %v3917 = vadd.f32 %v3915, %v3916
      %v3918 = vrot.slane %v3917, 1
      %v3919 = vadd.f32 %v3917, %v3918
      %v3920 = vrot.slane %v3733, 4
      %v3921 = vadd.f32 %v3733, %v3920
      %v3922 = vrot.slane %v3921, 2
      %v3923 = vadd.f32 %v3921, %v3922
      %v3924 = vrot.slane %v3923, 1
      %v3925 = vadd.f32 %v3923, %v3924
      %v3926 = vmul.f32 %v3739, %v3637
      %v3927 = vmul.f32 %v3745, %v3637
      %v3928 = vmul.f32 %v3751, %v3637
      %v3929 = vmul.f32 %v3757, %v3637
      %v3930 = vmul.f32 %v3763, %v3637
      %v3931 = vmul.f32 %v3769, %v3637
      %v3932 = vmul.f32 %v3775, %v3637
      %v3933 = vmul.f32 %v3781, %v3637
      %v3934 = vmul.f32 %v3787, %v3637
      %v3935 = vmul.f32 %v3793, %v3637
      %v3936 = vmul.f32 %v3799, %v3637
      %v3937 = vmul.f32 %v3805, %v3637
      %v3938 = vmul.f32 %v3811, %v3637
      %v3939 = vmul.f32 %v3817, %v3637
      %v3940 = vmul.f32 %v3823, %v3637
      %v3941 = vmul.f32 %v3829, %v3637
      %v3942 = vmul.f32 %v3835, %v3637
      %v3943 = vmul.f32 %v3841, %v3637
      %v3944 = vmul.f32 %v3847, %v3637
      %v3945 = vmul.f32 %v3853, %v3637
      %v3946 = vmul.f32 %v3859, %v3637
      %v3947 = vmul.f32 %v3865, %v3637
      %v3948 = vmul.f32 %v3871, %v3637
      %v3949 = vmul.f32 %v3877, %v3637
      %v3950 = vmul.f32 %v3883, %v3637
      %v3951 = vmul.f32 %v3889, %v3637
      %v3952 = vmul.f32 %v3895, %v3637
      %v3953 = vmul.f32 %v3901, %v3637
      %v3954 = vmul.f32 %v3907, %v3637
      %v3955 = vmul.f32 %v3913, %v3637
      %v3956 = vmul.f32 %v3919, %v3637
      %v3957 = vmul.f32 %v3925, %v3637
      %v3958 = vadd.f32 %v3926, 1e-05
      %v3959 = vadd.f32 %v3927, 1e-05
      %v3960 = vadd.f32 %v3928, 1e-05
      %v3961 = vadd.f32 %v3929, 1e-05
      %v3962 = vadd.f32 %v3930, 1e-05
      %v3963 = vadd.f32 %v3931, 1e-05
      %v3964 = vadd.f32 %v3932, 1e-05
      %v3965 = vadd.f32 %v3933, 1e-05
      %v3966 = vadd.f32 %v3934, 1e-05
      %v3967 = vadd.f32 %v3935, 1e-05
      %v3968 = vadd.f32 %v3936, 1e-05
      %v3969 = vadd.f32 %v3937, 1e-05
      %v3970 = vadd.f32 %v3938, 1e-05
      %v3971 = vadd.f32 %v3939, 1e-05
      %v3972 = vadd.f32 %v3940, 1e-05
      %v3973 = vadd.f32 %v3941, 1e-05
      %v3974 = vadd.f32 %v3942, 1e-05
      %v3975 = vadd.f32 %v3943, 1e-05
      %v3976 = vadd.f32 %v3944, 1e-05
      %v3977 = vadd.f32 %v3945, 1e-05
      %v3978 = vadd.f32 %v3946, 1e-05
      %v3979 = vadd.f32 %v3947, 1e-05
      %v3980 = vadd.f32 %v3948, 1e-05
      %v3981 = vadd.f32 %v3949, 1e-05
      %v3982 = vadd.f32 %v3950, 1e-05
      %v3983 = vadd.f32 %v3951, 1e-05
      %v3984 = vadd.f32 %v3952, 1e-05
      %v3985 = vadd.f32 %v3953, 1e-05
      %v3986 = vadd.f32 %v3954, 1e-05
      %v3987 = vadd.f32 %v3955, 1e-05
      %v3988 = vadd.f32 %v3956, 1e-05
      %v3989 = vadd.f32 %v3957, 1e-05
      %v3990 = vrsqrt.pop %v3958
      %v3991 = vmul.f32 %v3990, %v3958
      %v3992 = vmul.f32 %v3991, %v3990
      %v3993 = vmul.f32 0.5, %v3992
      %v3994 = vsub.f32 1.5, %v3993
      %v3995 = vmul.f32 %v3990, %v3994
      %vm3996 = vweird.f32 %v3958
      %vm3997 = vweird.f32 %v3990
      %vm3998 = vmor %vm3996, %vm3997
      %v3999 = vsel %vm3998, %v3990, %v3995
      %v4000 = vrsqrt.pop %v3959
      %v4001 = vmul.f32 %v4000, %v3959
      %v4002 = vmul.f32 %v4001, %v4000
      %v4003 = vmul.f32 0.5, %v4002
      %v4004 = vsub.f32 1.5, %v4003
      %v4005 = vmul.f32 %v4000, %v4004
      %vm4006 = vweird.f32 %v3959
      %vm4007 = vweird.f32 %v4000
      %vm4008 = vmor %vm4006, %vm4007
      %v4009 = vsel %vm4008, %v4000, %v4005
      %v4010 = vrsqrt.pop %v3960
      %v4011 = vmul.f32 %v4010, %v3960
      %v4012 = vmul.f32 %v4011, %v4010
      %v4013 = vmul.f32 0.5, %v4012
      %v4014 = vsub.f32 1.5, %v4013
      %v4015 = vmul.f32 %v4010, %v4014
      %vm4016 = vweird.f32 %v3960
      %vm4017 = vweird.f32 %v4010
      %vm4018 = vmor %vm4016, %vm4017
      %v4019 = vsel %vm4018, %v4010, %v4015
      %v4020 = vrsqrt.pop %v3961
      %v4021 = vmul.f32 %v4020, %v3961
      %v4022 = vmul.f32 %v4021, %v4020
      %v4023 = vmul.f32 0.5, %v4022
      %v4024 = vsub.f32 1.5, %v4023
      %v4025 = vmul.f32 %v4020, %v4024
      %vm4026 = vweird.f32 %v3961
      %vm4027 = vweird.f32 %v4020
      %vm4028 = vmor %vm4026, %vm4027
      %v4029 = vsel %vm4028, %v4020, %v4025
      %v4030 = vrsqrt.pop %v3962
      %v4031 = vmul.f32 %v4030, %v3962
      %v4032 = vmul.f32 %v4031, %v4030
      %v4033 = vmul.f32 0.5, %v4032
      %v4034 = vsub.f32 1.5, %v4033
      %v4035 = vmul.f32 %v4030, %v4034
      %vm4036 = vweird.f32 %v3962
      %vm4037 = vweird.f32 %v4030
      %vm4038 = vmor %vm4036, %vm4037
      %v4039 = vsel %vm4038, %v4030, %v4035
      %v4040 = vrsqrt.pop %v3963
      %v4041 = vmul.f32 %v4040, %v3963
      %v4042 = vmul.f32 %v4041, %v4040
      %v4043 = vmul.f32 0.5, %v4042
      %v4044 = vsub.f32 1.5, %v4043
      %v4045 = vmul.f32 %v4040, %v4044
      %vm4046 = vweird.f32 %v3963
      %vm4047 = vweird.f32 %v4040
      %vm4048 = vmor %vm4046, %vm4047
      %v4049 = vsel %vm4048, %v4040, %v4045
      %v4050 = vrsqrt.pop %v3964
      %v4051 = vmul.f32 %v4050, %v3964
      %v4052 = vmul.f32 %v4051, %v4050
      %v4053 = vmul.f32 0.5, %v4052
      %v4054 = vsub.f32 1.5, %v4053
      %v4055 = vmul.f32 %v4050, %v4054
      %vm4056 = vweird.f32 %v3964
      %vm4057 = vweird.f32 %v4050
      %vm4058 = vmor %vm4056, %vm4057
      %v4059 = vsel %vm4058, %v4050, %v4055
      %v4060 = vrsqrt.pop %v3965
      %v4061 = vmul.f32 %v4060, %v3965
      %v4062 = vmul.f32 %v4061, %v4060
      %v4063 = vmul.f32 0.5, %v4062
      %v4064 = vsub.f32 1.5, %v4063
      %v4065 = vmul.f32 %v4060, %v4064
      %vm4066 = vweird.f32 %v3965
      %vm4067 = vweird.f32 %v4060
      %vm4068 = vmor %vm4066, %vm4067
      %v4069 = vsel %vm4068, %v4060, %v4065
      %v4070 = vrsqrt.pop %v3966
      %v4071 = vmul.f32 %v4070, %v3966
      %v4072 = vmul.f32 %v4071, %v4070
      %v4073 = vmul.f32 0.5, %v4072
      %v4074 = vsub.f32 1.5, %v4073
      %v4075 = vmul.f32 %v4070, %v4074
      %vm4076 = vweird.f32 %v3966
      %vm4077 = vweird.f32 %v4070
      %vm4078 = vmor %vm4076, %vm4077
      %v4079 = vsel %vm4078, %v4070, %v4075
      %v4080 = vrsqrt.pop %v3967
      %v4081 = vmul.f32 %v4080, %v3967
      %v4082 = vmul.f32 %v4081, %v4080
      %v4083 = vmul.f32 0.5, %v4082
      %v4084 = vsub.f32 1.5, %v4083
      %v4085 = vmul.f32 %v4080, %v4084
      %vm4086 = vweird.f32 %v3967
      %vm4087 = vweird.f32 %v4080
      %vm4088 = vmor %vm4086, %vm4087
      %v4089 = vsel %vm4088, %v4080, %v4085
      %v4090 = vrsqrt.pop %v3968
      %v4091 = vmul.f32 %v4090, %v3968
      %v4092 = vmul.f32 %v4091, %v4090
      %v4093 = vmul.f32 0.5, %v4092
      %v4094 = vsub.f32 1.5, %v4093
      %v4095 = vmul.f32 %v4090, %v4094
      %vm4096 = vweird.f32 %v3968
      %vm4097 = vweird.f32 %v4090
      %vm4098 = vmor %vm4096, %vm4097
      %v4099 = vsel %vm4098, %v4090, %v4095
      %v4100 = vrsqrt.pop %v3969
      %v4101 = vmul.f32 %v4100, %v3969
      %v4102 = vmul.f32 %v4101, %v4100
      %v4103 = vmul.f32 0.5, %v4102
      %v4104 = vsub.f32 1.5, %v4103
      %v4105 = vmul.f32 %v4100, %v4104
      %vm4106 = vweird.f32 %v3969
      %vm4107 = vweird.f32 %v4100
      %vm4108 = vmor %vm4106, %vm4107
      %v4109 = vsel %vm4108, %v4100, %v4105
      %v4110 = vrsqrt.pop %v3970
      %v4111 = vmul.f32 %v4110, %v3970
      %v4112 = vmul.f32 %v4111, %v4110
      %v4113 = vmul.f32 0.5, %v4112
      %v4114 = vsub.f32 1.5, %v4113
      %v4115 = vmul.f32 %v4110, %v4114
      %vm4116 = vweird.f32 %v3970
      %vm4117 = vweird.f32 %v4110
      %vm4118 = vmor %vm4116, %vm4117
      %v4119 = vsel %vm4118, %v4110, %v4115
      %v4120 = vrsqrt.pop %v3971
      %v4121 = vmul.f32 %v4120, %v3971
      %v4122 = vmul.f32 %v4121, %v4120
      %v4123 = vmul.f32 0.5, %v4122
      %v4124 = vsub.f32 1.5, %v4123
      %v4125 = vmul.f32 %v4120, %v4124
      %vm4126 = vweird.f32 %v3971
      %vm4127 = vweird.f32 %v4120
      %vm4128 = vmor %vm4126, %vm4127
      %v4129 = vsel %vm4128, %v4120, %v4125
      %v4130 = vrsqrt.pop %v3972
      %v4131 = vmul.f32 %v4130, %v3972
      %v4132 = vmul.f32 %v4131, %v4130
      %v4133 = vmul.f32 0.5, %v4132
      %v4134 = vsub.f32 1.5, %v4133
      %v4135 = vmul.f32 %v4130, %v4134
      %vm4136 = vweird.f32 %v3972
      %vm4137 = vweird.f32 %v4130
      %vm4138 = vmor %vm4136, %vm4137
      %v4139 = vsel %vm4138, %v4130, %v4135
      %v4140 = vrsqrt.pop %v3973
      %v4141 = vmul.f32 %v4140, %v3973
      %v4142 = vmul.f32 %v4141, %v4140
      %v4143 = vmul.f32 0.5, %v4142
      %v4144 = vsub.f32 1.5, %v4143
      %v4145 = vmul.f32 %v4140, %v4144
      %vm4146 = vweird.f32 %v3973
      %vm4147 = vweird.f32 %v4140
      %vm4148 = vmor %vm4146, %vm4147
      %v4149 = vsel %vm4148, %v4140, %v4145
      %v4150 = vrsqrt.pop %v3974
      %v4151 = vmul.f32 %v4150, %v3974
      %v4152 = vmul.f32 %v4151, %v4150
      %v4153 = vmul.f32 0.5, %v4152
      %v4154 = vsub.f32 1.5, %v4153
      %v4155 = vmul.f32 %v4150, %v4154
      %vm4156 = vweird.f32 %v3974
      %vm4157 = vweird.f32 %v4150
      %vm4158 = vmor %vm4156, %vm4157
      %v4159 = vsel %vm4158, %v4150, %v4155
      %v4160 = vrsqrt.pop %v3975
      %v4161 = vmul.f32 %v4160, %v3975
      %v4162 = vmul.f32 %v4161, %v4160
      %v4163 = vmul.f32 0.5, %v4162
      %v4164 = vsub.f32 1.5, %v4163
      %v4165 = vmul.f32 %v4160, %v4164
      %vm4166 = vweird.f32 %v3975
      %vm4167 = vweird.f32 %v4160
      %vm4168 = vmor %vm4166, %vm4167
      %v4169 = vsel %vm4168, %v4160, %v4165
      %v4170 = vrsqrt.pop %v3976
      %v4171 = vmul.f32 %v4170, %v3976
      %v4172 = vmul.f32 %v4171, %v4170
      %v4173 = vmul.f32 0.5, %v4172
      %v4174 = vsub.f32 1.5, %v4173
      %v4175 = vmul.f32 %v4170, %v4174
      %vm4176 = vweird.f32 %v3976
      %vm4177 = vweird.f32 %v4170
      %vm4178 = vmor %vm4176, %vm4177
      %v4179 = vsel %vm4178, %v4170, %v4175
      %v4180 = vrsqrt.pop %v3977
      %v4181 = vmul.f32 %v4180, %v3977
      %v4182 = vmul.f32 %v4181, %v4180
      %v4183 = vmul.f32 0.5, %v4182
      %v4184 = vsub.f32 1.5, %v4183
      %v4185 = vmul.f32 %v4180, %v4184
      %vm4186 = vweird.f32 %v3977
      %vm4187 = vweird.f32 %v4180
      %vm4188 = vmor %vm4186, %vm4187
      %v4189 = vsel %vm4188, %v4180, %v4185
      %v4190 = vrsqrt.pop %v3978
      %v4191 = vmul.f32 %v4190, %v3978
      %v4192 = vmul.f32 %v4191, %v4190
      %v4193 = vmul.f32 0.5, %v4192
      %v4194 = vsub.f32 1.5, %v4193
      %v4195 = vmul.f32 %v4190, %v4194
      %vm4196 = vweird.f32 %v3978
      %vm4197 = vweird.f32 %v4190
      %vm4198 = vmor %vm4196, %vm4197
      %v4199 = vsel %vm4198, %v4190, %v4195
      %v4200 = vrsqrt.pop %v3979
      %v4201 = vmul.f32 %v4200, %v3979
      %v4202 = vmul.f32 %v4201, %v4200
      %v4203 = vmul.f32 0.5, %v4202
      %v4204 = vsub.f32 1.5, %v4203
      %v4205 = vmul.f32 %v4200, %v4204
      %vm4206 = vweird.f32 %v3979
      %vm4207 = vweird.f32 %v4200
      %vm4208 = vmor %vm4206, %vm4207
      %v4209 = vsel %vm4208, %v4200, %v4205
      %v4210 = vrsqrt.pop %v3980
      %v4211 = vmul.f32 %v4210, %v3980
      %v4212 = vmul.f32 %v4211, %v4210
      %v4213 = vmul.f32 0.5, %v4212
      %v4214 = vsub.f32 1.5, %v4213
      %v4215 = vmul.f32 %v4210, %v4214
      %vm4216 = vweird.f32 %v3980
      %vm4217 = vweird.f32 %v4210
      %vm4218 = vmor %vm4216, %vm4217
      %v4219 = vsel %vm4218, %v4210, %v4215
      %v4220 = vrsqrt.pop %v3981
      %v4221 = vmul.f32 %v4220, %v3981
      %v4222 = vmul.f32 %v4221, %v4220
      %v4223 = vmul.f32 0.5, %v4222
      %v4224 = vsub.f32 1.5, %v4223
      %v4225 = vmul.f32 %v4220, %v4224
      %vm4226 = vweird.f32 %v3981
      %vm4227 = vweird.f32 %v4220
      %vm4228 = vmor %vm4226, %vm4227
      %v4229 = vsel %vm4228, %v4220, %v4225
      %v4230 = vrsqrt.pop %v3982
      %v4231 = vmul.f32 %v4230, %v3982
      %v4232 = vmul.f32 %v4231, %v4230
      %v4233 = vmul.f32 0.5, %v4232
      %v4234 = vsub.f32 1.5, %v4233
      %v4235 = vmul.f32 %v4230, %v4234
      %vm4236 = vweird.f32 %v3982
      %vm4237 = vweird.f32 %v4230
      %vm4238 = vmor %vm4236, %vm4237
      %v4239 = vsel %vm4238, %v4230, %v4235
      %v4240 = vrsqrt.pop %v3983
      %v4241 = vmul.f32 %v4240, %v3983
      %v4242 = vmul.f32 %v4241, %v4240
      %v4243 = vmul.f32 0.5, %v4242
      %v4244 = vsub.f32 1.5, %v4243
      %v4245 = vmul.f32 %v4240, %v4244
      %vm4246 = vweird.f32 %v3983
      %vm4247 = vweird.f32 %v4240
      %vm4248 = vmor %vm4246, %vm4247
      %v4249 = vsel %vm4248, %v4240, %v4245
      %v4250 = vrsqrt.pop %v3984
      %v4251 = vmul.f32 %v4250, %v3984
      %v4252 = vmul.f32 %v4251, %v4250
      %v4253 = vmul.f32 0.5, %v4252
      %v4254 = vsub.f32 1.5, %v4253
      %v4255 = vmul.f32 %v4250, %v4254
      %vm4256 = vweird.f32 %v3984
      %vm4257 = vweird.f32 %v4250
      %vm4258 = vmor %vm4256, %vm4257
      %v4259 = vsel %vm4258, %v4250, %v4255
      %v4260 = vrsqrt.pop %v3985
      %v4261 = vmul.f32 %v4260, %v3985
      %v4262 = vmul.f32 %v4261, %v4260
      %v4263 = vmul.f32 0.5, %v4262
      %v4264 = vsub.f32 1.5, %v4263
      %v4265 = vmul.f32 %v4260, %v4264
      %vm4266 = vweird.f32 %v3985
      %vm4267 = vweird.f32 %v4260
      %vm4268 = vmor %vm4266, %vm4267
      %v4269 = vsel %vm4268, %v4260, %v4265
      %v4270 = vrsqrt.pop %v3986
      %v4271 = vmul.f32 %v4270, %v3986
      %v4272 = vmul.f32 %v4271, %v4270
      %v4273 = vmul.f32 0.5, %v4272
      %v4274 = vsub.f32 1.5, %v4273
      %v4275 = vmul.f32 %v4270, %v4274
      %vm4276 = vweird.f32 %v3986
      %vm4277 = vweird.f32 %v4270
      %vm4278 = vmor %vm4276, %vm4277
      %v4279 = vsel %vm4278, %v4270, %v4275
      %v4280 = vrsqrt.pop %v3987
      %v4281 = vmul.f32 %v4280, %v3987
      %v4282 = vmul.f32 %v4281, %v4280
      %v4283 = vmul.f32 0.5, %v4282
      %v4284 = vsub.f32 1.5, %v4283
      %v4285 = vmul.f32 %v4280, %v4284
      %vm4286 = vweird.f32 %v3987
      %vm4287 = vweird.f32 %v4280
      %vm4288 = vmor %vm4286, %vm4287
      %v4289 = vsel %vm4288, %v4280, %v4285
      %v4290 = vrsqrt.pop %v3988
      %v4291 = vmul.f32 %v4290, %v3988
      %v4292 = vmul.f32 %v4291, %v4290
      %v4293 = vmul.f32 0.5, %v4292
      %v4294 = vsub.f32 1.5, %v4293
      %v4295 = vmul.f32 %v4290, %v4294
      %vm4296 = vweird.f32 %v3988
      %vm4297 = vweird.f32 %v4290
      %vm4298 = vmor %vm4296, %vm4297
      %v4299 = vsel %vm4298, %v4290, %v4295
      %v4300 = vrsqrt.pop %v3989
      %v4301 = vmul.f32 %v4300, %v3989
      %v4302 = vmul.f32 %v4301, %v4300
      %v4303 = vmul.f32 0.5, %v4302
      %v4304 = vsub.f32 1.5, %v4303
      %v4305 = vmul.f32 %v4300, %v4304
      %vm4306 = vweird.f32 %v3989
      %vm4307 = vweird.f32 %v4300
      %vm4308 = vmor %vm4306, %vm4307
      %v4309 = vsel %vm4308, %v4300, %v4305
      %v4310 = vmul.f32 %v3670, %v3999
      %v4311 = vmul.f32 %v3671, %v4009
      %v4312 = vmul.f32 %v3672, %v4019
      %v4313 = vmul.f32 %v3673, %v4029
      %v4314 = vmul.f32 %v3674, %v4039
      %v4315 = vmul.f32 %v3675, %v4049
      %v4316 = vmul.f32 %v3676, %v4059
      %v4317 = vmul.f32 %v3677, %v4069
      %v4318 = vmul.f32 %v3678, %v4079
      %v4319 = vmul.f32 %v3679, %v4089
      %v4320 = vmul.f32 %v3680, %v4099
      %v4321 = vmul.f32 %v3681, %v4109
      %v4322 = vmul.f32 %v3682, %v4119
      %v4323 = vmul.f32 %v3683, %v4129
      %v4324 = vmul.f32 %v3684, %v4139
      %v4325 = vmul.f32 %v3685, %v4149
      %v4326 = vmul.f32 %v3686, %v4159
      %v4327 = vmul.f32 %v3687, %v4169
      %v4328 = vmul.f32 %v3688, %v4179
      %v4329 = vmul.f32 %v3689, %v4189
      %v4330 = vmul.f32 %v3690, %v4199
      %v4331 = vmul.f32 %v3691, %v4209
      %v4332 = vmul.f32 %v3692, %v4219
      %v4333 = vmul.f32 %v3693, %v4229
      %v4334 = vmul.f32 %v3694, %v4239
      %v4335 = vmul.f32 %v3695, %v4249
      %v4336 = vmul.f32 %v3696, %v4259
      %v4337 = vmul.f32 %v3697, %v4269
      %v4338 = vmul.f32 %v3698, %v4279
      %v4339 = vmul.f32 %v3699, %v4289
      %v4340 = vmul.f32 %v3700, %v4299
      %v4341 = vmul.f32 %v3701, %v4309
      %v4342 = vld [vmem:[%s5] sm:$0x1]
      %v4344 = vperm.slane %v4342, 0
      %v4346 = vmul.f32 %v4310, %v4344
      %v4347 = vmul.f32 %v4311, %v4344
      %v4348 = vmul.f32 %v4312, %v4344
      %v4349 = vmul.f32 %v4313, %v4344
      %v4350 = vmul.f32 %v4314, %v4344
      %v4351 = vmul.f32 %v4315, %v4344
      %v4352 = vmul.f32 %v4316, %v4344
      %v4353 = vmul.f32 %v4317, %v4344
      %v4354 = vmul.f32 %v4318, %v4344
      %v4355 = vmul.f32 %v4319, %v4344
      %v4356 = vmul.f32 %v4320, %v4344
      %v4357 = vmul.f32 %v4321, %v4344
      %v4358 = vmul.f32 %v4322, %v4344
      %v4359 = vmul.f32 %v4323, %v4344
      %v4360 = vmul.f32 %v4324, %v4344
      %v4361 = vmul.f32 %v4325, %v4344
      %v4362 = vmul.f32 %v4326, %v4344
      %v4363 = vmul.f32 %v4327, %v4344
      %v4364 = vmul.f32 %v4328, %v4344
      %v4365 = vmul.f32 %v4329, %v4344
      %v4366 = vmul.f32 %v4330, %v4344
      %v4367 = vmul.f32 %v4331, %v4344
      %v4368 = vmul.f32 %v4332, %v4344
      %v4369 = vmul.f32 %v4333, %v4344
      %v4370 = vmul.f32 %v4334, %v4344
      %v4371 = vmul.f32 %v4335, %v4344
      %v4372 = vmul.f32 %v4336, %v4344
      %v4373 = vmul.f32 %v4337, %v4344
      %v4374 = vmul.f32 %v4338, %v4344
      %v4375 = vmul.f32 %v4339, %v4344
      %v4376 = vmul.f32 %v4340, %v4344
      %v4377 = vmul.f32 %v4341, %v4344
      %v4378 = vld [vmem:[%s6] sm:$0x1]
      %v4380 = vperm.slane %v4378, 0
      %v4382 = vadd.f32 %v4346, %v4380
      %v4383 = vadd.f32 %v4347, %v4380
      %v4384 = vadd.f32 %v4348, %v4380
      %v4385 = vadd.f32 %v4349, %v4380
      %v4386 = vadd.f32 %v4350, %v4380
      %v4387 = vadd.f32 %v4351, %v4380
      %v4388 = vadd.f32 %v4352, %v4380
      %v4389 = vadd.f32 %v4353, %v4380
      %v4390 = vadd.f32 %v4354, %v4380
      %v4391 = vadd.f32 %v4355, %v4380
      %v4392 = vadd.f32 %v4356, %v4380
      %v4393 = vadd.f32 %v4357, %v4380
      %v4394 = vadd.f32 %v4358, %v4380
      %v4395 = vadd.f32 %v4359, %v4380
      %v4396 = vadd.f32 %v4360, %v4380
      %v4397 = vadd.f32 %v4361, %v4380
      %v4398 = vadd.f32 %v4362, %v4380
      %v4399 = vadd.f32 %v4363, %v4380
      %v4400 = vadd.f32 %v4364, %v4380
      %v4401 = vadd.f32 %v4365, %v4380
      %v4402 = vadd.f32 %v4366, %v4380
      %v4403 = vadd.f32 %v4367, %v4380
      %v4404 = vadd.f32 %v4368, %v4380
      %v4405 = vadd.f32 %v4369, %v4380
      %v4406 = vadd.f32 %v4370, %v4380
      %v4407 = vadd.f32 %v4371, %v4380
      %v4408 = vadd.f32 %v4372, %v4380
      %v4409 = vadd.f32 %v4373, %v4380
      %v4410 = vadd.f32 %v4374, %v4380
      %v4411 = vadd.f32 %v4375, %v4380
      %v4412 = vadd.f32 %v4376, %v4380
      %v4413 = vadd.f32 %v4377, %v4380
      %v4414 = vmul.f32 %v4382, 0.2
      %v4415 = vmul.f32 %v4383, 0.2
      %v4416 = vmul.f32 %v4384, 0.2
      %v4417 = vmul.f32 %v4385, 0.2
      %v4418 = vmul.f32 %v4386, 0.2
      %v4419 = vmul.f32 %v4387, 0.2
      %v4420 = vmul.f32 %v4388, 0.2
      %v4421 = vmul.f32 %v4389, 0.2
      %v4422 = vmul.f32 %v4390, 0.2
      %v4423 = vmul.f32 %v4391, 0.2
      %v4424 = vmul.f32 %v4392, 0.2
      %v4425 = vmul.f32 %v4393, 0.2
      %v4426 = vmul.f32 %v4394, 0.2
      %v4427 = vmul.f32 %v4395, 0.2
      %v4428 = vmul.f32 %v4396, 0.2
      %v4429 = vmul.f32 %v4397, 0.2
      %v4430 = vmul.f32 %v4398, 0.2
      %v4431 = vmul.f32 %v4399, 0.2
      %v4432 = vmul.f32 %v4400, 0.2
      %v4433 = vmul.f32 %v4401, 0.2
      %v4434 = vmul.f32 %v4402, 0.2
      %v4435 = vmul.f32 %v4403, 0.2
      %v4436 = vmul.f32 %v4404, 0.2
      %v4437 = vmul.f32 %v4405, 0.2
      %v4438 = vmul.f32 %v4406, 0.2
      %v4439 = vmul.f32 %v4407, 0.2
      %v4440 = vmul.f32 %v4408, 0.2
      %v4441 = vmul.f32 %v4409, 0.2
      %v4442 = vmul.f32 %v4410, 0.2
      %v4443 = vmul.f32 %v4411, 0.2
      %v4444 = vmul.f32 %v4412, 0.2
      %v4445 = vmul.f32 %v4413, 0.2
      %v4446 = vmax.f32 %v4382, %v4414
      %v4447 = vmax.f32 %v4383, %v4415
      %v4448 = vmax.f32 %v4384, %v4416
      %v4449 = vmax.f32 %v4385, %v4417
      %v4450 = vmax.f32 %v4386, %v4418
      %v4451 = vmax.f32 %v4387, %v4419
      %v4452 = vmax.f32 %v4388, %v4420
      %v4453 = vmax.f32 %v4389, %v4421
      %v4454 = vmax.f32 %v4390, %v4422
      %v4455 = vmax.f32 %v4391, %v4423
      %v4456 = vmax.f32 %v4392, %v4424
      %v4457 = vmax.f32 %v4393, %v4425
      %v4458 = vmax.f32 %v4394, %v4426
      %v4459 = vmax.f32 %v4395, %v4427
      %v4460 = vmax.f32 %v4396, %v4428
      %v4461 = vmax.f32 %v4397, %v4429
      %v4462 = vmax.f32 %v4398, %v4430
      %v4463 = vmax.f32 %v4399, %v4431
      %v4464 = vmax.f32 %v4400, %v4432
      %v4465 = vmax.f32 %v4401, %v4433
      %v4466 = vmax.f32 %v4402, %v4434
      %v4467 = vmax.f32 %v4403, %v4435
      %v4468 = vmax.f32 %v4404, %v4436
      %v4469 = vmax.f32 %v4405, %v4437
      %v4470 = vmax.f32 %v4406, %v4438
      %v4471 = vmax.f32 %v4407, %v4439
      %v4472 = vmax.f32 %v4408, %v4440
      %v4473 = vmax.f32 %v4409, %v4441
      %v4474 = vmax.f32 %v4410, %v4442
      %v4475 = vmax.f32 %v4411, %v4443
      %v4476 = vmax.f32 %v4412, %v4444
      %v4477 = vmax.f32 %v4413, %v4445
      %v4478 = vld [vmem:[%s7] sm:$0xff]
      %v4479 = vld [vmem:[%s7 + $0x8] sm:$0xff]
      %v4480 = vld [vmem:[%s7 + $0x10] sm:$0xff]
      %v4481 = vld [vmem:[%s7 + $0x18] sm:$0xff]
      %v4482 = vld [vmem:[%s7 + $0x20] sm:$0xff]
      %v4483 = vld [vmem:[%s7 + $0x28] sm:$0xff]
      %v4484 = vld [vmem:[%s7 + $0x30] sm:$0xff]
      %v4485 = vld [vmem:[%s7 + $0x38] sm:$0xff]
      %v4486 = vld [vmem:[%s7 + $0x40] sm:$0xff]
      %v4487 = vld [vmem:[%s7 + $0x48] sm:$0xff]
      %v4488 = vld [vmem:[%s7 + $0x50] sm:$0xff]
      %v4489 = vld [vmem:[%s7 + $0x58] sm:$0xff]
      %v4490 = vld [vmem:[%s7 + $0x60] sm:$0xff]
      %v4491 = vld [vmem:[%s7 + $0x68] sm:$0xff]
      %v4492 = vld [vmem:[%s7 + $0x70] sm:$0xff]
      %v4493 = vld [vmem:[%s7 + $0x78] sm:$0xff]
      %4494 = vmatpush.msra.mxu0 %v4493
      %4495 = vmatpush.msra.mxu0 %v4492
      %4496 = vmatpush.msra.mxu0 %v4491
      %4497 = vmatpush.msra.mxu0 %v4490
      %4498 = vmatpush.msra.mxu0 %v4489
      %4499 = vmatpush.msra.mxu0 %v4488
      %4500 = vmatpush.msra.mxu0 %v4487
      %4501 = vmatpush.msra.mxu0 %v4486
      %4502 = vmatpush.msra.mxu0 %v4485
      %4503 = vmatpush.msra.mxu0 %v4484
      %4504 = vmatpush.msra.mxu0 %v4483
      %4505 = vmatpush.msra.mxu0 %v4482
      %4506 = vmatpush.msra.mxu0 %v4481
      %4507 = vmatpush.msra.mxu0 %v4480
      %4508 = vmatpush.msra.mxu0 %v4479
      %4509 = vmatpush.msra.mxu0 %v4478
      %4510 = vmatmul.f32.gmra.mxu0 %v4446
      %v4511 = vpop.f32.mrf.mxu0
      %v4512 = vadd.f32 0.0, %v4511
      %4513 = vmatmul.f32.gmra.mxu0 %v4447
      %v4514 = vpop.f32.mrf.mxu0
      %v4515 = vadd.f32 0.0, %v4514
      %4516 = vmatmul.f32.gmra.mxu0 %v4448
      %v4517 = vpop.f32.mrf.mxu0
      %v4518 = vadd.f32 0.0, %v4517
      %4519 = vmatmul.f32.gmra.mxu0 %v4449
      %v4520 = vpop.f32.mrf.mxu0
      %v4521 = vadd.f32 0.0, %v4520
      %4522 = vmatmul.f32.gmra.mxu0 %v4450
      %v4523 = vpop.f32.mrf.mxu0
      %v4524 = vadd.f32 0.0, %v4523
      %4525 = vmatmul.f32.gmra.mxu0 %v4451
      %v4526 = vpop.f32.mrf.mxu0
      %v4527 = vadd.f32 0.0, %v4526
      %4528 = vmatmul.f32.gmra.mxu0 %v4452
      %v4529 = vpop.f32.mrf.mxu0
      %v4530 = vadd.f32 0.0, %v4529
      %4531 = vmatmul.f32.gmra.mxu0 %v4453
      %v4532 = vpop.f32.mrf.mxu0
      %v4533 = vadd.f32 0.0, %v4532
      %4534 = vmatmul.f32.gmra.mxu0 %v4454
      %v4535 = vpop.f32.mrf.mxu0
      %v4536 = vadd.f32 0.0, %v4535
      %4537 = vmatmul.f32.gmra.mxu0 %v4455
      %v4538 = vpop.f32.mrf.mxu0
      %v4539 = vadd.f32 0.0, %v4538
      %4540 = vmatmul.f32.gmra.mxu0 %v4456
      %v4541 = vpop.f32.mrf.mxu0
      %v4542 = vadd.f32 0.0, %v4541
      %4543 = vmatmul.f32.gmra.mxu0 %v4457
      %v4544 = vpop.f32.mrf.mxu0
      %v4545 = vadd.f32 0.0, %v4544
      %4546 = vmatmul.f32.gmra.mxu0 %v4458
      %v4547 = vpop.f32.mrf.mxu0
      %v4548 = vadd.f32 0.0, %v4547
      %4549 = vmatmul.f32.gmra.mxu0 %v4459
      %v4550 = vpop.f32.mrf.mxu0
      %v4551 = vadd.f32 0.0, %v4550
      %4552 = vmatmul.f32.gmra.mxu0 %v4460
      %v4553 = vpop.f32.mrf.mxu0
      %v4554 = vadd.f32 0.0, %v4553
      %4555 = vmatmul.f32.gmra.mxu0 %v4461
      %v4556 = vpop.f32.mrf.mxu0
      %v4557 = vadd.f32 0.0, %v4556
      %4558 = vmatmul.f32.gmra.mxu0 %v4462
      %v4559 = vpop.f32.mrf.mxu0
      %v4560 = vadd.f32 0.0, %v4559
      %4561 = vmatmul.f32.gmra.mxu0 %v4463
      %v4562 = vpop.f32.mrf.mxu0
      %v4563 = vadd.f32 0.0, %v4562
      %4564 = vmatmul.f32.gmra.mxu0 %v4464
      %v4565 = vpop.f32.mrf.mxu0
      %v4566 = vadd.f32 0.0, %v4565
      %4567 = vmatmul.f32.gmra.mxu0 %v4465
      %v4568 = vpop.f32.mrf.mxu0
      %v4569 = vadd.f32 0.0, %v4568
      %4570 = vmatmul.f32.gmra.mxu0 %v4466
      %v4571 = vpop.f32.mrf.mxu0
      %v4572 = vadd.f32 0.0, %v4571
      %4573 = vmatmul.f32.gmra.mxu0 %v4467
      %v4574 = vpop.f32.mrf.mxu0
      %v4575 = vadd.f32 0.0, %v4574
      %4576 = vmatmul.f32.gmra.mxu0 %v4468
      %v4577 = vpop.f32.mrf.mxu0
      %v4578 = vadd.f32 0.0, %v4577
      %4579 = vmatmul.f32.gmra.mxu0 %v4469
      %v4580 = vpop.f32.mrf.mxu0
      %v4581 = vadd.f32 0.0, %v4580
      %4582 = vmatmul.f32.gmra.mxu0 %v4470
      %v4583 = vpop.f32.mrf.mxu0
      %v4584 = vadd.f32 0.0, %v4583
      %4585 = vmatmul.f32.gmra.mxu0 %v4471
      %v4586 = vpop.f32.mrf.mxu0
      %v4587 = vadd.f32 0.0, %v4586
      %4588 = vmatmul.f32.gmra.mxu0 %v4472
      %v4589 = vpop.f32.mrf.mxu0
      %v4590 = vadd.f32 0.0, %v4589
      %4591 = vmatmul.f32.gmra.mxu0 %v4473
      %v4592 = vpop.f32.mrf.mxu0
      %v4593 = vadd.f32 0.0, %v4592
      %4594 = vmatmul.f32.gmra.mxu0 %v4474
      %v4595 = vpop.f32.mrf.mxu0
      %v4596 = vadd.f32 0.0, %v4595
      %4597 = vmatmul.f32.gmra.mxu0 %v4475
      %v4598 = vpop.f32.mrf.mxu0
      %v4599 = vadd.f32 0.0, %v4598
      %4600 = vmatmul.f32.gmra.mxu0 %v4476
      %v4601 = vpop.f32.mrf.mxu0
      %v4602 = vadd.f32 0.0, %v4601
      %4603 = vmatmul.f32.gmra.mxu0 %v4477
      %v4604 = vpop.f32.mrf.mxu0
      %v4605 = vadd.f32 0.0, %v4604
      %4606 = vdwg.mxu0
      %4607 = vxpose.xlu0.b32.start [1/16] %v4512, 128
      %4608 = vxpose.xlu0.b32.cont [2/16] %v4515, 128
      %4609 = vxpose.xlu0.b32.cont [3/16] %v4518, 128
      %4610 = vxpose.xlu0.b32.cont [4/16] %v4521, 128
      %4611 = vxpose.xlu0.b32.cont [5/16] %v4524, 128
      %4612 = vxpose.xlu0.b32.cont [6/16] %v4527, 128
      %4613 = vxpose.xlu0.b32.cont [7/16] %v4530, 128
      %4614 = vxpose.xlu0.b32.cont [8/16] %v4533, 128
      %4615 = vxpose.xlu0.b32.cont [9/16] %v4536, 128
      %4616 = vxpose.xlu0.b32.cont [10/16] %v4539, 128
      %4617 = vxpose.xlu0.b32.cont [11/16] %v4542, 128
      %4618 = vxpose.xlu0.b32.cont [12/16] %v4545, 128
      %4619 = vxpose.xlu0.b32.cont [13/16] %v4548, 128
      %4620 = vxpose.xlu0.b32.cont [14/16] %v4551, 128
      %4621 = vxpose.xlu0.b32.cont [15/16] %v4554, 128
      %4622 = vxpose.xlu0.b32.end [16/16] %v4557, 128
      %v4623 = vpop.trf.xlu0
      %v4624 = vpop.trf.xlu0
      %v4625 = vpop.trf.xlu0
      %v4626 = vpop.trf.xlu0
      %v4627 = vpop.trf.xlu0
      %v4628 = vpop.trf.xlu0
      %v4629 = vpop.trf.xlu0
      %v4630 = vpop.trf.xlu0
      %v4631 = vpop.trf.xlu0
      %v4632 = vpop.trf.xlu0
      %v4633 = vpop.trf.xlu0
      %v4634 = vpop.trf.xlu0
      %v4635 = vpop.trf.xlu0
      %v4636 = vpop.trf.xlu0
      %v4637 = vpop.trf.xlu0
      %v4638 = vpop.trf.xlu0
      %4639 = vxpose.xlu0.b32.start [1/16] %v4560, 128
      %4640 = vxpose.xlu0.b32.cont [2/16] %v4563, 128
      %4641 = vxpose.xlu0.b32.cont [3/16] %v4566, 128
      %4642 = vxpose.xlu0.b32.cont [4/16] %v4569, 128
      %4643 = vxpose.xlu0.b32.cont [5/16] %v4572, 128
      %4644 = vxpose.xlu0.b32.cont [6/16] %v4575, 128
      %4645 = vxpose.xlu0.b32.cont [7/16] %v4578, 128
      %4646 = vxpose.xlu0.b32.cont [8/16] %v4581, 128
      %4647 = vxpose.xlu0.b32.cont [9/16] %v4584, 128
      %4648 = vxpose.xlu0.b32.cont [10/16] %v4587, 128
      %4649 = vxpose.xlu0.b32.cont [11/16] %v4590, 128
      %4650 = vxpose.xlu0.b32.cont [12/16] %v4593, 128
      %4651 = vxpose.xlu0.b32.cont [13/16] %v4596, 128
      %4652 = vxpose.xlu0.b32.cont [14/16] %v4599, 128
      %4653 = vxpose.xlu0.b32.cont [15/16] %v4602, 128
      %4654 = vxpose.xlu0.b32.end [16/16] %v4605, 128
      %v4655 = vpop.trf.xlu0
      %v4656 = vpop.trf.xlu0
      %v4657 = vpop.trf.xlu0
      %v4658 = vpop.trf.xlu0
      %v4659 = vpop.trf.xlu0
      %v4660 = vpop.trf.xlu0
      %v4661 = vpop.trf.xlu0
      %v4662 = vpop.trf.xlu0
      %v4663 = vpop.trf.xlu0
      %v4664 = vpop.trf.xlu0
      %v4665 = vpop.trf.xlu0
      %v4666 = vpop.trf.xlu0
      %v4667 = vpop.trf.xlu0
      %v4668 = vpop.trf.xlu0
      %v4669 = vpop.trf.xlu0
      %v4670 = vpop.trf.xlu0
      %v4671 = vld [vmem:[#allocation2] sm:$0x1]
      %v4673 = vperm.slane %v4671, 0
      %4674 = vset.pattern.permute.xlu0 0
      %4675 = vperm.xlu0 %4674, %v4673
      %v4676 = vpop.permute.xlu0 %4675
      %v4678 = vadd.f32 %v4623, %v4676
      %v4679 = vadd.f32 %v4655, %v4676
      %v4680 = vxor.u32 %v4678, 2147483648
      %v4681 = vxor.u32 %v4679, 2147483648
      %v4682 = vmul.f32 %v4680, 1.442695
      %v4683 = vpow.pop %v4682
      %v4684 = vmul.f32 %v4681, 1.442695
      %v4685 = vpow.pop %v4684
      %v4686 = vadd.f32 %v4683, 1.0
      %v4687 = vadd.f32 %v4685, 1.0
      %v4688 = vrcp.pop %v4686
      %v4689 = vmul.f32 %v4686, %v4688
      %v4690 = vsub.f32 1.0, %v4689
      %v4691 = vmul.f32 %v4688, %v4690
      %v4692 = vadd.f32 %v4688, %v4691
      %vm4693 = vweird.f32 %v4686
      %vm4694 = vweird.f32 %v4688
      %vm4695 = vmor %vm4693, %vm4694
      %v4696 = vsel %vm4695, %v4688, %v4692
      %v4697 = vand.u32 2147483647, %v4686
      %vm4698 = vcmp.eq.f32.partialorder %v4697, 8.507059e+37
      %v4699 = vand.u32 %v4686, 2147483648
      %v4700 = vor.u32 1.1754944e-38, %v4699
      %v4701 = vsel %vm4698, %v4700, %v4696
      %v4702 = vmul.f32 1.0, %v4701
      %v4703 = vrcp.pop %v4687
      %v4704 = vmul.f32 %v4687, %v4703
      %v4705 = vsub.f32 1.0, %v4704
      %v4706 = vmul.f32 %v4703, %v4705
      %v4707 = vadd.f32 %v4703, %v4706
      %vm4708 = vweird.f32 %v4687
      %vm4709 = vweird.f32 %v4703
      %vm4710 = vmor %vm4708, %vm4709
      %v4711 = vsel %vm4710, %v4703, %v4707
      %v4712 = vand.u32 2147483647, %v4687
      %vm4713 = vcmp.eq.f32.partialorder %v4712, 8.507059e+37
      %v4714 = vand.u32 %v4687, 2147483648
      %v4715 = vor.u32 1.1754944e-38, %v4714
      %v4716 = vsel %vm4713, %v4715, %v4711
      %v4717 = vmul.f32 1.0, %v4716
      %4718 = vst [vmem:[%s339] sm:$0xff] %v4702
      %4719 = vst [vmem:[%s339 + $0x8] sm:$0xff] %v4717
      %s4720 = smul.u32 2, %s22
      %p4721 = scmp.lt.s32.totalorder %s4720, 3
      %s4722 = scalar_select %p4721, %s4720, 3
      %s4723 = smul.addr %s4722, 8
      %s4724 = scalar_lea.vmem %s9, %s4723
      // Predicated region
      $region57: #{discriminator_forward.1} parent=55 // pred_check
        %p4725 = pneg %p234
      $region58: #{discriminator_forward.1} parent=55 // pred_check_branch
        %4727 = sbr.rel (%p4725) target = $region60
      $region59: #{discriminator_forward.1} parent=55 // pred_region
        %s4728 = smul.u32 2, %s22
      $region60: #{discriminator_forward.1} parent=55 // pred_fallthru
        _
    $region56: #{discriminator_forward.1} parent=5 // pred_fallthru
      _
    %p4729 = scmp.le.s32.totalorder 2, %s17
    // Predicated region
    $region61: #{discriminator_forward.1} parent=5 // pred_check
      %p4730 = pneg %p4729
    $region62: #{discriminator_forward.1} parent=5 // pred_check_branch
      %4732 = sbr.rel (%p4730) target = $region64
    $region63: #{discriminator_forward.1} parent=5 // pred_region
      %s4733 = ssub.s32 %s17, 2
      // Predicated region
      $region65: #{discriminator_forward.1} parent=63 // pred_check
        %p4734 = pneg %p240
      $region66: #{discriminator_forward.1} parent=63 // pred_check_branch
        %4736 = sbr.rel (%p4734) target = $region68
      $region67: #{discriminator_forward.1} parent=63 // pred_region
        %s4737 = smul.u32 2, %s23
        %p4738 = scmp.lt.s32.totalorder %s4737, 3
        %s4739 = scalar_select %p4738, %s4737, 3
        %s4740 = smul.addr %s4739, 8
        %s4741 = scalar_lea.vmem %s9, %s4740
      $region68: #{discriminator_forward.1} parent=63 // pred_fallthru
        _
    $region64: #{discriminator_forward.1} parent=5 // pred_fallthru
      _
  $region6: #{discriminator_forward.1} parent=0 // loop_footer
    %s21 = sadd.s32 1, %s17
  $region7: #{discriminator_forward.1} parent=0 // loop_footer_branch
    %16 = sbr.rel target = $region3
  $region8: #{discriminator_forward.1} parent=0 // loop_exit
    _

</llo_original>
